<compile_context>
chip_gen: v7x
topology: tpu7x:2x2x1
jax: 0.10.0
libtpu: 0.0.40
codegen_flags: <defaults>
</compile_context>

<pallas_src>
import functools
import math

import jax
import jax.numpy as jnp
from jax import lax
from jax.experimental import pallas as pl
from jax.experimental.pallas import tpu as pltpu

_BIG = 1e30           # sentinel distance for padded / already-chosen neighbor columns
_GRAM_IN_BF16 = True  # bf16 operands for the Gram matmul (~2-3x MXU on v5e/v6e/v7x).
                      # Caveat: near-tie neighbor choices can flip vs an f32 Gram.


# ------------------------------ fused forward kernel -------------------------
def _dgcnn_kernel(x_ref, pen_ref,
                  c1wcd_ref, c1wb_ref, c1b1_ref, c1w2_ref, c1b2_ref,
                  c2wcd_ref, c2wb_ref, c2b1_ref, c2w2_ref, c2b2_ref,
                  c3wcd_ref, c3wb_ref, c3b1_ref, c3w2_ref, c3b2_ref,
                  hw1a_ref, hw1b_ref, hw1c_ref, hb1_ref,
                  hw2_ref, hb2_ref, hw3_ref, hb3_ref, hw4_ref, hb4_ref,
                  o_ref, *, k):
    f32 = jnp.float32
    mg = x_ref.shape[1]

    x0 = x_ref[0].astype(f32)                    # [Mg, F0] this graph's padded nodes
    pen = pen_ref[0]                             # [1, Mg]  +_BIG on padded columns
    # column-index matrix, hoisted once and reused by all three EdgeConv layers
    colf = lax.broadcasted_iota(jnp.int32, (mg, mg), 1).astype(f32)

    def edge_conv(x, wcd, wb, b1, w2, b2):
        fdim = x.shape[1]

        # ---- pairwise squared distances within this graph ---------------------
        xx = x * x
        sq_i = jnp.sum(xx, axis=-1, keepdims=True)                    # [Mg, 1]
        # row vector of squared norms via a ones-contraction (no transpose/XLU)
        sq_j = lax.dot_general(jnp.ones((1, fdim), f32), xx,
                               (((1,), (1,)), ((), ())),
                               preferred_element_type=f32)            # [1, Mg]
        xg = x.astype(jnp.bfloat16) if _GRAM_IN_BF16 else x
        gram = lax.dot_general(xg, xg, (((1,), (1,)), ((), ())),
                               preferred_element_type=f32)            # [Mg, Mg] (MXU)
        d = sq_i + sq_j - 2.0 * gram + pen                            # padded cols -> _BIG

        # ---- per-node "center" term of the edge MLP ----------------------------
        # relu(BN([x_i, x_j - x_i] @ [Wa;Wb] + b1)) == relu(x_i@(Wa-Wb) + x_j@Wb + b1')
        # (BN folded at prep time; wcd = Wa - Wb).  F==1: VPU broadcast, no K=1 matmul.
        if fdim == 1:
            base = x * wcd + b1                                       # [Mg, H]
        else:
            base = jnp.dot(x, wcd, preferred_element_type=f32) + b1   # [Mg, H]

        # ---- fused kNN argmin + neighbor gather + edge MLP + running max -------
        # No [k*Mg, Mg] selection matrix: each one-hot is consumed immediately, so
        # the MXU gather/matmuls of neighbor r overlap the serial argmin of r+1.
        # TODO(synk): graphs with fewer than k valid nodes still pick masked padded
        # columns (distance _BIG), unlike torch_cluster.knn which returns fewer edges.
        acc = None
        for _ in range(k):
            m = jnp.min(d, axis=-1, keepdims=True)                    # [Mg, 1]
            amin = jnp.min(jnp.where(d <= m, colf, float(mg)),
                           axis=-1, keepdims=True)                    # first-index tie-break
            ohb = colf == amin                                        # [Mg, Mg] one-hot
            d = jnp.where(ohb, _BIG, d)                               # exclude chosen col
            # gather the NARROW operand (x_j, F wide) then project with Wb:
            # Mg^2*F FLOPs instead of Mg^2*H for the old sel@(x@Wb) gather.
            xj = jnp.dot(ohb.astype(f32), x, preferred_element_type=f32)   # [Mg, F]
            if fdim == 1:
                hj = jnp.maximum(base + xj * wb, 0.0)
            else:
                hj = jnp.maximum(
                    base + jnp.dot(xj, wb, preferred_element_type=f32), 0.0)
            hj = jnp.dot(hj, w2, preferred_element_type=f32)          # [Mg, H] plain_last
            acc = hj if acc is None else jnp.maximum(acc, hj)
        return acc + b2                                               # bias once, post-max

    x1 = edge_conv(x0, c1wcd_ref[...], c1wb_ref[...], c1b1_ref[...],
                   c1w2_ref[...], c1b2_ref[...])
    x2 = edge_conv(x1, c2wcd_ref[...], c2wb_ref[...], c2b1_ref[...],
                   c2w2_ref[...], c2b2_ref[...])
    x3 = edge_conv(x2, c3wcd_ref[...], c3wb_ref[...], c3b1_ref[...],
                   c3w2_ref[...], c3b2_ref[...])

    # head MLP: cat([x1,x2,x3]) @ W1 done with pre-split per-branch weight pieces
    h = (jnp.dot(x1, hw1a_ref[...], preferred_element_type=f32)
         + jnp.dot(x2, hw1b_ref[...], preferred_element_type=f32)
         + jnp.dot(x3, hw1c_ref[...], preferred_element_type=f32)
         + hb1_ref[...])
    h = jnp.maximum(h, 0.0)
    # TODO(synk): dropout between head layers is identity here (eval mode / p=0.0).
    h = jnp.maximum(jnp.dot(h, hw2_ref[...], preferred_element_type=f32)
                    + hb2_ref[...], 0.0)
    h = jnp.maximum(jnp.dot(h, hw3_ref[...], preferred_element_type=f32)
                    + hb3_ref[...], 0.0)
    logits = jnp.dot(h, hw4_ref[...], preferred_element_type=f32) + hb4_ref[...]

    # log_softmax over the feature axis (torch dim=1)
    mmax = jnp.max(logits, axis=-1, keepdims=True)
    lse = jnp.log(jnp.sum(jnp.exp(logits - mmax), axis=-1, keepdims=True)) + mmax
    o_ref[0] = logits - lse


# --------------------------------- wrapper ------------------------------------
def dgcnn_forward(flat_params, x, batch, *, k, num_graphs, max_nodes_per_graph):
    """Fused DGCNN forward, gridded over graphs (kNN is block-diagonal in `batch`).

    Each grid step processes one graph's padded node block end-to-end, so all
    quadratic temporaries are [Mg, Mg] per graph; the graph axis is 'parallel'
    (shards across v7x's two TensorCores).
    TODO(synk): graphs beyond ~1.5k nodes additionally need query-row blocking of
    the in-graph kNN/argmin to stay inside v7x's 64 MiB VMEM.
    """
    n, f = x.shape
    g = int(num_graphs)
    mg = max(8, -(-int(max_nodes_per_graph) // 8) * 8)   # round up to sublane multiple
    out_ch = flat_params[-2].shape[1]
    f32 = jnp.float32

    # position of each node inside its own graph (works for non-contiguous `batch`)
    onehot = (batch[:, None] ==
              jnp.arange(g, dtype=batch.dtype)[None, :]).astype(jnp.int32)
    pos = jnp.sum(jnp.cumsum(onehot, axis=0) * onehot, axis=1) - 1

    # scatter nodes into per-graph padded blocks.
    # NOTE: max_nodes_per_graph must cover the largest graph; excess nodes would be
    # silently dropped by the scatter.
    xpad = jnp.zeros((g, mg, f), f32).at[batch, pos].set(x.astype(f32))
    valid = jnp.zeros((g, mg), f32).at[batch, pos].set(1.0)
    pen = ((1.0 - valid) * _BIG).reshape(g, 1, mg)       # +_BIG on padded columns

    def _pspec(p):
        nd = p.ndim
        return pl.BlockSpec(p.shape, lambda i, _nd=nd: (0,) * _nd)

    in_specs = ([pl.BlockSpec((1, mg, f), lambda i: (i, 0, 0)),
                 pl.BlockSpec((1, 1, mg), lambda i: (i, 0, 0))]
                + [_pspec(p) for p in flat_params])

    # working set ~ a few [Mg,Mg] f32 temporaries + weights; leave headroom but stay
    # below v7x's 64 MiB physical VMEM.
    vmem_bytes = int(min(60 * 2**20, max(32 * 2**20, 24 * mg * mg * 4 + 2**22)))

    out_pad = pl.pallas_call(
        functools.partial(_dgcnn_kernel, k=k),
        grid=(g,),
        out_shape=jax.ShapeDtypeStruct((g, mg, out_ch), f32),
        in_specs=in_specs,
        out_specs=pl.BlockSpec((1, mg, out_ch), lambda i: (i, 0, 0)),
        compiler_params=pltpu.CompilerParams(
            dimension_semantics=("parallel",),
            vmem_limit_bytes=vmem_bytes),
    )(xpad, pen, *flat_params)

    return out_pad[batch, pos]                           # back to [N, out_ch]


# ------------------------------ parameter init ---------------------------------
def _linear_init(key, fan_in, fan_out):
    kw, kb = jax.random.split(key)
    bound = 1.0 / math.sqrt(fan_in)
    w = jax.random.uniform(kw, (fan_in, fan_out), jnp.float32, -bound, bound)
    b = jax.random.uniform(kb, (1, fan_out), jnp.float32, -bound, bound)
    return w, b


def init_params(key, cfg):
    keys = jax.random.split(key, 10)

    def conv_params(k0, k1, f_in, h):
        w1, b1 = _linear_init(k0, 2 * f_in, h)
        w2, b2 = _linear_init(k1, h, h)
        # eval-mode BatchNorm params / running stats (fresh): gamma=1, beta=0,
        # mean=0, var=1
        return dict(w1=w1, b1=b1, w2=w2, b2=b2,
                    bn_gamma=jnp.ones((1, h), jnp.float32),
                    bn_beta=jnp.zeros((1, h), jnp.float32),
                    bn_mean=jnp.zeros((1, h), jnp.float32),
                    bn_var=jnp.ones((1, h), jnp.float32))

    conv1 = conv_params(keys[0], keys[1], 1, cfg["n_conv1"])
    conv2 = conv_params(keys[2], keys[3], cfg["n_conv1"], cfg["n_conv2"])
    conv3 = conv_params(keys[4], keys[5], cfg["n_conv2"], cfg["n_conv3"])

    c_in = cfg["n_conv1"] + cfg["n_conv2"] + cfg["n_conv3"]
    dims = [c_in, cfg["n_mlp1"], cfg["n_mlp2"], cfg["n_mlp3"], cfg["out_channels"]]
    mlp = {}
    for i in range(4):
        w, b = _linear_init(keys[6 + i], dims[i], dims[i + 1])
        mlp[f"w{i+1}"] = w
        mlp[f"b{i+1}"] = b
    return dict(conv1=conv1, conv2=conv2, conv3=conv3, mlp=mlp,
                n_conv=(cfg["n_conv1"], cfg["n_conv2"], cfg["n_conv3"]))


def prepare_params(params, eps=1e-5):
    """Fold eval-mode BatchNorm into Lin1 (using running_mean/var), pre-combine the
    (center - diff) weight, and pre-split the head's first weight per branch."""
    flat = []
    for name in ("conv1", "conv2", "conv3"):
        p = params[name]
        scale = p["bn_gamma"] / jnp.sqrt(p["bn_var"] + eps)
        w1 = p["w1"] * scale                                   # fold BN scale into W1
        b1 = (p["b1"] - p["bn_mean"]) * scale + p["bn_beta"]   # correct general fold
        fdim = w1.shape[0] // 2
        wa, wb = w1[:fdim], w1[fdim:]                          # center / diff halves
        flat += [wa - wb, wb, b1, p["w2"], p["b2"]]            # wcd, wb, b1, w2, b2
    c1, c2, _ = params["n_conv"]
    m = params["mlp"]
    w1 = m["w1"]
    flat += [w1[:c1], w1[c1:c1 + c2], w1[c1 + c2:], m["b1"],
             m["w2"], m["b2"], m["w3"], m["b3"], m["w4"], m["b4"]]
    return flat


# ---------------------------------- demo ---------------------------------------
if __name__ == "__main__":
    cfg = dict(n_conv1=16, n_conv2=16, n_conv3=32, k=4, aggr="max",
               n_mlp1=32, n_mlp2=32, n_mlp3=16, out_channels=4, mlp_dropout=0.0)

    key = jax.random.PRNGKey(0)
    kx, kp = jax.random.split(key)

    n_graphs, n_per_graph = 2, 8
    n = n_graphs * n_per_graph
    x = jax.random.normal(kx, (n, 1), jnp.float32)             # input feature dim = 1
    batch = jnp.repeat(jnp.arange(n_graphs, dtype=jnp.int32), n_per_graph)

    params = prepare_params(init_params(kp, cfg))
    fwd = jax.jit(functools.partial(dgcnn_forward, k=cfg["k"],
                                    num_graphs=n_graphs,
                                    max_nodes_per_graph=n_per_graph))
    out = jax.block_until_ready(fwd(params, x, batch))

    assert out.shape == (n, cfg["out_channels"]), out.shape
    # rows of log_softmax must exponentiate to a probability distribution
    row_sums = jnp.sum(jnp.exp(out), axis=1)
    assert bool(jnp.all(jnp.abs(row_sums - 1.0) < 1e-4)), row_sums
    assert bool(jnp.all(jnp.isfinite(out)))

    print("KERNEL_OK")
</pallas_src>

<mosaic_0001>
module attributes {stable_mosaic.version = 11 : i64} {
  func.func @_dgcnn_kernel(%arg0: i32, %arg1: memref<1x8x1xf32, #tpu.memory_space<vmem>>, %arg2: memref<1x1x8xf32, #tpu.memory_space<vmem>>, %arg3: memref<1x16xf32, #tpu.memory_space<vmem>>, %arg4: memref<1x16xf32, #tpu.memory_space<vmem>>, %arg5: memref<1x16xf32, #tpu.memory_space<vmem>>, %arg6: memref<16x16xf32, #tpu.memory_space<vmem>>, %arg7: memref<1x16xf32, #tpu.memory_space<vmem>>, %arg8: memref<16x16xf32, #tpu.memory_space<vmem>>, %arg9: memref<16x16xf32, #tpu.memory_space<vmem>>, %arg10: memref<1x16xf32, #tpu.memory_space<vmem>>, %arg11: memref<16x16xf32, #tpu.memory_space<vmem>>, %arg12: memref<1x16xf32, #tpu.memory_space<vmem>>, %arg13: memref<16x32xf32, #tpu.memory_space<vmem>>, %arg14: memref<16x32xf32, #tpu.memory_space<vmem>>, %arg15: memref<1x32xf32, #tpu.memory_space<vmem>>, %arg16: memref<32x32xf32, #tpu.memory_space<vmem>>, %arg17: memref<1x32xf32, #tpu.memory_space<vmem>>, %arg18: memref<16x32xf32, #tpu.memory_space<vmem>>, %arg19: memref<16x32xf32, #tpu.memory_space<vmem>>, %arg20: memref<32x32xf32, #tpu.memory_space<vmem>>, %arg21: memref<1x32xf32, #tpu.memory_space<vmem>>, %arg22: memref<32x32xf32, #tpu.memory_space<vmem>>, %arg23: memref<1x32xf32, #tpu.memory_space<vmem>>, %arg24: memref<32x16xf32, #tpu.memory_space<vmem>>, %arg25: memref<1x16xf32, #tpu.memory_space<vmem>>, %arg26: memref<16x4xf32, #tpu.memory_space<vmem>>, %arg27: memref<1x4xf32, #tpu.memory_space<vmem>>, %arg28: memref<1x8x4xf32, #tpu.memory_space<vmem>>) attributes {dimension_semantics = [#tpu.dimension_semantics<parallel>], iteration_bounds = array<i64: 2>, scalar_prefetch = 0 : i64, scratch_operands = 0 : i64, tpu.core_type = #tpu.core_type<tc>, window_params = [{transform_indices = @transform_0, window_bounds = array<i64: 1, 8, 1>}, {transform_indices = @transform_1, window_bounds = array<i64: 1, 1, 8>}, {pipeline_mode = #tpu.pipeline_mode<synchronous>, transform_indices = @transform_2, window_bounds = array<i64: 1, 16>}, {pipeline_mode = #tpu.pipeline_mode<synchronous>, transform_indices = @transform_3, window_bounds = array<i64: 1, 16>}, {pipeline_mode = #tpu.pipeline_mode<synchronous>, transform_indices = @transform_4, window_bounds = array<i64: 1, 16>}, {pipeline_mode = #tpu.pipeline_mode<synchronous>, transform_indices = @transform_5, window_bounds = array<i64: 16, 16>}, {pipeline_mode = #tpu.pipeline_mode<synchronous>, transform_indices = @transform_6, window_bounds = array<i64: 1, 16>}, {pipeline_mode = #tpu.pipeline_mode<synchronous>, transform_indices = @transform_7, window_bounds = array<i64: 16, 16>}, {pipeline_mode = #tpu.pipeline_mode<synchronous>, transform_indices = @transform_8, window_bounds = array<i64: 16, 16>}, {pipeline_mode = #tpu.pipeline_mode<synchronous>, transform_indices = @transform_9, window_bounds = array<i64: 1, 16>}, {pipeline_mode = #tpu.pipeline_mode<synchronous>, transform_indices = @transform_10, window_bounds = array<i64: 16, 16>}, {pipeline_mode = #tpu.pipeline_mode<synchronous>, transform_indices = @transform_11, window_bounds = array<i64: 1, 16>}, {pipeline_mode = #tpu.pipeline_mode<synchronous>, transform_indices = @transform_12, window_bounds = array<i64: 16, 32>}, {pipeline_mode = #tpu.pipeline_mode<synchronous>, transform_indices = @transform_13, window_bounds = array<i64: 16, 32>}, {pipeline_mode = #tpu.pipeline_mode<synchronous>, transform_indices = @transform_14, window_bounds = array<i64: 1, 32>}, {pipeline_mode = #tpu.pipeline_mode<synchronous>, transform_indices = @transform_15, window_bounds = array<i64: 32, 32>}, {pipeline_mode = #tpu.pipeline_mode<synchronous>, transform_indices = @transform_16, window_bounds = array<i64: 1, 32>}, {pipeline_mode = #tpu.pipeline_mode<synchronous>, transform_indices = @transform_17, window_bounds = array<i64: 16, 32>}, {pipeline_mode = #tpu.pipeline_mode<synchronous>, transform_indices = @transform_18, window_bounds = array<i64: 16, 32>}, {pipeline_mode = #tpu.pipeline_mode<synchronous>, transform_indices = @transform_19, window_bounds = array<i64: 32, 32>}, {pipeline_mode = #tpu.pipeline_mode<synchronous>, transform_indices = @transform_20, window_bounds = array<i64: 1, 32>}, {pipeline_mode = #tpu.pipeline_mode<synchronous>, transform_indices = @transform_21, window_bounds = array<i64: 32, 32>}, {pipeline_mode = #tpu.pipeline_mode<synchronous>, transform_indices = @transform_22, window_bounds = array<i64: 1, 32>}, {pipeline_mode = #tpu.pipeline_mode<synchronous>, transform_indices = @transform_23, window_bounds = array<i64: 32, 16>}, {pipeline_mode = #tpu.pipeline_mode<synchronous>, transform_indices = @transform_24, window_bounds = array<i64: 1, 16>}, {pipeline_mode = #tpu.pipeline_mode<synchronous>, transform_indices = @transform_25, window_bounds = array<i64: 16, 4>}, {pipeline_mode = #tpu.pipeline_mode<synchronous>, transform_indices = @transform_26, window_bounds = array<i64: 1, 4>}, {transform_indices = @transform_27, window_bounds = array<i64: 1, 8, 4>}]} {
    %c0 = arith.constant 0 : index
    %c0_0 = arith.constant 0 : index
    %c0_1 = arith.constant 0 : index
    %0 = vector.load %arg1[%c0, %c0_0, %c0_1] : memref<1x8x1xf32, #tpu.memory_space<vmem>>, vector<1x8x1xf32>
    %1 = vector.shape_cast %0 : vector<1x8x1xf32> to vector<8x1xf32>
    %c0_2 = arith.constant 0 : index
    %c0_3 = arith.constant 0 : index
    %c0_4 = arith.constant 0 : index
    %2 = vector.load %arg2[%c0_2, %c0_3, %c0_4] : memref<1x1x8xf32, #tpu.memory_space<vmem>>, vector<1x1x8xf32>
    %3 = vector.shape_cast %2 : vector<1x1x8xf32> to vector<1x8xf32>
    %4 = tpu.iota {dimensions = array<i32: 1>} : vector<8x8xi32>
    %5 = arith.sitofp %4 : vector<8x8xi32> to vector<8x8xf32>
    %c0_5 = arith.constant 0 : index
    %c0_6 = arith.constant 0 : index
    %6 = vector.load %arg3[%c0_5, %c0_6] : memref<1x16xf32, #tpu.memory_space<vmem>>, vector<1x16xf32>
    %c0_7 = arith.constant 0 : index
    %c0_8 = arith.constant 0 : index
    %7 = vector.load %arg4[%c0_7, %c0_8] : memref<1x16xf32, #tpu.memory_space<vmem>>, vector<1x16xf32>
    %c0_9 = arith.constant 0 : index
    %c0_10 = arith.constant 0 : index
    %8 = vector.load %arg5[%c0_9, %c0_10] : memref<1x16xf32, #tpu.memory_space<vmem>>, vector<1x16xf32>
    %c0_11 = arith.constant 0 : index
    %c0_12 = arith.constant 0 : index
    %9 = vector.load %arg6[%c0_11, %c0_12] : memref<16x16xf32, #tpu.memory_space<vmem>>, vector<16x16xf32>
    %c0_13 = arith.constant 0 : index
    %c0_14 = arith.constant 0 : index
    %10 = vector.load %arg7[%c0_13, %c0_14] : memref<1x16xf32, #tpu.memory_space<vmem>>, vector<1x16xf32>
    %11 = arith.mulf %1, %1 : vector<8x1xf32>
    %cst = arith.constant dense<0.000000e+00> : vector<8xf32>
    %12 = vector.multi_reduction <add>, %11, %cst [1] : vector<8x1xf32> to vector<8xf32>
    %13 = vector.shape_cast %12 : vector<8xf32> to vector<8x1xf32>
    %cst_15 = arith.constant 1.000000e+00 : f32
    %14 = vector.broadcast %cst_15 : f32 to vector<1x1xf32>
    %cst_16 = arith.constant dense<0.000000e+00> : vector<1x8xf32>
    %15 = tpu.matmul %14, %11, %cst_16 {dimension_numbers = #tpu.dot_dimension_numbers<[1], [1], [0], [0], [0, 0, 1, 0], [], []>} : vector<1x1xf32>, vector<8x1xf32>, vector<1x8xf32> -> vector<1x8xf32>
    %16 = arith.truncf %1 : vector<8x1xf32> to vector<8x1xbf16>
    %cst_17 = arith.constant dense<0.000000e+00> : vector<8x8xf32>
    %17 = tpu.matmul %16, %16, %cst_17 {dimension_numbers = #tpu.dot_dimension_numbers<[1], [1], [0], [0], [0, 0, 1, 0], [], []>} : vector<8x1xbf16>, vector<8x1xbf16>, vector<8x8xf32> -> vector<8x8xf32>
    %18 = vector.broadcast %13 : vector<8x1xf32> to vector<8x8xf32>
    %19 = vector.broadcast %15 : vector<1x8xf32> to vector<8x8xf32>
    %20 = arith.addf %18, %19 : vector<8x8xf32>
    %cst_18 = arith.constant 2.000000e+00 : f32
    %21 = vector.broadcast %cst_18 : f32 to vector<8x8xf32>
    %22 = arith.mulf %21, %17 : vector<8x8xf32>
    %23 = arith.subf %20, %22 : vector<8x8xf32>
    %24 = vector.broadcast %3 : vector<1x8xf32> to vector<8x8xf32>
    %25 = arith.addf %23, %24 : vector<8x8xf32>
    %26 = vector.broadcast %1 : vector<8x1xf32> to vector<8x16xf32>
    %27 = vector.broadcast %6 : vector<1x16xf32> to vector<8x16xf32>
    %28 = arith.mulf %26, %27 : vector<8x16xf32>
    %29 = vector.broadcast %8 : vector<1x16xf32> to vector<8x16xf32>
    %30 = arith.addf %28, %29 : vector<8x16xf32>
    %cst_19 = arith.constant dense<0x7F800000> : vector<8xf32>
    %31 = vector.multi_reduction <minimumf>, %25, %cst_19 [1] : vector<8x8xf32> to vector<8xf32>
    %32 = vector.shape_cast %31 : vector<8xf32> to vector<8x1xf32>
    %33 = vector.broadcast %32 : vector<8x1xf32> to vector<8x8xf32>
    %34 = arith.cmpf ole, %25, %33 : vector<8x8xf32>
    %cst_20 = arith.constant 8.000000e+00 : f32
    %35 = vector.broadcast %cst_20 : f32 to vector<8x8xf32>
    %36 = arith.select %34, %5, %35 : vector<8x8xi1>, vector<8x8xf32>
    %cst_21 = arith.constant dense<0x7F800000> : vector<8xf32>
    %37 = vector.multi_reduction <minimumf>, %36, %cst_21 [1] : vector<8x8xf32> to vector<8xf32>
    %38 = vector.shape_cast %37 : vector<8xf32> to vector<8x1xf32>
    %39 = vector.broadcast %38 : vector<8x1xf32> to vector<8x8xf32>
    %40 = arith.cmpf oeq, %5, %39 : vector<8x8xf32>
    %cst_22 = arith.constant 1.000000e+30 : f32
    %41 = vector.broadcast %cst_22 : f32 to vector<8x8xf32>
    %42 = arith.select %40, %41, %25 : vector<8x8xi1>, vector<8x8xf32>
    %43 = arith.extui %40 : vector<8x8xi1> to vector<8x8xi32>
    %44 = arith.sitofp %43 : vector<8x8xi32> to vector<8x8xf32>
    %cst_23 = arith.constant dense<0.000000e+00> : vector<8x1xf32>
    %45 = tpu.matmul %44, %1, %cst_23 {dimension_numbers = #tpu.dot_dimension_numbers<[1], [0], [0], [1], [0, 0, 1, 1], [], []>} : vector<8x8xf32>, vector<8x1xf32>, vector<8x1xf32> -> vector<8x1xf32>
    %46 = vector.broadcast %45 : vector<8x1xf32> to vector<8x16xf32>
    %47 = vector.broadcast %7 : vector<1x16xf32> to vector<8x16xf32>
    %48 = arith.mulf %46, %47 : vector<8x16xf32>
    %49 = arith.addf %30, %48 : vector<8x16xf32>
    %cst_24 = arith.constant 0.000000e+00 : f32
    %50 = vector.broadcast %cst_24 : f32 to vector<8x16xf32>
    %51 = arith.maximumf %49, %50 : vector<8x16xf32>
    %cst_25 = arith.constant dense<0.000000e+00> : vector<8x16xf32>
    %52 = tpu.matmul %51, %9, %cst_25 {dimension_numbers = #tpu.dot_dimension_numbers<[1], [0], [0], [1], [0, 0, 1, 1], [], []>} : vector<8x16xf32>, vector<16x16xf32>, vector<8x16xf32> -> vector<8x16xf32>
    %cst_26 = arith.constant dense<0x7F800000> : vector<8xf32>
    %53 = vector.multi_reduction <minimumf>, %42, %cst_26 [1] : vector<8x8xf32> to vector<8xf32>
    %54 = vector.shape_cast %53 : vector<8xf32> to vector<8x1xf32>
    %55 = vector.broadcast %54 : vector<8x1xf32> to vector<8x8xf32>
    %56 = arith.cmpf ole, %42, %55 : vector<8x8xf32>
    %cst_27 = arith.constant 8.000000e+00 : f32
    %57 = vector.broadcast %cst_27 : f32 to vector<8x8xf32>
    %58 = arith.select %56, %5, %57 : vector<8x8xi1>, vector<8x8xf32>
    %cst_28 = arith.constant dense<0x7F800000> : vector<8xf32>
    %59 = vector.multi_reduction <minimumf>, %58, %cst_28 [1] : vector<8x8xf32> to vector<8xf32>
    %60 = vector.shape_cast %59 : vector<8xf32> to vector<8x1xf32>
    %61 = vector.broadcast %60 : vector<8x1xf32> to vector<8x8xf32>
    %62 = arith.cmpf oeq, %5, %61 : vector<8x8xf32>
    %cst_29 = arith.constant 1.000000e+30 : f32
    %63 = vector.broadcast %cst_29 : f32 to vector<8x8xf32>
    %64 = arith.select %62, %63, %42 : vector<8x8xi1>, vector<8x8xf32>
    %65 = arith.extui %62 : vector<8x8xi1> to vector<8x8xi32>
    %66 = arith.sitofp %65 : vector<8x8xi32> to vector<8x8xf32>
    %cst_30 = arith.constant dense<0.000000e+00> : vector<8x1xf32>
    %67 = tpu.matmul %66, %1, %cst_30 {dimension_numbers = #tpu.dot_dimension_numbers<[1], [0], [0], [1], [0, 0, 1, 1], [], []>} : vector<8x8xf32>, vector<8x1xf32>, vector<8x1xf32> -> vector<8x1xf32>
    %68 = vector.broadcast %67 : vector<8x1xf32> to vector<8x16xf32>
    %69 = vector.broadcast %7 : vector<1x16xf32> to vector<8x16xf32>
    %70 = arith.mulf %68, %69 : vector<8x16xf32>
    %71 = arith.addf %30, %70 : vector<8x16xf32>
    %cst_31 = arith.constant 0.000000e+00 : f32
    %72 = vector.broadcast %cst_31 : f32 to vector<8x16xf32>
    %73 = arith.maximumf %71, %72 : vector<8x16xf32>
    %cst_32 = arith.constant dense<0.000000e+00> : vector<8x16xf32>
    %74 = tpu.matmul %73, %9, %cst_32 {dimension_numbers = #tpu.dot_dimension_numbers<[1], [0], [0], [1], [0, 0, 1, 1], [], []>} : vector<8x16xf32>, vector<16x16xf32>, vector<8x16xf32> -> vector<8x16xf32>
    %75 = arith.maximumf %52, %74 : vector<8x16xf32>
    %cst_33 = arith.constant dense<0x7F800000> : vector<8xf32>
    %76 = vector.multi_reduction <minimumf>, %64, %cst_33 [1] : vector<8x8xf32> to vector<8xf32>
    %77 = vector.shape_cast %76 : vector<8xf32> to vector<8x1xf32>
    %78 = vector.broadcast %77 : vector<8x1xf32> to vector<8x8xf32>
    %79 = arith.cmpf ole, %64, %78 : vector<8x8xf32>
    %cst_34 = arith.constant 8.000000e+00 : f32
    %80 = vector.broadcast %cst_34 : f32 to vector<8x8xf32>
    %81 = arith.select %79, %5, %80 : vector<8x8xi1>, vector<8x8xf32>
    %cst_35 = arith.constant dense<0x7F800000> : vector<8xf32>
    %82 = vector.multi_reduction <minimumf>, %81, %cst_35 [1] : vector<8x8xf32> to vector<8xf32>
    %83 = vector.shape_cast %82 : vector<8xf32> to vector<8x1xf32>
    %84 = vector.broadcast %83 : vector<8x1xf32> to vector<8x8xf32>
    %85 = arith.cmpf oeq, %5, %84 : vector<8x8xf32>
    %cst_36 = arith.constant 1.000000e+30 : f32
    %86 = vector.broadcast %cst_36 : f32 to vector<8x8xf32>
    %87 = arith.select %85, %86, %64 : vector<8x8xi1>, vector<8x8xf32>
    %88 = arith.extui %85 : vector<8x8xi1> to vector<8x8xi32>
    %89 = arith.sitofp %88 : vector<8x8xi32> to vector<8x8xf32>
    %cst_37 = arith.constant dense<0.000000e+00> : vector<8x1xf32>
    %90 = tpu.matmul %89, %1, %cst_37 {dimension_numbers = #tpu.dot_dimension_numbers<[1], [0], [0], [1], [0, 0, 1, 1], [], []>} : vector<8x8xf32>, vector<8x1xf32>, vector<8x1xf32> -> vector<8x1xf32>
    %91 = vector.broadcast %90 : vector<8x1xf32> to vector<8x16xf32>
    %92 = vector.broadcast %7 : vector<1x16xf32> to vector<8x16xf32>
    %93 = arith.mulf %91, %92 : vector<8x16xf32>
    %94 = arith.addf %30, %93 : vector<8x16xf32>
    %cst_38 = arith.constant 0.000000e+00 : f32
    %95 = vector.broadcast %cst_38 : f32 to vector<8x16xf32>
    %96 = arith.maximumf %94, %95 : vector<8x16xf32>
    %cst_39 = arith.constant dense<0.000000e+00> : vector<8x16xf32>
    %97 = tpu.matmul %96, %9, %cst_39 {dimension_numbers = #tpu.dot_dimension_numbers<[1], [0], [0], [1], [0, 0, 1, 1], [], []>} : vector<8x16xf32>, vector<16x16xf32>, vector<8x16xf32> -> vector<8x16xf32>
    %98 = arith.maximumf %75, %97 : vector<8x16xf32>
    %cst_40 = arith.constant dense<0x7F800000> : vector<8xf32>
    %99 = vector.multi_reduction <minimumf>, %87, %cst_40 [1] : vector<8x8xf32> to vector<8xf32>
    %100 = vector.shape_cast %99 : vector<8xf32> to vector<8x1xf32>
    %101 = vector.broadcast %100 : vector<8x1xf32> to vector<8x8xf32>
    %102 = arith.cmpf ole, %87, %101 : vector<8x8xf32>
    %cst_41 = arith.constant 8.000000e+00 : f32
    %103 = vector.broadcast %cst_41 : f32 to vector<8x8xf32>
    %104 = arith.select %102, %5, %103 : vector<8x8xi1>, vector<8x8xf32>
    %cst_42 = arith.constant dense<0x7F800000> : vector<8xf32>
    %105 = vector.multi_reduction <minimumf>, %104, %cst_42 [1] : vector<8x8xf32> to vector<8xf32>
    %106 = vector.shape_cast %105 : vector<8xf32> to vector<8x1xf32>
    %107 = vector.broadcast %106 : vector<8x1xf32> to vector<8x8xf32>
    %108 = arith.cmpf oeq, %5, %107 : vector<8x8xf32>
    %109 = arith.extui %108 : vector<8x8xi1> to vector<8x8xi32>
    %110 = arith.sitofp %109 : vector<8x8xi32> to vector<8x8xf32>
    %cst_43 = arith.constant dense<0.000000e+00> : vector<8x1xf32>
    %111 = tpu.matmul %110, %1, %cst_43 {dimension_numbers = #tpu.dot_dimension_numbers<[1], [0], [0], [1], [0, 0, 1, 1], [], []>} : vector<8x8xf32>, vector<8x1xf32>, vector<8x1xf32> -> vector<8x1xf32>
    %112 = vector.broadcast %111 : vector<8x1xf32> to vector<8x16xf32>
    %113 = vector.broadcast %7 : vector<1x16xf32> to vector<8x16xf32>
    %114 = arith.mulf %112, %113 : vector<8x16xf32>
    %115 = arith.addf %30, %114 : vector<8x16xf32>
    %cst_44 = arith.constant 0.000000e+00 : f32
    %116 = vector.broadcast %cst_44 : f32 to vector<8x16xf32>
    %117 = arith.maximumf %115, %116 : vector<8x16xf32>
    %cst_45 = arith.constant dense<0.000000e+00> : vector<8x16xf32>
    %118 = tpu.matmul %117, %9, %cst_45 {dimension_numbers = #tpu.dot_dimension_numbers<[1], [0], [0], [1], [0, 0, 1, 1], [], []>} : vector<8x16xf32>, vector<16x16xf32>, vector<8x16xf32> -> vector<8x16xf32>
    %119 = arith.maximumf %98, %118 : vector<8x16xf32>
    %120 = vector.broadcast %10 : vector<1x16xf32> to vector<8x16xf32>
    %121 = arith.addf %119, %120 : vector<8x16xf32>
    %c0_46 = arith.constant 0 : index
    %c0_47 = arith.constant 0 : index
    %122 = vector.load %arg8[%c0_46, %c0_47] : memref<16x16xf32, #tpu.memory_space<vmem>>, vector<16x16xf32>
    %c0_48 = arith.constant 0 : index
    %c0_49 = arith.constant 0 : index
    %123 = vector.load %arg9[%c0_48, %c0_49] : memref<16x16xf32, #tpu.memory_space<vmem>>, vector<16x16xf32>
    %c0_50 = arith.constant 0 : index
    %c0_51 = arith.constant 0 : index
    %124 = vector.load %arg10[%c0_50, %c0_51] : memref<1x16xf32, #tpu.memory_space<vmem>>, vector<1x16xf32>
    %c0_52 = arith.constant 0 : index
    %c0_53 = arith.constant 0 : index
    %125 = vector.load %arg11[%c0_52, %c0_53] : memref<16x16xf32, #tpu.memory_space<vmem>>, vector<16x16xf32>
    %c0_54 = arith.constant 0 : index
    %c0_55 = arith.constant 0 : index
    %126 = vector.load %arg12[%c0_54, %c0_55] : memref<1x16xf32, #tpu.memory_space<vmem>>, vector<1x16xf32>
    %127 = arith.mulf %121, %121 : vector<8x16xf32>
    %cst_56 = arith.constant dense<0.000000e+00> : vector<8xf32>
    %128 = vector.multi_reduction <add>, %127, %cst_56 [1] : vector<8x16xf32> to vector<8xf32>
    %129 = vector.shape_cast %128 : vector<8xf32> to vector<8x1xf32>
    %cst_57 = arith.constant 1.000000e+00 : f32
    %130 = vector.broadcast %cst_57 : f32 to vector<1x16xf32>
    %cst_58 = arith.constant dense<0.000000e+00> : vector<1x8xf32>
    %131 = tpu.matmul %130, %127, %cst_58 {dimension_numbers = #tpu.dot_dimension_numbers<[1], [1], [0], [0], [0, 0, 1, 0], [], []>} : vector<1x16xf32>, vector<8x16xf32>, vector<1x8xf32> -> vector<1x8xf32>
    %132 = arith.truncf %121 : vector<8x16xf32> to vector<8x16xbf16>
    %cst_59 = arith.constant dense<0.000000e+00> : vector<8x8xf32>
    %133 = tpu.matmul %132, %132, %cst_59 {dimension_numbers = #tpu.dot_dimension_numbers<[1], [1], [0], [0], [0, 0, 1, 0], [], []>} : vector<8x16xbf16>, vector<8x16xbf16>, vector<8x8xf32> -> vector<8x8xf32>
    %134 = vector.broadcast %129 : vector<8x1xf32> to vector<8x8xf32>
    %135 = vector.broadcast %131 : vector<1x8xf32> to vector<8x8xf32>
    %136 = arith.addf %134, %135 : vector<8x8xf32>
    %cst_60 = arith.constant 2.000000e+00 : f32
    %137 = vector.broadcast %cst_60 : f32 to vector<8x8xf32>
    %138 = arith.mulf %137, %133 : vector<8x8xf32>
    %139 = arith.subf %136, %138 : vector<8x8xf32>
    %140 = vector.broadcast %3 : vector<1x8xf32> to vector<8x8xf32>
    %141 = arith.addf %139, %140 : vector<8x8xf32>
    %cst_61 = arith.constant dense<0.000000e+00> : vector<8x16xf32>
    %142 = tpu.matmul %121, %122, %cst_61 {dimension_numbers = #tpu.dot_dimension_numbers<[1], [0], [0], [1], [0, 0, 1, 1], [], []>} : vector<8x16xf32>, vector<16x16xf32>, vector<8x16xf32> -> vector<8x16xf32>
    %143 = vector.broadcast %124 : vector<1x16xf32> to vector<8x16xf32>
    %144 = arith.addf %142, %143 : vector<8x16xf32>
    %cst_62 = arith.constant dense<0x7F800000> : vector<8xf32>
    %145 = vector.multi_reduction <minimumf>, %141, %cst_62 [1] : vector<8x8xf32> to vector<8xf32>
    %146 = vector.shape_cast %145 : vector<8xf32> to vector<8x1xf32>
    %147 = vector.broadcast %146 : vector<8x1xf32> to vector<8x8xf32>
    %148 = arith.cmpf ole, %141, %147 : vector<8x8xf32>
    %cst_63 = arith.constant 8.000000e+00 : f32
    %149 = vector.broadcast %cst_63 : f32 to vector<8x8xf32>
    %150 = arith.select %148, %5, %149 : vector<8x8xi1>, vector<8x8xf32>
    %cst_64 = arith.constant dense<0x7F800000> : vector<8xf32>
    %151 = vector.multi_reduction <minimumf>, %150, %cst_64 [1] : vector<8x8xf32> to vector<8xf32>
    %152 = vector.shape_cast %151 : vector<8xf32> to vector<8x1xf32>
    %153 = vector.broadcast %152 : vector<8x1xf32> to vector<8x8xf32>
    %154 = arith.cmpf oeq, %5, %153 : vector<8x8xf32>
    %cst_65 = arith.constant 1.000000e+30 : f32
    %155 = vector.broadcast %cst_65 : f32 to vector<8x8xf32>
    %156 = arith.select %154, %155, %141 : vector<8x8xi1>, vector<8x8xf32>
    %157 = arith.extui %154 : vector<8x8xi1> to vector<8x8xi32>
    %158 = arith.sitofp %157 : vector<8x8xi32> to vector<8x8xf32>
    %cst_66 = arith.constant dense<0.000000e+00> : vector<8x16xf32>
    %159 = tpu.matmul %158, %121, %cst_66 {dimension_numbers = #tpu.dot_dimension_numbers<[1], [0], [0], [1], [0, 0, 1, 1], [], []>} : vector<8x8xf32>, vector<8x16xf32>, vector<8x16xf32> -> vector<8x16xf32>
    %cst_67 = arith.constant dense<0.000000e+00> : vector<8x16xf32>
    %160 = tpu.matmul %159, %123, %cst_67 {dimension_numbers = #tpu.dot_dimension_numbers<[1], [0], [0], [1], [0, 0, 1, 1], [], []>} : vector<8x16xf32>, vector<16x16xf32>, vector<8x16xf32> -> vector<8x16xf32>
    %161 = arith.addf %144, %160 : vector<8x16xf32>
    %cst_68 = arith.constant 0.000000e+00 : f32
    %162 = vector.broadcast %cst_68 : f32 to vector<8x16xf32>
    %163 = arith.maximumf %161, %162 : vector<8x16xf32>
    %cst_69 = arith.constant dense<0.000000e+00> : vector<8x16xf32>
    %164 = tpu.matmul %163, %125, %cst_69 {dimension_numbers = #tpu.dot_dimension_numbers<[1], [0], [0], [1], [0, 0, 1, 1], [], []>} : vector<8x16xf32>, vector<16x16xf32>, vector<8x16xf32> -> vector<8x16xf32>
    %cst_70 = arith.constant dense<0x7F800000> : vector<8xf32>
    %165 = vector.multi_reduction <minimumf>, %156, %cst_70 [1] : vector<8x8xf32> to vector<8xf32>
    %166 = vector.shape_cast %165 : vector<8xf32> to vector<8x1xf32>
    %167 = vector.broadcast %166 : vector<8x1xf32> to vector<8x8xf32>
    %168 = arith.cmpf ole, %156, %167 : vector<8x8xf32>
    %cst_71 = arith.constant 8.000000e+00 : f32
    %169 = vector.broadcast %cst_71 : f32 to vector<8x8xf32>
    %170 = arith.select %168, %5, %169 : vector<8x8xi1>, vector<8x8xf32>
    %cst_72 = arith.constant dense<0x7F800000> : vector<8xf32>
    %171 = vector.multi_reduction <minimumf>, %170, %cst_72 [1] : vector<8x8xf32> to vector<8xf32>
    %172 = vector.shape_cast %171 : vector<8xf32> to vector<8x1xf32>
    %173 = vector.broadcast %172 : vector<8x1xf32> to vector<8x8xf32>
    %174 = arith.cmpf oeq, %5, %173 : vector<8x8xf32>
    %cst_73 = arith.constant 1.000000e+30 : f32
    %175 = vector.broadcast %cst_73 : f32 to vector<8x8xf32>
    %176 = arith.select %174, %175, %156 : vector<8x8xi1>, vector<8x8xf32>
    %177 = arith.extui %174 : vector<8x8xi1> to vector<8x8xi32>
    %178 = arith.sitofp %177 : vector<8x8xi32> to vector<8x8xf32>
    %cst_74 = arith.constant dense<0.000000e+00> : vector<8x16xf32>
    %179 = tpu.matmul %178, %121, %cst_74 {dimension_numbers = #tpu.dot_dimension_numbers<[1], [0], [0], [1], [0, 0, 1, 1], [], []>} : vector<8x8xf32>, vector<8x16xf32>, vector<8x16xf32> -> vector<8x16xf32>
    %cst_75 = arith.constant dense<0.000000e+00> : vector<8x16xf32>
    %180 = tpu.matmul %179, %123, %cst_75 {dimension_numbers = #tpu.dot_dimension_numbers<[1], [0], [0], [1], [0, 0, 1, 1], [], []>} : vector<8x16xf32>, vector<16x16xf32>, vector<8x16xf32> -> vector<8x16xf32>
    %181 = arith.addf %144, %180 : vector<8x16xf32>
    %cst_76 = arith.constant 0.000000e+00 : f32
    %182 = vector.broadcast %cst_76 : f32 to vector<8x16xf32>
    %183 = arith.maximumf %181, %182 : vector<8x16xf32>
    %cst_77 = arith.constant dense<0.000000e+00> : vector<8x16xf32>
    %184 = tpu.matmul %183, %125, %cst_77 {dimension_numbers = #tpu.dot_dimension_numbers<[1], [0], [0], [1], [0, 0, 1, 1], [], []>} : vector<8x16xf32>, vector<16x16xf32>, vector<8x16xf32> -> vector<8x16xf32>
    %185 = arith.maximumf %164, %184 : vector<8x16xf32>
    %cst_78 = arith.constant dense<0x7F800000> : vector<8xf32>
    %186 = vector.multi_reduction <minimumf>, %176, %cst_78 [1] : vector<8x8xf32> to vector<8xf32>
    %187 = vector.shape_cast %186 : vector<8xf32> to vector<8x1xf32>
    %188 = vector.broadcast %187 : vector<8x1xf32> to vector<8x8xf32>
    %189 = arith.cmpf ole, %176, %188 : vector<8x8xf32>
    %cst_79 = arith.constant 8.000000e+00 : f32
    %190 = vector.broadcast %cst_79 : f32 to vector<8x8xf32>
    %191 = arith.select %189, %5, %190 : vector<8x8xi1>, vector<8x8xf32>
    %cst_80 = arith.constant dense<0x7F800000> : vector<8xf32>
    %192 = vector.multi_reduction <minimumf>, %191, %cst_80 [1] : vector<8x8xf32> to vector<8xf32>
    %193 = vector.shape_cast %192 : vector<8xf32> to vector<8x1xf32>
    %194 = vector.broadcast %193 : vector<8x1xf32> to vector<8x8xf32>
    %195 = arith.cmpf oeq, %5, %194 : vector<8x8xf32>
    %cst_81 = arith.constant 1.000000e+30 : f32
    %196 = vector.broadcast %cst_81 : f32 to vector<8x8xf32>
    %197 = arith.select %195, %196, %176 : vector<8x8xi1>, vector<8x8xf32>
    %198 = arith.extui %195 : vector<8x8xi1> to vector<8x8xi32>
    %199 = arith.sitofp %198 : vector<8x8xi32> to vector<8x8xf32>
    %cst_82 = arith.constant dense<0.000000e+00> : vector<8x16xf32>
    %200 = tpu.matmul %199, %121, %cst_82 {dimension_numbers = #tpu.dot_dimension_numbers<[1], [0], [0], [1], [0, 0, 1, 1], [], []>} : vector<8x8xf32>, vector<8x16xf32>, vector<8x16xf32> -> vector<8x16xf32>
    %cst_83 = arith.constant dense<0.000000e+00> : vector<8x16xf32>
    %201 = tpu.matmul %200, %123, %cst_83 {dimension_numbers = #tpu.dot_dimension_numbers<[1], [0], [0], [1], [0, 0, 1, 1], [], []>} : vector<8x16xf32>, vector<16x16xf32>, vector<8x16xf32> -> vector<8x16xf32>
    %202 = arith.addf %144, %201 : vector<8x16xf32>
    %cst_84 = arith.constant 0.000000e+00 : f32
    %203 = vector.broadcast %cst_84 : f32 to vector<8x16xf32>
    %204 = arith.maximumf %202, %203 : vector<8x16xf32>
    %cst_85 = arith.constant dense<0.000000e+00> : vector<8x16xf32>
    %205 = tpu.matmul %204, %125, %cst_85 {dimension_numbers = #tpu.dot_dimension_numbers<[1], [0], [0], [1], [0, 0, 1, 1], [], []>} : vector<8x16xf32>, vector<16x16xf32>, vector<8x16xf32> -> vector<8x16xf32>
    %206 = arith.maximumf %185, %205 : vector<8x16xf32>
    %cst_86 = arith.constant dense<0x7F800000> : vector<8xf32>
    %207 = vector.multi_reduction <minimumf>, %197, %cst_86 [1] : vector<8x8xf32> to vector<8xf32>
    %208 = vector.shape_cast %207 : vector<8xf32> to vector<8x1xf32>
    %209 = vector.broadcast %208 : vector<8x1xf32> to vector<8x8xf32>
    %210 = arith.cmpf ole, %197, %209 : vector<8x8xf32>
    %cst_87 = arith.constant 8.000000e+00 : f32
    %211 = vector.broadcast %cst_87 : f32 to vector<8x8xf32>
    %212 = arith.select %210, %5, %211 : vector<8x8xi1>, vector<8x8xf32>
    %cst_88 = arith.constant dense<0x7F800000> : vector<8xf32>
    %213 = vector.multi_reduction <minimumf>, %212, %cst_88 [1] : vector<8x8xf32> to vector<8xf32>
    %214 = vector.shape_cast %213 : vector<8xf32> to vector<8x1xf32>
    %215 = vector.broadcast %214 : vector<8x1xf32> to vector<8x8xf32>
    %216 = arith.cmpf oeq, %5, %215 : vector<8x8xf32>
    %217 = arith.extui %216 : vector<8x8xi1> to vector<8x8xi32>
    %218 = arith.sitofp %217 : vector<8x8xi32> to vector<8x8xf32>
    %cst_89 = arith.constant dense<0.000000e+00> : vector<8x16xf32>
    %219 = tpu.matmul %218, %121, %cst_89 {dimension_numbers = #tpu.dot_dimension_numbers<[1], [0], [0], [1], [0, 0, 1, 1], [], []>} : vector<8x8xf32>, vector<8x16xf32>, vector<8x16xf32> -> vector<8x16xf32>
    %cst_90 = arith.constant dense<0.000000e+00> : vector<8x16xf32>
    %220 = tpu.matmul %219, %123, %cst_90 {dimension_numbers = #tpu.dot_dimension_numbers<[1], [0], [0], [1], [0, 0, 1, 1], [], []>} : vector<8x16xf32>, vector<16x16xf32>, vector<8x16xf32> -> vector<8x16xf32>
    %221 = arith.addf %144, %220 : vector<8x16xf32>
    %cst_91 = arith.constant 0.000000e+00 : f32
    %222 = vector.broadcast %cst_91 : f32 to vector<8x16xf32>
    %223 = arith.maximumf %221, %222 : vector<8x16xf32>
    %cst_92 = arith.constant dense<0.000000e+00> : vector<8x16xf32>
    %224 = tpu.matmul %223, %125, %cst_92 {dimension_numbers = #tpu.dot_dimension_numbers<[1], [0], [0], [1], [0, 0, 1, 1], [], []>} : vector<8x16xf32>, vector<16x16xf32>, vector<8x16xf32> -> vector<8x16xf32>
    %225 = arith.maximumf %206, %224 : vector<8x16xf32>
    %226 = vector.broadcast %126 : vector<1x16xf32> to vector<8x16xf32>
    %227 = arith.addf %225, %226 : vector<8x16xf32>
    %c0_93 = arith.constant 0 : index
    %c0_94 = arith.constant 0 : index
    %228 = vector.load %arg13[%c0_93, %c0_94] : memref<16x32xf32, #tpu.memory_space<vmem>>, vector<16x32xf32>
    %c0_95 = arith.constant 0 : index
    %c0_96 = arith.constant 0 : index
    %229 = vector.load %arg14[%c0_95, %c0_96] : memref<16x32xf32, #tpu.memory_space<vmem>>, vector<16x32xf32>
    %c0_97 = arith.constant 0 : index
    %c0_98 = arith.constant 0 : index
    %230 = vector.load %arg15[%c0_97, %c0_98] : memref<1x32xf32, #tpu.memory_space<vmem>>, vector<1x32xf32>
    %c0_99 = arith.constant 0 : index
    %c0_100 = arith.constant 0 : index
    %231 = vector.load %arg16[%c0_99, %c0_100] : memref<32x32xf32, #tpu.memory_space<vmem>>, vector<32x32xf32>
    %c0_101 = arith.constant 0 : index
    %c0_102 = arith.constant 0 : index
    %232 = vector.load %arg17[%c0_101, %c0_102] : memref<1x32xf32, #tpu.memory_space<vmem>>, vector<1x32xf32>
    %233 = arith.mulf %227, %227 : vector<8x16xf32>
    %cst_103 = arith.constant dense<0.000000e+00> : vector<8xf32>
    %234 = vector.multi_reduction <add>, %233, %cst_103 [1] : vector<8x16xf32> to vector<8xf32>
    %235 = vector.shape_cast %234 : vector<8xf32> to vector<8x1xf32>
    %cst_104 = arith.constant 1.000000e+00 : f32
    %236 = vector.broadcast %cst_104 : f32 to vector<1x16xf32>
    %cst_105 = arith.constant dense<0.000000e+00> : vector<1x8xf32>
    %237 = tpu.matmul %236, %233, %cst_105 {dimension_numbers = #tpu.dot_dimension_numbers<[1], [1], [0], [0], [0, 0, 1, 0], [], []>} : vector<1x16xf32>, vector<8x16xf32>, vector<1x8xf32> -> vector<1x8xf32>
    %238 = arith.truncf %227 : vector<8x16xf32> to vector<8x16xbf16>
    %cst_106 = arith.constant dense<0.000000e+00> : vector<8x8xf32>
    %239 = tpu.matmul %238, %238, %cst_106 {dimension_numbers = #tpu.dot_dimension_numbers<[1], [1], [0], [0], [0, 0, 1, 0], [], []>} : vector<8x16xbf16>, vector<8x16xbf16>, vector<8x8xf32> -> vector<8x8xf32>
    %240 = vector.broadcast %235 : vector<8x1xf32> to vector<8x8xf32>
    %241 = vector.broadcast %237 : vector<1x8xf32> to vector<8x8xf32>
    %242 = arith.addf %240, %241 : vector<8x8xf32>
    %cst_107 = arith.constant 2.000000e+00 : f32
    %243 = vector.broadcast %cst_107 : f32 to vector<8x8xf32>
    %244 = arith.mulf %243, %239 : vector<8x8xf32>
    %245 = arith.subf %242, %244 : vector<8x8xf32>
    %246 = vector.broadcast %3 : vector<1x8xf32> to vector<8x8xf32>
    %247 = arith.addf %245, %246 : vector<8x8xf32>
    %cst_108 = arith.constant dense<0.000000e+00> : vector<8x32xf32>
    %248 = tpu.matmul %227, %228, %cst_108 {dimension_numbers = #tpu.dot_dimension_numbers<[1], [0], [0], [1], [0, 0, 1, 1], [], []>} : vector<8x16xf32>, vector<16x32xf32>, vector<8x32xf32> -> vector<8x32xf32>
    %249 = vector.broadcast %230 : vector<1x32xf32> to vector<8x32xf32>
    %250 = arith.addf %248, %249 : vector<8x32xf32>
    %cst_109 = arith.constant dense<0x7F800000> : vector<8xf32>
    %251 = vector.multi_reduction <minimumf>, %247, %cst_109 [1] : vector<8x8xf32> to vector<8xf32>
    %252 = vector.shape_cast %251 : vector<8xf32> to vector<8x1xf32>
    %253 = vector.broadcast %252 : vector<8x1xf32> to vector<8x8xf32>
    %254 = arith.cmpf ole, %247, %253 : vector<8x8xf32>
    %cst_110 = arith.constant 8.000000e+00 : f32
    %255 = vector.broadcast %cst_110 : f32 to vector<8x8xf32>
    %256 = arith.select %254, %5, %255 : vector<8x8xi1>, vector<8x8xf32>
    %cst_111 = arith.constant dense<0x7F800000> : vector<8xf32>
    %257 = vector.multi_reduction <minimumf>, %256, %cst_111 [1] : vector<8x8xf32> to vector<8xf32>
    %258 = vector.shape_cast %257 : vector<8xf32> to vector<8x1xf32>
    %259 = vector.broadcast %258 : vector<8x1xf32> to vector<8x8xf32>
    %260 = arith.cmpf oeq, %5, %259 : vector<8x8xf32>
    %cst_112 = arith.constant 1.000000e+30 : f32
    %261 = vector.broadcast %cst_112 : f32 to vector<8x8xf32>
    %262 = arith.select %260, %261, %247 : vector<8x8xi1>, vector<8x8xf32>
    %263 = arith.extui %260 : vector<8x8xi1> to vector<8x8xi32>
    %264 = arith.sitofp %263 : vector<8x8xi32> to vector<8x8xf32>
    %cst_113 = arith.constant dense<0.000000e+00> : vector<8x16xf32>
    %265 = tpu.matmul %264, %227, %cst_113 {dimension_numbers = #tpu.dot_dimension_numbers<[1], [0], [0], [1], [0, 0, 1, 1], [], []>} : vector<8x8xf32>, vector<8x16xf32>, vector<8x16xf32> -> vector<8x16xf32>
    %cst_114 = arith.constant dense<0.000000e+00> : vector<8x32xf32>
    %266 = tpu.matmul %265, %229, %cst_114 {dimension_numbers = #tpu.dot_dimension_numbers<[1], [0], [0], [1], [0, 0, 1, 1], [], []>} : vector<8x16xf32>, vector<16x32xf32>, vector<8x32xf32> -> vector<8x32xf32>
    %267 = arith.addf %250, %266 : vector<8x32xf32>
    %cst_115 = arith.constant 0.000000e+00 : f32
    %268 = vector.broadcast %cst_115 : f32 to vector<8x32xf32>
    %269 = arith.maximumf %267, %268 : vector<8x32xf32>
    %cst_116 = arith.constant dense<0.000000e+00> : vector<8x32xf32>
    %270 = tpu.matmul %269, %231, %cst_116 {dimension_numbers = #tpu.dot_dimension_numbers<[1], [0], [0], [1], [0, 0, 1, 1], [], []>} : vector<8x32xf32>, vector<32x32xf32>, vector<8x32xf32> -> vector<8x32xf32>
    %cst_117 = arith.constant dense<0x7F800000> : vector<8xf32>
    %271 = vector.multi_reduction <minimumf>, %262, %cst_117 [1] : vector<8x8xf32> to vector<8xf32>
    %272 = vector.shape_cast %271 : vector<8xf32> to vector<8x1xf32>
    %273 = vector.broadcast %272 : vector<8x1xf32> to vector<8x8xf32>
    %274 = arith.cmpf ole, %262, %273 : vector<8x8xf32>
    %cst_118 = arith.constant 8.000000e+00 : f32
    %275 = vector.broadcast %cst_118 : f32 to vector<8x8xf32>
    %276 = arith.select %274, %5, %275 : vector<8x8xi1>, vector<8x8xf32>
    %cst_119 = arith.constant dense<0x7F800000> : vector<8xf32>
    %277 = vector.multi_reduction <minimumf>, %276, %cst_119 [1] : vector<8x8xf32> to vector<8xf32>
    %278 = vector.shape_cast %277 : vector<8xf32> to vector<8x1xf32>
    %279 = vector.broadcast %278 : vector<8x1xf32> to vector<8x8xf32>
    %280 = arith.cmpf oeq, %5, %279 : vector<8x8xf32>
    %cst_120 = arith.constant 1.000000e+30 : f32
    %281 = vector.broadcast %cst_120 : f32 to vector<8x8xf32>
    %282 = arith.select %280, %281, %262 : vector<8x8xi1>, vector<8x8xf32>
    %283 = arith.extui %280 : vector<8x8xi1> to vector<8x8xi32>
    %284 = arith.sitofp %283 : vector<8x8xi32> to vector<8x8xf32>
    %cst_121 = arith.constant dense<0.000000e+00> : vector<8x16xf32>
    %285 = tpu.matmul %284, %227, %cst_121 {dimension_numbers = #tpu.dot_dimension_numbers<[1], [0], [0], [1], [0, 0, 1, 1], [], []>} : vector<8x8xf32>, vector<8x16xf32>, vector<8x16xf32> -> vector<8x16xf32>
    %cst_122 = arith.constant dense<0.000000e+00> : vector<8x32xf32>
    %286 = tpu.matmul %285, %229, %cst_122 {dimension_numbers = #tpu.dot_dimension_numbers<[1], [0], [0], [1], [0, 0, 1, 1], [], []>} : vector<8x16xf32>, vector<16x32xf32>, vector<8x32xf32> -> vector<8x32xf32>
    %287 = arith.addf %250, %286 : vector<8x32xf32>
    %cst_123 = arith.constant 0.000000e+00 : f32
    %288 = vector.broadcast %cst_123 : f32 to vector<8x32xf32>
    %289 = arith.maximumf %287, %288 : vector<8x32xf32>
    %cst_124 = arith.constant dense<0.000000e+00> : vector<8x32xf32>
    %290 = tpu.matmul %289, %231, %cst_124 {dimension_numbers = #tpu.dot_dimension_numbers<[1], [0], [0], [1], [0, 0, 1, 1], [], []>} : vector<8x32xf32>, vector<32x32xf32>, vector<8x32xf32> -> vector<8x32xf32>
    %291 = arith.maximumf %270, %290 : vector<8x32xf32>
    %cst_125 = arith.constant dense<0x7F800000> : vector<8xf32>
    %292 = vector.multi_reduction <minimumf>, %282, %cst_125 [1] : vector<8x8xf32> to vector<8xf32>
    %293 = vector.shape_cast %292 : vector<8xf32> to vector<8x1xf32>
    %294 = vector.broadcast %293 : vector<8x1xf32> to vector<8x8xf32>
    %295 = arith.cmpf ole, %282, %294 : vector<8x8xf32>
    %cst_126 = arith.constant 8.000000e+00 : f32
    %296 = vector.broadcast %cst_126 : f32 to vector<8x8xf32>
    %297 = arith.select %295, %5, %296 : vector<8x8xi1>, vector<8x8xf32>
    %cst_127 = arith.constant dense<0x7F800000> : vector<8xf32>
    %298 = vector.multi_reduction <minimumf>, %297, %cst_127 [1] : vector<8x8xf32> to vector<8xf32>
    %299 = vector.shape_cast %298 : vector<8xf32> to vector<8x1xf32>
    %300 = vector.broadcast %299 : vector<8x1xf32> to vector<8x8xf32>
    %301 = arith.cmpf oeq, %5, %300 : vector<8x8xf32>
    %cst_128 = arith.constant 1.000000e+30 : f32
    %302 = vector.broadcast %cst_128 : f32 to vector<8x8xf32>
    %303 = arith.select %301, %302, %282 : vector<8x8xi1>, vector<8x8xf32>
    %304 = arith.extui %301 : vector<8x8xi1> to vector<8x8xi32>
    %305 = arith.sitofp %304 : vector<8x8xi32> to vector<8x8xf32>
    %cst_129 = arith.constant dense<0.000000e+00> : vector<8x16xf32>
    %306 = tpu.matmul %305, %227, %cst_129 {dimension_numbers = #tpu.dot_dimension_numbers<[1], [0], [0], [1], [0, 0, 1, 1], [], []>} : vector<8x8xf32>, vector<8x16xf32>, vector<8x16xf32> -> vector<8x16xf32>
    %cst_130 = arith.constant dense<0.000000e+00> : vector<8x32xf32>
    %307 = tpu.matmul %306, %229, %cst_130 {dimension_numbers = #tpu.dot_dimension_numbers<[1], [0], [0], [1], [0, 0, 1, 1], [], []>} : vector<8x16xf32>, vector<16x32xf32>, vector<8x32xf32> -> vector<8x32xf32>
    %308 = arith.addf %250, %307 : vector<8x32xf32>
    %cst_131 = arith.constant 0.000000e+00 : f32
    %309 = vector.broadcast %cst_131 : f32 to vector<8x32xf32>
    %310 = arith.maximumf %308, %309 : vector<8x32xf32>
    %cst_132 = arith.constant dense<0.000000e+00> : vector<8x32xf32>
    %311 = tpu.matmul %310, %231, %cst_132 {dimension_numbers = #tpu.dot_dimension_numbers<[1], [0], [0], [1], [0, 0, 1, 1], [], []>} : vector<8x32xf32>, vector<32x32xf32>, vector<8x32xf32> -> vector<8x32xf32>
    %312 = arith.maximumf %291, %311 : vector<8x32xf32>
    %cst_133 = arith.constant dense<0x7F800000> : vector<8xf32>
    %313 = vector.multi_reduction <minimumf>, %303, %cst_133 [1] : vector<8x8xf32> to vector<8xf32>
    %314 = vector.shape_cast %313 : vector<8xf32> to vector<8x1xf32>
    %315 = vector.broadcast %314 : vector<8x1xf32> to vector<8x8xf32>
    %316 = arith.cmpf ole, %303, %315 : vector<8x8xf32>
    %cst_134 = arith.constant 8.000000e+00 : f32
    %317 = vector.broadcast %cst_134 : f32 to vector<8x8xf32>
    %318 = arith.select %316, %5, %317 : vector<8x8xi1>, vector<8x8xf32>
    %cst_135 = arith.constant dense<0x7F800000> : vector<8xf32>
    %319 = vector.multi_reduction <minimumf>, %318, %cst_135 [1] : vector<8x8xf32> to vector<8xf32>
    %320 = vector.shape_cast %319 : vector<8xf32> to vector<8x1xf32>
    %321 = vector.broadcast %320 : vector<8x1xf32> to vector<8x8xf32>
    %322 = arith.cmpf oeq, %5, %321 : vector<8x8xf32>
    %323 = arith.extui %322 : vector<8x8xi1> to vector<8x8xi32>
    %324 = arith.sitofp %323 : vector<8x8xi32> to vector<8x8xf32>
    %cst_136 = arith.constant dense<0.000000e+00> : vector<8x16xf32>
    %325 = tpu.matmul %324, %227, %cst_136 {dimension_numbers = #tpu.dot_dimension_numbers<[1], [0], [0], [1], [0, 0, 1, 1], [], []>} : vector<8x8xf32>, vector<8x16xf32>, vector<8x16xf32> -> vector<8x16xf32>
    %cst_137 = arith.constant dense<0.000000e+00> : vector<8x32xf32>
    %326 = tpu.matmul %325, %229, %cst_137 {dimension_numbers = #tpu.dot_dimension_numbers<[1], [0], [0], [1], [0, 0, 1, 1], [], []>} : vector<8x16xf32>, vector<16x32xf32>, vector<8x32xf32> -> vector<8x32xf32>
    %327 = arith.addf %250, %326 : vector<8x32xf32>
    %cst_138 = arith.constant 0.000000e+00 : f32
    %328 = vector.broadcast %cst_138 : f32 to vector<8x32xf32>
    %329 = arith.maximumf %327, %328 : vector<8x32xf32>
    %cst_139 = arith.constant dense<0.000000e+00> : vector<8x32xf32>
    %330 = tpu.matmul %329, %231, %cst_139 {dimension_numbers = #tpu.dot_dimension_numbers<[1], [0], [0], [1], [0, 0, 1, 1], [], []>} : vector<8x32xf32>, vector<32x32xf32>, vector<8x32xf32> -> vector<8x32xf32>
    %331 = arith.maximumf %312, %330 : vector<8x32xf32>
    %332 = vector.broadcast %232 : vector<1x32xf32> to vector<8x32xf32>
    %333 = arith.addf %331, %332 : vector<8x32xf32>
    %c0_140 = arith.constant 0 : index
    %c0_141 = arith.constant 0 : index
    %334 = vector.load %arg18[%c0_140, %c0_141] : memref<16x32xf32, #tpu.memory_space<vmem>>, vector<16x32xf32>
    %cst_142 = arith.constant dense<0.000000e+00> : vector<8x32xf32>
    %335 = tpu.matmul %121, %334, %cst_142 {dimension_numbers = #tpu.dot_dimension_numbers<[1], [0], [0], [1], [0, 0, 1, 1], [], []>} : vector<8x16xf32>, vector<16x32xf32>, vector<8x32xf32> -> vector<8x32xf32>
    %c0_143 = arith.constant 0 : index
    %c0_144 = arith.constant 0 : index
    %336 = vector.load %arg19[%c0_143, %c0_144] : memref<16x32xf32, #tpu.memory_space<vmem>>, vector<16x32xf32>
    %cst_145 = arith.constant dense<0.000000e+00> : vector<8x32xf32>
    %337 = tpu.matmul %227, %336, %cst_145 {dimension_numbers = #tpu.dot_dimension_numbers<[1], [0], [0], [1], [0, 0, 1, 1], [], []>} : vector<8x16xf32>, vector<16x32xf32>, vector<8x32xf32> -> vector<8x32xf32>
    %338 = arith.addf %335, %337 : vector<8x32xf32>
    %c0_146 = arith.constant 0 : index
    %c0_147 = arith.constant 0 : index
    %339 = vector.load %arg20[%c0_146, %c0_147] : memref<32x32xf32, #tpu.memory_space<vmem>>, vector<32x32xf32>
    %cst_148 = arith.constant dense<0.000000e+00> : vector<8x32xf32>
    %340 = tpu.matmul %333, %339, %cst_148 {dimension_numbers = #tpu.dot_dimension_numbers<[1], [0], [0], [1], [0, 0, 1, 1], [], []>} : vector<8x32xf32>, vector<32x32xf32>, vector<8x32xf32> -> vector<8x32xf32>
    %341 = arith.addf %338, %340 : vector<8x32xf32>
    %c0_149 = arith.constant 0 : index
    %c0_150 = arith.constant 0 : index
    %342 = vector.load %arg21[%c0_149, %c0_150] : memref<1x32xf32, #tpu.memory_space<vmem>>, vector<1x32xf32>
    %343 = vector.broadcast %342 : vector<1x32xf32> to vector<8x32xf32>
    %344 = arith.addf %341, %343 : vector<8x32xf32>
    %cst_151 = arith.constant 0.000000e+00 : f32
    %345 = vector.broadcast %cst_151 : f32 to vector<8x32xf32>
    %346 = arith.maximumf %344, %345 : vector<8x32xf32>
    %c0_152 = arith.constant 0 : index
    %c0_153 = arith.constant 0 : index
    %347 = vector.load %arg22[%c0_152, %c0_153] : memref<32x32xf32, #tpu.memory_space<vmem>>, vector<32x32xf32>
    %cst_154 = arith.constant dense<0.000000e+00> : vector<8x32xf32>
    %348 = tpu.matmul %346, %347, %cst_154 {dimension_numbers = #tpu.dot_dimension_numbers<[1], [0], [0], [1], [0, 0, 1, 1], [], []>} : vector<8x32xf32>, vector<32x32xf32>, vector<8x32xf32> -> vector<8x32xf32>
    %c0_155 = arith.constant 0 : index
    %c0_156 = arith.constant 0 : index
    %349 = vector.load %arg23[%c0_155, %c0_156] : memref<1x32xf32, #tpu.memory_space<vmem>>, vector<1x32xf32>
    %350 = vector.broadcast %349 : vector<1x32xf32> to vector<8x32xf32>
    %351 = arith.addf %348, %350 : vector<8x32xf32>
    %cst_157 = arith.constant 0.000000e+00 : f32
    %352 = vector.broadcast %cst_157 : f32 to vector<8x32xf32>
    %353 = arith.maximumf %351, %352 : vector<8x32xf32>
    %c0_158 = arith.constant 0 : index
    %c0_159 = arith.constant 0 : index
    %354 = vector.load %arg24[%c0_158, %c0_159] : memref<32x16xf32, #tpu.memory_space<vmem>>, vector<32x16xf32>
    %cst_160 = arith.constant dense<0.000000e+00> : vector<8x16xf32>
    %355 = tpu.matmul %353, %354, %cst_160 {dimension_numbers = #tpu.dot_dimension_numbers<[1], [0], [0], [1], [0, 0, 1, 1], [], []>} : vector<8x32xf32>, vector<32x16xf32>, vector<8x16xf32> -> vector<8x16xf32>
    %c0_161 = arith.constant 0 : index
    %c0_162 = arith.constant 0 : index
    %356 = vector.load %arg25[%c0_161, %c0_162] : memref<1x16xf32, #tpu.memory_space<vmem>>, vector<1x16xf32>
    %357 = vector.broadcast %356 : vector<1x16xf32> to vector<8x16xf32>
    %358 = arith.addf %355, %357 : vector<8x16xf32>
    %cst_163 = arith.constant 0.000000e+00 : f32
    %359 = vector.broadcast %cst_163 : f32 to vector<8x16xf32>
    %360 = arith.maximumf %358, %359 : vector<8x16xf32>
    %c0_164 = arith.constant 0 : index
    %c0_165 = arith.constant 0 : index
    %361 = vector.load %arg26[%c0_164, %c0_165] : memref<16x4xf32, #tpu.memory_space<vmem>>, vector<16x4xf32>
    %cst_166 = arith.constant dense<0.000000e+00> : vector<8x4xf32>
    %362 = tpu.matmul %360, %361, %cst_166 {dimension_numbers = #tpu.dot_dimension_numbers<[1], [0], [0], [1], [0, 0, 1, 1], [], []>} : vector<8x16xf32>, vector<16x4xf32>, vector<8x4xf32> -> vector<8x4xf32>
    %c0_167 = arith.constant 0 : index
    %c0_168 = arith.constant 0 : index
    %363 = vector.load %arg27[%c0_167, %c0_168] : memref<1x4xf32, #tpu.memory_space<vmem>>, vector<1x4xf32>
    %364 = vector.broadcast %363 : vector<1x4xf32> to vector<8x4xf32>
    %365 = arith.addf %362, %364 : vector<8x4xf32>
    %cst_169 = arith.constant dense<0xFF800000> : vector<8xf32>
    %366 = vector.multi_reduction <maximumf>, %365, %cst_169 [1] : vector<8x4xf32> to vector<8xf32>
    %367 = vector.shape_cast %366 : vector<8xf32> to vector<8x1xf32>
    %368 = vector.broadcast %367 : vector<8x1xf32> to vector<8x4xf32>
    %369 = arith.subf %365, %368 : vector<8x4xf32>
    %370 = math.exp %369 : vector<8x4xf32>
    %cst_170 = arith.constant dense<0.000000e+00> : vector<8xf32>
    %371 = vector.multi_reduction <add>, %370, %cst_170 [1] : vector<8x4xf32> to vector<8xf32>
    %372 = vector.shape_cast %371 : vector<8xf32> to vector<8x1xf32>
    %373 = math.log %372 : vector<8x1xf32>
    %374 = arith.addf %373, %367 : vector<8x1xf32>
    %375 = vector.broadcast %374 : vector<8x1xf32> to vector<8x4xf32>
    %376 = arith.subf %365, %375 : vector<8x4xf32>
    %c0_171 = arith.constant 0 : index
    %c0_172 = arith.constant 0 : index
    %c0_173 = arith.constant 0 : index
    %377 = vector.load %arg28[%c0_171, %c0_172, %c0_173] : memref<1x8x4xf32, #tpu.memory_space<vmem>>, vector<1x8x4xf32>
    %378 = vector.shape_cast %377 : vector<1x8x4xf32> to vector<8x4xf32>
    %379 = vector.shape_cast %376 : vector<8x4xf32> to vector<1x8x4xf32>
    tpu.vector_store %arg28[%c0_171, %c0_172, %c0_173], %379 {strides = array<i32>} : memref<1x8x4xf32, #tpu.memory_space<vmem>>, vector<1x8x4xf32>,
    return
  }
  func.func @transform_0(%arg0: i32) -> (i32, i32, i32) {
    %c0_i32 = arith.constant 0 : i32
    %c0_i32_0 = arith.constant 0 : i32
    %c0_i32_1 = arith.constant 0 : i32
    return %arg0, %c0_i32, %c0_i32_0 : i32, i32, i32
  }
  func.func @transform_1(%arg0: i32) -> (i32, i32, i32) {
    %c0_i32 = arith.constant 0 : i32
    %c0_i32_0 = arith.constant 0 : i32
    %c0_i32_1 = arith.constant 0 : i32
    return %arg0, %c0_i32, %c0_i32_0 : i32, i32, i32
  }
  func.func @transform_2(%arg0: i32) -> (i32, i32) {
    %c0_i32 = arith.constant 0 : i32
    %c0_i32_0 = arith.constant 0 : i32
    %c0_i32_1 = arith.constant 0 : i32
    return %c0_i32, %c0_i32_0 : i32, i32
  }
  func.func @transform_3(%arg0: i32) -> (i32, i32) {
    %c0_i32 = arith.constant 0 : i32
    %c0_i32_0 = arith.constant 0 : i32
    %c0_i32_1 = arith.constant 0 : i32
    return %c0_i32, %c0_i32_0 : i32, i32
  }
  func.func @transform_4(%arg0: i32) -> (i32, i32) {
    %c0_i32 = arith.constant 0 : i32
    %c0_i32_0 = arith.constant 0 : i32
    %c0_i32_1 = arith.constant 0 : i32
    return %c0_i32, %c0_i32_0 : i32, i32
  }
  func.func @transform_5(%arg0: i32) -> (i32, i32) {
    %c0_i32 = arith.constant 0 : i32
    %c0_i32_0 = arith.constant 0 : i32
    %c0_i32_1 = arith.constant 0 : i32
    return %c0_i32, %c0_i32_0 : i32, i32
  }
  func.func @transform_6(%arg0: i32) -> (i32, i32) {
    %c0_i32 = arith.constant 0 : i32
    %c0_i32_0 = arith.constant 0 : i32
    %c0_i32_1 = arith.constant 0 : i32
    return %c0_i32, %c0_i32_0 : i32, i32
  }
  func.func @transform_7(%arg0: i32) -> (i32, i32) {
    %c0_i32 = arith.constant 0 : i32
    %c0_i32_0 = arith.constant 0 : i32
    %c0_i32_1 = arith.constant 0 : i32
    return %c0_i32, %c0_i32_0 : i32, i32
  }
  func.func @transform_8(%arg0: i32) -> (i32, i32) {
    %c0_i32 = arith.constant 0 : i32
    %c0_i32_0 = arith.constant 0 : i32
    %c0_i32_1 = arith.constant 0 : i32
    return %c0_i32, %c0_i32_0 : i32, i32
  }
  func.func @transform_9(%arg0: i32) -> (i32, i32) {
    %c0_i32 = arith.constant 0 : i32
    %c0_i32_0 = arith.constant 0 : i32
    %c0_i32_1 = arith.constant 0 : i32
    return %c0_i32, %c0_i32_0 : i32, i32
  }
  func.func @transform_10(%arg0: i32) -> (i32, i32) {
    %c0_i32 = arith.constant 0 : i32
    %c0_i32_0 = arith.constant 0 : i32
    %c0_i32_1 = arith.constant 0 : i32
    return %c0_i32, %c0_i32_0 : i32, i32
  }
  func.func @transform_11(%arg0: i32) -> (i32, i32) {
    %c0_i32 = arith.constant 0 : i32
    %c0_i32_0 = arith.constant 0 : i32
    %c0_i32_1 = arith.constant 0 : i32
    return %c0_i32, %c0_i32_0 : i32, i32
  }
  func.func @transform_12(%arg0: i32) -> (i32, i32) {
    %c0_i32 = arith.constant 0 : i32
    %c0_i32_0 = arith.constant 0 : i32
    %c0_i32_1 = arith.constant 0 : i32
    return %c0_i32, %c0_i32_0 : i32, i32
  }
  func.func @transform_13(%arg0: i32) -> (i32, i32) {
    %c0_i32 = arith.constant 0 : i32
    %c0_i32_0 = arith.constant 0 : i32
    %c0_i32_1 = arith.constant 0 : i32
    return %c0_i32, %c0_i32_0 : i32, i32
  }
  func.func @transform_14(%arg0: i32) -> (i32, i32) {
    %c0_i32 = arith.constant 0 : i32
    %c0_i32_0 = arith.constant 0 : i32
    %c0_i32_1 = arith.constant 0 : i32
    return %c0_i32, %c0_i32_0 : i32, i32
  }
  func.func @transform_15(%arg0: i32) -> (i32, i32) {
    %c0_i32 = arith.constant 0 : i32
    %c0_i32_0 = arith.constant 0 : i32
    %c0_i32_1 = arith.constant 0 : i32
    return %c0_i32, %c0_i32_0 : i32, i32
  }
  func.func @transform_16(%arg0: i32) -> (i32, i32) {
    %c0_i32 = arith.constant 0 : i32
    %c0_i32_0 = arith.constant 0 : i32
    %c0_i32_1 = arith.constant 0 : i32
    return %c0_i32, %c0_i32_0 : i32, i32
  }
  func.func @transform_17(%arg0: i32) -> (i32, i32) {
    %c0_i32 = arith.constant 0 : i32
    %c0_i32_0 = arith.constant 0 : i32
    %c0_i32_1 = arith.constant 0 : i32
    return %c0_i32, %c0_i32_0 : i32, i32
  }
  func.func @transform_18(%arg0: i32) -> (i32, i32) {
    %c0_i32 = arith.constant 0 : i32
    %c0_i32_0 = arith.constant 0 : i32
    %c0_i32_1 = arith.constant 0 : i32
    return %c0_i32, %c0_i32_0 : i32, i32
  }
  func.func @transform_19(%arg0: i32) -> (i32, i32) {
    %c0_i32 = arith.constant 0 : i32
    %c0_i32_0 = arith.constant 0 : i32
    %c0_i32_1 = arith.constant 0 : i32
    return %c0_i32, %c0_i32_0 : i32, i32
  }
  func.func @transform_20(%arg0: i32) -> (i32, i32) {
    %c0_i32 = arith.constant 0 : i32
    %c0_i32_0 = arith.constant 0 : i32
    %c0_i32_1 = arith.constant 0 : i32
    return %c0_i32, %c0_i32_0 : i32, i32
  }
  func.func @transform_21(%arg0: i32) -> (i32, i32) {
    %c0_i32 = arith.constant 0 : i32
    %c0_i32_0 = arith.constant 0 : i32
    %c0_i32_1 = arith.constant 0 : i32
    return %c0_i32, %c0_i32_0 : i32, i32
  }
  func.func @transform_22(%arg0: i32) -> (i32, i32) {
    %c0_i32 = arith.constant 0 : i32
    %c0_i32_0 = arith.constant 0 : i32
    %c0_i32_1 = arith.constant 0 : i32
    return %c0_i32, %c0_i32_0 : i32, i32
  }
  func.func @transform_23(%arg0: i32) -> (i32, i32) {
    %c0_i32 = arith.constant 0 : i32
    %c0_i32_0 = arith.constant 0 : i32
    %c0_i32_1 = arith.constant 0 : i32
    return %c0_i32, %c0_i32_0 : i32, i32
  }
  func.func @transform_24(%arg0: i32) -> (i32, i32) {
    %c0_i32 = arith.constant 0 : i32
    %c0_i32_0 = arith.constant 0 : i32
    %c0_i32_1 = arith.constant 0 : i32
    return %c0_i32, %c0_i32_0 : i32, i32
  }
  func.func @transform_25(%arg0: i32) -> (i32, i32) {
    %c0_i32 = arith.constant 0 : i32
    %c0_i32_0 = arith.constant 0 : i32
    %c0_i32_1 = arith.constant 0 : i32
    return %c0_i32, %c0_i32_0 : i32, i32
  }
  func.func @transform_26(%arg0: i32) -> (i32, i32) {
    %c0_i32 = arith.constant 0 : i32
    %c0_i32_0 = arith.constant 0 : i32
    %c0_i32_1 = arith.constant 0 : i32
    return %c0_i32, %c0_i32_0 : i32, i32
  }
  func.func @transform_27(%arg0: i32) -> (i32, i32, i32) {
    %c0_i32 = arith.constant 0 : i32
    %c0_i32_0 = arith.constant 0 : i32
    %c0_i32_1 = arith.constant 0 : i32
    return %arg0, %c0_i32, %c0_i32_0 : i32, i32, i32
  }
}

</mosaic_0001>

<llo_original>
// kernel: dgcnn_forward.1
$region0: #{dgcnn_forward.1}
  #allocation0 [shape = 'u32[]', space=smem, size = 0x4, offset = 0x4, fixed_abs, tag = 'smem constant byte address 0x4 - core index']
  #allocation1 [shape = 'u32[144,128]{1,0:T(1,128)}', space=vmem, size = 0x12000, scoped, tag = 'internal scratch']
  %s0 = inlined_call_operand.vmem [shape: f32[2,8,1], index: 0, kind: input, shape index: {}]
  %s1 = inlined_call_operand.vmem [shape: f32[2,1,8], index: 1, kind: input, shape index: {}]
  %s2 = inlined_call_operand.vmem [shape: f32[1,16], index: 2, kind: input, shape index: {}]
  %s3 = inlined_call_operand.vmem [shape: f32[1,16], index: 3, kind: input, shape index: {}]
  %s4 = inlined_call_operand.vmem [shape: f32[1,16], index: 4, kind: input, shape index: {}]
  %s5 = inlined_call_operand.vmem [shape: f32[16,16], index: 5, kind: input, shape index: {}]
  %s6 = inlined_call_operand.vmem [shape: f32[1,16], index: 6, kind: input, shape index: {}]
  %s7 = inlined_call_operand.vmem [shape: f32[16,16], index: 7, kind: input, shape index: {}]
  %s8 = inlined_call_operand.vmem [shape: f32[16,16], index: 8, kind: input, shape index: {}]
  %s9 = inlined_call_operand.vmem [shape: f32[1,16], index: 9, kind: input, shape index: {}]
  %s10 = inlined_call_operand.vmem [shape: f32[16,16], index: 10, kind: input, shape index: {}]
  %s11 = inlined_call_operand.vmem [shape: f32[1,16], index: 11, kind: input, shape index: {}]
  %s12 = inlined_call_operand.vmem [shape: f32[16,32], index: 12, kind: input, shape index: {}]
  %s13 = inlined_call_operand.vmem [shape: f32[16,32], index: 13, kind: input, shape index: {}]
  %s14 = inlined_call_operand.vmem [shape: f32[1,32], index: 14, kind: input, shape index: {}]
  %s15 = inlined_call_operand.vmem [shape: f32[32,32], index: 15, kind: input, shape index: {}]
  %s16 = inlined_call_operand.vmem [shape: f32[1,32], index: 16, kind: input, shape index: {}]
  %s17 = inlined_call_operand.vmem [shape: f32[16,32], index: 17, kind: input, shape index: {}]
  %s18 = inlined_call_operand.vmem [shape: f32[16,32], index: 18, kind: input, shape index: {}]
  %s19 = inlined_call_operand.vmem [shape: f32[32,32], index: 19, kind: input, shape index: {}]
  %s20 = inlined_call_operand.vmem [shape: f32[1,32], index: 20, kind: input, shape index: {}]
  %s21 = inlined_call_operand.vmem [shape: f32[32,32], index: 21, kind: input, shape index: {}]
  %s22 = inlined_call_operand.vmem [shape: f32[1,32], index: 22, kind: input, shape index: {}]
  %s23 = inlined_call_operand.vmem [shape: f32[32,16], index: 23, kind: input, shape index: {}]
  %s24 = inlined_call_operand.vmem [shape: f32[1,16], index: 24, kind: input, shape index: {}]
  %s25 = inlined_call_operand.vmem [shape: f32[16,4], index: 25, kind: input, shape index: {}]
  %s26 = inlined_call_operand.vmem [shape: f32[1,4], index: 26, kind: input, shape index: {}]
  %s27 = inlined_call_operand.vmem [shape: f32[2,8,4], index: 27, kind: output, shape index: {}]
  %s28 = sld [smem:[#allocation0]]
  $region141: #{dgcnn_forward.1} parent=0
    _
  %s30 = ssub.s32 1, %s28
  %s31 = scalar_select 0, %s30, %s28
  loop: start=0, step=1, limit=4
  $region2: #{dgcnn_forward.1} parent=0 // loop_pre_header
    _
  $region3: #{dgcnn_forward.1} parent=0 // loop_header
    %s33 = sphi 0, %s37
    %p34 = scmp.ge.s32.totalorder %s33, 4
    %s43 = sphi 0, %s45
    %s46 = sphi 0, %s43
    %s47 = sphi 0, %s46
    %s63 = sphi 0, %s47
    %s69 = sphi 0, %s71
    %s72 = sphi 0, %s69
    %s73 = sphi 0, %s72
    %s89 = sphi 0, %s73
    %s93 = sphi 0, %s93
    %s95 = sphi 0, %s93
    %s96 = sphi 0, %s95
    %s110 = sphi 0, %s96
    %s114 = sphi 0, %s114
    %s116 = sphi 0, %s114
    %s117 = sphi 0, %s116
    %s131 = sphi 0, %s117
    %s135 = sphi 0, %s135
    %s137 = sphi 0, %s135
    %s138 = sphi 0, %s137
    %s152 = sphi 0, %s138
    %s156 = sphi 0, %s156
    %s158 = sphi 0, %s156
    %s159 = sphi 0, %s158
    %s173 = sphi 0, %s159
    %s177 = sphi 0, %s177
    %s179 = sphi 0, %s177
    %s180 = sphi 0, %s179
    %s194 = sphi 0, %s180
    %s198 = sphi 0, %s198
    %s200 = sphi 0, %s198
    %s201 = sphi 0, %s200
    %s215 = sphi 0, %s201
    %s219 = sphi 0, %s219
    %s221 = sphi 0, %s219
    %s222 = sphi 0, %s221
    %s236 = sphi 0, %s222
    %s240 = sphi 0, %s240
    %s242 = sphi 0, %s240
    %s243 = sphi 0, %s242
    %s257 = sphi 0, %s243
    %s261 = sphi 0, %s261
    %s263 = sphi 0, %s261
    %s264 = sphi 0, %s263
    %s278 = sphi 0, %s264
    %s282 = sphi 0, %s282
    %s284 = sphi 0, %s282
    %s285 = sphi 0, %s284
    %s299 = sphi 0, %s285
    %s303 = sphi 0, %s303
    %s305 = sphi 0, %s303
    %s306 = sphi 0, %s305
    %s320 = sphi 0, %s306
    %s324 = sphi 0, %s324
    %s326 = sphi 0, %s324
    %s327 = sphi 0, %s326
    %s341 = sphi 0, %s327
    %s345 = sphi 0, %s345
    %s347 = sphi 0, %s345
    %s348 = sphi 0, %s347
    %s362 = sphi 0, %s348
    %s366 = sphi 0, %s366
    %s368 = sphi 0, %s366
    %s369 = sphi 0, %s368
    %s383 = sphi 0, %s369
    %s387 = sphi 0, %s387
    %s389 = sphi 0, %s387
    %s390 = sphi 0, %s389
    %s404 = sphi 0, %s390
    %s408 = sphi 0, %s408
    %s410 = sphi 0, %s408
    %s411 = sphi 0, %s410
    %s425 = sphi 0, %s411
    %s429 = sphi 0, %s429
    %s431 = sphi 0, %s429
    %s432 = sphi 0, %s431
    %s446 = sphi 0, %s432
    %s450 = sphi 0, %s450
    %s452 = sphi 0, %s450
    %s453 = sphi 0, %s452
    %s467 = sphi 0, %s453
    %s471 = sphi 0, %s471
    %s473 = sphi 0, %s471
    %s474 = sphi 0, %s473
    %s488 = sphi 0, %s474
    %s492 = sphi 0, %s492
    %s494 = sphi 0, %s492
    %s495 = sphi 0, %s494
    %s509 = sphi 0, %s495
    %s513 = sphi 0, %s513
    %s515 = sphi 0, %s513
    %s516 = sphi 0, %s515
    %s530 = sphi 0, %s516
    %s534 = sphi 0, %s534
    %s536 = sphi 0, %s534
    %s537 = sphi 0, %s536
    %s551 = sphi 0, %s537
    %s555 = sphi 0, %s555
    %s557 = sphi 0, %s555
    %s558 = sphi 0, %s557
    %s572 = sphi 0, %s558
    %s576 = sphi 0, %s576
    %s578 = sphi 0, %s576
    %s579 = sphi 0, %s578
    %s593 = sphi 0, %s579
    %s597 = sphi 0, %s597
    %s599 = sphi 0, %s597
    %s600 = sphi 0, %s599
    %s614 = sphi 0, %s600
    %s620 = sphi 0, %s622
    %s623 = sphi 0, %s620
    %s624 = sphi 0, %s623
    %s640 = sphi 0, %s624
  $region4: #{dgcnn_forward.1} parent=0 // loop_header_branch
    %36 = sbr.rel (%p34) target = $region8
  $region5: #{dgcnn_forward.1} parent=0 // loop_body
    %s38 = ssub.s32 %s33, 1
    %s39 = ssub.s32 %s33, 2
    %s40 = sadd.s32 %s33, 1
    %s41 = ssub.s32 %s33, %s40
    %p42 = scmp.eq.s32.totalorder %s41, 0
    %s44 = sadd.s32 %s43, 1
    %s45 = scalar_select %p42, %s43, %s44
    %p48 = pneg %p42
    %p49 = scmp.eq.s32.totalorder %s33, 1
    %p50 = por %p48, %p49
    %p51 = scmp.ne.s32.totalorder %s43, %s46
    %p52 = scmp.eq.s32.totalorder %s33, 0
    %p53 = por %p51, %p52
    %p54 = scmp.ne.s32.totalorder %s43, %s46
    %p55 = scmp.eq.s32.totalorder %s38, 1
    %p56 = por %p54, %p55
    %p57 = scmp.ne.s32.totalorder %s46, %s47
    %p58 = scmp.eq.s32.totalorder %s38, 0
    %p59 = por %p57, %p58
    %p60 = scmp.ne.s32.totalorder %s46, %s47
    %p61 = scmp.eq.s32.totalorder %s39, 1
    %p62 = por %p60, %p61
    %p64 = scmp.ne.s32.totalorder %s47, %s63
    %p65 = scmp.eq.s32.totalorder %s39, 0
    %p66 = por %p64, %p65
    %s67 = ssub.s32 %s33, %s40
    %p68 = scmp.eq.s32.totalorder %s67, 0
    %s70 = sadd.s32 %s69, 1
    %s71 = scalar_select %p68, %s69, %s70
    %p74 = pneg %p68
    %p75 = scmp.eq.s32.totalorder %s33, 1
    %p76 = por %p74, %p75
    %p77 = scmp.ne.s32.totalorder %s69, %s72
    %p78 = scmp.eq.s32.totalorder %s33, 0
    %p79 = por %p77, %p78
    %p80 = scmp.ne.s32.totalorder %s69, %s72
    %p81 = scmp.eq.s32.totalorder %s38, 1
    %p82 = por %p80, %p81
    %p83 = scmp.ne.s32.totalorder %s72, %s73
    %p84 = scmp.eq.s32.totalorder %s38, 0
    %p85 = por %p83, %p84
    %p86 = scmp.ne.s32.totalorder %s72, %s73
    %p87 = scmp.eq.s32.totalorder %s39, 1
    %p88 = por %p86, %p87
    %p90 = scmp.ne.s32.totalorder %s73, %s89
    %p91 = scmp.eq.s32.totalorder %s39, 0
    %p92 = por %p90, %p91
    %s94 = sadd.s32 %s93, 1
    %p97 = scmp.eq.s32.totalorder %s33, 1
    %p98 = scmp.ne.s32.totalorder %s93, %s95
    %p99 = scmp.eq.s32.totalorder %s33, 0
    %p100 = por %p98, %p99
    %p101 = scmp.ne.s32.totalorder %s93, %s95
    %p102 = scmp.eq.s32.totalorder %s38, 1
    %p103 = por %p101, %p102
    %p104 = scmp.ne.s32.totalorder %s95, %s96
    %p105 = scmp.eq.s32.totalorder %s38, 0
    %p106 = por %p104, %p105
    %p107 = scmp.ne.s32.totalorder %s95, %s96
    %p108 = scmp.eq.s32.totalorder %s39, 1
    %p109 = por %p107, %p108
    %p111 = scmp.ne.s32.totalorder %s96, %s110
    %p112 = scmp.eq.s32.totalorder %s39, 0
    %p113 = por %p111, %p112
    %s115 = sadd.s32 %s114, 1
    %p118 = scmp.eq.s32.totalorder %s33, 1
    %p119 = scmp.ne.s32.totalorder %s114, %s116
    %p120 = scmp.eq.s32.totalorder %s33, 0
    %p121 = por %p119, %p120
    %p122 = scmp.ne.s32.totalorder %s114, %s116
    %p123 = scmp.eq.s32.totalorder %s38, 1
    %p124 = por %p122, %p123
    %p125 = scmp.ne.s32.totalorder %s116, %s117
    %p126 = scmp.eq.s32.totalorder %s38, 0
    %p127 = por %p125, %p126
    %p128 = scmp.ne.s32.totalorder %s116, %s117
    %p129 = scmp.eq.s32.totalorder %s39, 1
    %p130 = por %p128, %p129
    %p132 = scmp.ne.s32.totalorder %s117, %s131
    %p133 = scmp.eq.s32.totalorder %s39, 0
    %p134 = por %p132, %p133
    %s136 = sadd.s32 %s135, 1
    %p139 = scmp.eq.s32.totalorder %s33, 1
    %p140 = scmp.ne.s32.totalorder %s135, %s137
    %p141 = scmp.eq.s32.totalorder %s33, 0
    %p142 = por %p140, %p141
    %p143 = scmp.ne.s32.totalorder %s135, %s137
    %p144 = scmp.eq.s32.totalorder %s38, 1
    %p145 = por %p143, %p144
    %p146 = scmp.ne.s32.totalorder %s137, %s138
    %p147 = scmp.eq.s32.totalorder %s38, 0
    %p148 = por %p146, %p147
    %p149 = scmp.ne.s32.totalorder %s137, %s138
    %p150 = scmp.eq.s32.totalorder %s39, 1
    %p151 = por %p149, %p150
    %p153 = scmp.ne.s32.totalorder %s138, %s152
    %p154 = scmp.eq.s32.totalorder %s39, 0
    %p155 = por %p153, %p154
    %s157 = sadd.s32 %s156, 1
    %p160 = scmp.eq.s32.totalorder %s33, 1
    %p161 = scmp.ne.s32.totalorder %s156, %s158
    %p162 = scmp.eq.s32.totalorder %s33, 0
    %p163 = por %p161, %p162
    %p164 = scmp.ne.s32.totalorder %s156, %s158
    %p165 = scmp.eq.s32.totalorder %s38, 1
    %p166 = por %p164, %p165
    %p167 = scmp.ne.s32.totalorder %s158, %s159
    %p168 = scmp.eq.s32.totalorder %s38, 0
    %p169 = por %p167, %p168
    %p170 = scmp.ne.s32.totalorder %s158, %s159
    %p171 = scmp.eq.s32.totalorder %s39, 1
    %p172 = por %p170, %p171
    %p174 = scmp.ne.s32.totalorder %s159, %s173
    %p175 = scmp.eq.s32.totalorder %s39, 0
    %p176 = por %p174, %p175
    %s178 = sadd.s32 %s177, 1
    %p181 = scmp.eq.s32.totalorder %s33, 1
    %p182 = scmp.ne.s32.totalorder %s177, %s179
    %p183 = scmp.eq.s32.totalorder %s33, 0
    %p184 = por %p182, %p183
    %p185 = scmp.ne.s32.totalorder %s177, %s179
    %p186 = scmp.eq.s32.totalorder %s38, 1
    %p187 = por %p185, %p186
    %p188 = scmp.ne.s32.totalorder %s179, %s180
    %p189 = scmp.eq.s32.totalorder %s38, 0
    %p190 = por %p188, %p189
    %p191 = scmp.ne.s32.totalorder %s179, %s180
    %p192 = scmp.eq.s32.totalorder %s39, 1
    %p193 = por %p191, %p192
    %p195 = scmp.ne.s32.totalorder %s180, %s194
    %p196 = scmp.eq.s32.totalorder %s39, 0
    %p197 = por %p195, %p196
    %s199 = sadd.s32 %s198, 1
    %p202 = scmp.eq.s32.totalorder %s33, 1
    %p203 = scmp.ne.s32.totalorder %s198, %s200
    %p204 = scmp.eq.s32.totalorder %s33, 0
    %p205 = por %p203, %p204
    %p206 = scmp.ne.s32.totalorder %s198, %s200
    %p207 = scmp.eq.s32.totalorder %s38, 1
    %p208 = por %p206, %p207
    %p209 = scmp.ne.s32.totalorder %s200, %s201
    %p210 = scmp.eq.s32.totalorder %s38, 0
    %p211 = por %p209, %p210
    %p212 = scmp.ne.s32.totalorder %s200, %s201
    %p213 = scmp.eq.s32.totalorder %s39, 1
    %p214 = por %p212, %p213
    %p216 = scmp.ne.s32.totalorder %s201, %s215
    %p217 = scmp.eq.s32.totalorder %s39, 0
    %p218 = por %p216, %p217
    %s220 = sadd.s32 %s219, 1
    %p223 = scmp.eq.s32.totalorder %s33, 1
    %p224 = scmp.ne.s32.totalorder %s219, %s221
    %p225 = scmp.eq.s32.totalorder %s33, 0
    %p226 = por %p224, %p225
    %p227 = scmp.ne.s32.totalorder %s219, %s221
    %p228 = scmp.eq.s32.totalorder %s38, 1
    %p229 = por %p227, %p228
    %p230 = scmp.ne.s32.totalorder %s221, %s222
    %p231 = scmp.eq.s32.totalorder %s38, 0
    %p232 = por %p230, %p231
    %p233 = scmp.ne.s32.totalorder %s221, %s222
    %p234 = scmp.eq.s32.totalorder %s39, 1
    %p235 = por %p233, %p234
    %p237 = scmp.ne.s32.totalorder %s222, %s236
    %p238 = scmp.eq.s32.totalorder %s39, 0
    %p239 = por %p237, %p238
    %s241 = sadd.s32 %s240, 1
    %p244 = scmp.eq.s32.totalorder %s33, 1
    %p245 = scmp.ne.s32.totalorder %s240, %s242
    %p246 = scmp.eq.s32.totalorder %s33, 0
    %p247 = por %p245, %p246
    %p248 = scmp.ne.s32.totalorder %s240, %s242
    %p249 = scmp.eq.s32.totalorder %s38, 1
    %p250 = por %p248, %p249
    %p251 = scmp.ne.s32.totalorder %s242, %s243
    %p252 = scmp.eq.s32.totalorder %s38, 0
    %p253 = por %p251, %p252
    %p254 = scmp.ne.s32.totalorder %s242, %s243
    %p255 = scmp.eq.s32.totalorder %s39, 1
    %p256 = por %p254, %p255
    %p258 = scmp.ne.s32.totalorder %s243, %s257
    %p259 = scmp.eq.s32.totalorder %s39, 0
    %p260 = por %p258, %p259
    %s262 = sadd.s32 %s261, 1
    %p265 = scmp.eq.s32.totalorder %s33, 1
    %p266 = scmp.ne.s32.totalorder %s261, %s263
    %p267 = scmp.eq.s32.totalorder %s33, 0
    %p268 = por %p266, %p267
    %p269 = scmp.ne.s32.totalorder %s261, %s263
    %p270 = scmp.eq.s32.totalorder %s38, 1
    %p271 = por %p269, %p270
    %p272 = scmp.ne.s32.totalorder %s263, %s264
    %p273 = scmp.eq.s32.totalorder %s38, 0
    %p274 = por %p272, %p273
    %p275 = scmp.ne.s32.totalorder %s263, %s264
    %p276 = scmp.eq.s32.totalorder %s39, 1
    %p277 = por %p275, %p276
    %p279 = scmp.ne.s32.totalorder %s264, %s278
    %p280 = scmp.eq.s32.totalorder %s39, 0
    %p281 = por %p279, %p280
    %s283 = sadd.s32 %s282, 1
    %p286 = scmp.eq.s32.totalorder %s33, 1
    %p287 = scmp.ne.s32.totalorder %s282, %s284
    %p288 = scmp.eq.s32.totalorder %s33, 0
    %p289 = por %p287, %p288
    %p290 = scmp.ne.s32.totalorder %s282, %s284
    %p291 = scmp.eq.s32.totalorder %s38, 1
    %p292 = por %p290, %p291
    %p293 = scmp.ne.s32.totalorder %s284, %s285
    %p294 = scmp.eq.s32.totalorder %s38, 0
    %p295 = por %p293, %p294
    %p296 = scmp.ne.s32.totalorder %s284, %s285
    %p297 = scmp.eq.s32.totalorder %s39, 1
    %p298 = por %p296, %p297
    %p300 = scmp.ne.s32.totalorder %s285, %s299
    %p301 = scmp.eq.s32.totalorder %s39, 0
    %p302 = por %p300, %p301
    %s304 = sadd.s32 %s303, 1
    %p307 = scmp.eq.s32.totalorder %s33, 1
    %p308 = scmp.ne.s32.totalorder %s303, %s305
    %p309 = scmp.eq.s32.totalorder %s33, 0
    %p310 = por %p308, %p309
    %p311 = scmp.ne.s32.totalorder %s303, %s305
    %p312 = scmp.eq.s32.totalorder %s38, 1
    %p313 = por %p311, %p312
    %p314 = scmp.ne.s32.totalorder %s305, %s306
    %p315 = scmp.eq.s32.totalorder %s38, 0
    %p316 = por %p314, %p315
    %p317 = scmp.ne.s32.totalorder %s305, %s306
    %p318 = scmp.eq.s32.totalorder %s39, 1
    %p319 = por %p317, %p318
    %p321 = scmp.ne.s32.totalorder %s306, %s320
    %p322 = scmp.eq.s32.totalorder %s39, 0
    %p323 = por %p321, %p322
    %s325 = sadd.s32 %s324, 1
    %p328 = scmp.eq.s32.totalorder %s33, 1
    %p329 = scmp.ne.s32.totalorder %s324, %s326
    %p330 = scmp.eq.s32.totalorder %s33, 0
    %p331 = por %p329, %p330
    %p332 = scmp.ne.s32.totalorder %s324, %s326
    %p333 = scmp.eq.s32.totalorder %s38, 1
    %p334 = por %p332, %p333
    %p335 = scmp.ne.s32.totalorder %s326, %s327
    %p336 = scmp.eq.s32.totalorder %s38, 0
    %p337 = por %p335, %p336
    %p338 = scmp.ne.s32.totalorder %s326, %s327
    %p339 = scmp.eq.s32.totalorder %s39, 1
    %p340 = por %p338, %p339
    %p342 = scmp.ne.s32.totalorder %s327, %s341
    %p343 = scmp.eq.s32.totalorder %s39, 0
    %p344 = por %p342, %p343
    %s346 = sadd.s32 %s345, 1
    %p349 = scmp.eq.s32.totalorder %s33, 1
    %p350 = scmp.ne.s32.totalorder %s345, %s347
    %p351 = scmp.eq.s32.totalorder %s33, 0
    %p352 = por %p350, %p351
    %p353 = scmp.ne.s32.totalorder %s345, %s347
    %p354 = scmp.eq.s32.totalorder %s38, 1
    %p355 = por %p353, %p354
    %p356 = scmp.ne.s32.totalorder %s347, %s348
    %p357 = scmp.eq.s32.totalorder %s38, 0
    %p358 = por %p356, %p357
    %p359 = scmp.ne.s32.totalorder %s347, %s348
    %p360 = scmp.eq.s32.totalorder %s39, 1
    %p361 = por %p359, %p360
    %p363 = scmp.ne.s32.totalorder %s348, %s362
    %p364 = scmp.eq.s32.totalorder %s39, 0
    %p365 = por %p363, %p364
    %s367 = sadd.s32 %s366, 1
    %p370 = scmp.eq.s32.totalorder %s33, 1
    %p371 = scmp.ne.s32.totalorder %s366, %s368
    %p372 = scmp.eq.s32.totalorder %s33, 0
    %p373 = por %p371, %p372
    %p374 = scmp.ne.s32.totalorder %s366, %s368
    %p375 = scmp.eq.s32.totalorder %s38, 1
    %p376 = por %p374, %p375
    %p377 = scmp.ne.s32.totalorder %s368, %s369
    %p378 = scmp.eq.s32.totalorder %s38, 0
    %p379 = por %p377, %p378
    %p380 = scmp.ne.s32.totalorder %s368, %s369
    %p381 = scmp.eq.s32.totalorder %s39, 1
    %p382 = por %p380, %p381
    %p384 = scmp.ne.s32.totalorder %s369, %s383
    %p385 = scmp.eq.s32.totalorder %s39, 0
    %p386 = por %p384, %p385
    %s388 = sadd.s32 %s387, 1
    %p391 = scmp.eq.s32.totalorder %s33, 1
    %p392 = scmp.ne.s32.totalorder %s387, %s389
    %p393 = scmp.eq.s32.totalorder %s33, 0
    %p394 = por %p392, %p393
    %p395 = scmp.ne.s32.totalorder %s387, %s389
    %p396 = scmp.eq.s32.totalorder %s38, 1
    %p397 = por %p395, %p396
    %p398 = scmp.ne.s32.totalorder %s389, %s390
    %p399 = scmp.eq.s32.totalorder %s38, 0
    %p400 = por %p398, %p399
    %p401 = scmp.ne.s32.totalorder %s389, %s390
    %p402 = scmp.eq.s32.totalorder %s39, 1
    %p403 = por %p401, %p402
    %p405 = scmp.ne.s32.totalorder %s390, %s404
    %p406 = scmp.eq.s32.totalorder %s39, 0
    %p407 = por %p405, %p406
    %s409 = sadd.s32 %s408, 1
    %p412 = scmp.eq.s32.totalorder %s33, 1
    %p413 = scmp.ne.s32.totalorder %s408, %s410
    %p414 = scmp.eq.s32.totalorder %s33, 0
    %p415 = por %p413, %p414
    %p416 = scmp.ne.s32.totalorder %s408, %s410
    %p417 = scmp.eq.s32.totalorder %s38, 1
    %p418 = por %p416, %p417
    %p419 = scmp.ne.s32.totalorder %s410, %s411
    %p420 = scmp.eq.s32.totalorder %s38, 0
    %p421 = por %p419, %p420
    %p422 = scmp.ne.s32.totalorder %s410, %s411
    %p423 = scmp.eq.s32.totalorder %s39, 1
    %p424 = por %p422, %p423
    %p426 = scmp.ne.s32.totalorder %s411, %s425
    %p427 = scmp.eq.s32.totalorder %s39, 0
    %p428 = por %p426, %p427
    %s430 = sadd.s32 %s429, 1
    %p433 = scmp.eq.s32.totalorder %s33, 1
    %p434 = scmp.ne.s32.totalorder %s429, %s431
    %p435 = scmp.eq.s32.totalorder %s33, 0
    %p436 = por %p434, %p435
    %p437 = scmp.ne.s32.totalorder %s429, %s431
    %p438 = scmp.eq.s32.totalorder %s38, 1
    %p439 = por %p437, %p438
    %p440 = scmp.ne.s32.totalorder %s431, %s432
    %p441 = scmp.eq.s32.totalorder %s38, 0
    %p442 = por %p440, %p441
    %p443 = scmp.ne.s32.totalorder %s431, %s432
    %p444 = scmp.eq.s32.totalorder %s39, 1
    %p445 = por %p443, %p444
    %p447 = scmp.ne.s32.totalorder %s432, %s446
    %p448 = scmp.eq.s32.totalorder %s39, 0
    %p449 = por %p447, %p448
    %s451 = sadd.s32 %s450, 1
    %p454 = scmp.eq.s32.totalorder %s33, 1
    %p455 = scmp.ne.s32.totalorder %s450, %s452
    %p456 = scmp.eq.s32.totalorder %s33, 0
    %p457 = por %p455, %p456
    %p458 = scmp.ne.s32.totalorder %s450, %s452
    %p459 = scmp.eq.s32.totalorder %s38, 1
    %p460 = por %p458, %p459
    %p461 = scmp.ne.s32.totalorder %s452, %s453
    %p462 = scmp.eq.s32.totalorder %s38, 0
    %p463 = por %p461, %p462
    %p464 = scmp.ne.s32.totalorder %s452, %s453
    %p465 = scmp.eq.s32.totalorder %s39, 1
    %p466 = por %p464, %p465
    %p468 = scmp.ne.s32.totalorder %s453, %s467
    %p469 = scmp.eq.s32.totalorder %s39, 0
    %p470 = por %p468, %p469
    %s472 = sadd.s32 %s471, 1
    %p475 = scmp.eq.s32.totalorder %s33, 1
    %p476 = scmp.ne.s32.totalorder %s471, %s473
    %p477 = scmp.eq.s32.totalorder %s33, 0
    %p478 = por %p476, %p477
    %p479 = scmp.ne.s32.totalorder %s471, %s473
    %p480 = scmp.eq.s32.totalorder %s38, 1
    %p481 = por %p479, %p480
    %p482 = scmp.ne.s32.totalorder %s473, %s474
    %p483 = scmp.eq.s32.totalorder %s38, 0
    %p484 = por %p482, %p483
    %p485 = scmp.ne.s32.totalorder %s473, %s474
    %p486 = scmp.eq.s32.totalorder %s39, 1
    %p487 = por %p485, %p486
    %p489 = scmp.ne.s32.totalorder %s474, %s488
    %p490 = scmp.eq.s32.totalorder %s39, 0
    %p491 = por %p489, %p490
    %s493 = sadd.s32 %s492, 1
    %p496 = scmp.eq.s32.totalorder %s33, 1
    %p497 = scmp.ne.s32.totalorder %s492, %s494
    %p498 = scmp.eq.s32.totalorder %s33, 0
    %p499 = por %p497, %p498
    %p500 = scmp.ne.s32.totalorder %s492, %s494
    %p501 = scmp.eq.s32.totalorder %s38, 1
    %p502 = por %p500, %p501
    %p503 = scmp.ne.s32.totalorder %s494, %s495
    %p504 = scmp.eq.s32.totalorder %s38, 0
    %p505 = por %p503, %p504
    %p506 = scmp.ne.s32.totalorder %s494, %s495
    %p507 = scmp.eq.s32.totalorder %s39, 1
    %p508 = por %p506, %p507
    %p510 = scmp.ne.s32.totalorder %s495, %s509
    %p511 = scmp.eq.s32.totalorder %s39, 0
    %p512 = por %p510, %p511
    %s514 = sadd.s32 %s513, 1
    %p517 = scmp.eq.s32.totalorder %s33, 1
    %p518 = scmp.ne.s32.totalorder %s513, %s515
    %p519 = scmp.eq.s32.totalorder %s33, 0
    %p520 = por %p518, %p519
    %p521 = scmp.ne.s32.totalorder %s513, %s515
    %p522 = scmp.eq.s32.totalorder %s38, 1
    %p523 = por %p521, %p522
    %p524 = scmp.ne.s32.totalorder %s515, %s516
    %p525 = scmp.eq.s32.totalorder %s38, 0
    %p526 = por %p524, %p525
    %p527 = scmp.ne.s32.totalorder %s515, %s516
    %p528 = scmp.eq.s32.totalorder %s39, 1
    %p529 = por %p527, %p528
    %p531 = scmp.ne.s32.totalorder %s516, %s530
    %p532 = scmp.eq.s32.totalorder %s39, 0
    %p533 = por %p531, %p532
    %s535 = sadd.s32 %s534, 1
    %p538 = scmp.eq.s32.totalorder %s33, 1
    %p539 = scmp.ne.s32.totalorder %s534, %s536
    %p540 = scmp.eq.s32.totalorder %s33, 0
    %p541 = por %p539, %p540
    %p542 = scmp.ne.s32.totalorder %s534, %s536
    %p543 = scmp.eq.s32.totalorder %s38, 1
    %p544 = por %p542, %p543
    %p545 = scmp.ne.s32.totalorder %s536, %s537
    %p546 = scmp.eq.s32.totalorder %s38, 0
    %p547 = por %p545, %p546
    %p548 = scmp.ne.s32.totalorder %s536, %s537
    %p549 = scmp.eq.s32.totalorder %s39, 1
    %p550 = por %p548, %p549
    %p552 = scmp.ne.s32.totalorder %s537, %s551
    %p553 = scmp.eq.s32.totalorder %s39, 0
    %p554 = por %p552, %p553
    %s556 = sadd.s32 %s555, 1
    %p559 = scmp.eq.s32.totalorder %s33, 1
    %p560 = scmp.ne.s32.totalorder %s555, %s557
    %p561 = scmp.eq.s32.totalorder %s33, 0
    %p562 = por %p560, %p561
    %p563 = scmp.ne.s32.totalorder %s555, %s557
    %p564 = scmp.eq.s32.totalorder %s38, 1
    %p565 = por %p563, %p564
    %p566 = scmp.ne.s32.totalorder %s557, %s558
    %p567 = scmp.eq.s32.totalorder %s38, 0
    %p568 = por %p566, %p567
    %p569 = scmp.ne.s32.totalorder %s557, %s558
    %p570 = scmp.eq.s32.totalorder %s39, 1
    %p571 = por %p569, %p570
    %p573 = scmp.ne.s32.totalorder %s558, %s572
    %p574 = scmp.eq.s32.totalorder %s39, 0
    %p575 = por %p573, %p574
    %s577 = sadd.s32 %s576, 1
    %p580 = scmp.eq.s32.totalorder %s33, 1
    %p581 = scmp.ne.s32.totalorder %s576, %s578
    %p582 = scmp.eq.s32.totalorder %s33, 0
    %p583 = por %p581, %p582
    %p584 = scmp.ne.s32.totalorder %s576, %s578
    %p585 = scmp.eq.s32.totalorder %s38, 1
    %p586 = por %p584, %p585
    %p587 = scmp.ne.s32.totalorder %s578, %s579
    %p588 = scmp.eq.s32.totalorder %s38, 0
    %p589 = por %p587, %p588
    %p590 = scmp.ne.s32.totalorder %s578, %s579
    %p591 = scmp.eq.s32.totalorder %s39, 1
    %p592 = por %p590, %p591
    %p594 = scmp.ne.s32.totalorder %s579, %s593
    %p595 = scmp.eq.s32.totalorder %s39, 0
    %p596 = por %p594, %p595
    %s598 = sadd.s32 %s597, 1
    %p601 = scmp.eq.s32.totalorder %s33, 1
    %p602 = scmp.ne.s32.totalorder %s597, %s599
    %p603 = scmp.eq.s32.totalorder %s33, 0
    %p604 = por %p602, %p603
    %p605 = scmp.ne.s32.totalorder %s597, %s599
    %p606 = scmp.eq.s32.totalorder %s38, 1
    %p607 = por %p605, %p606
    %p608 = scmp.ne.s32.totalorder %s599, %s600
    %p609 = scmp.eq.s32.totalorder %s38, 0
    %p610 = por %p608, %p609
    %p611 = scmp.ne.s32.totalorder %s599, %s600
    %p612 = scmp.eq.s32.totalorder %s39, 1
    %p613 = por %p611, %p612
    %p615 = scmp.ne.s32.totalorder %s600, %s614
    %p616 = scmp.eq.s32.totalorder %s39, 0
    %p617 = por %p615, %p616
    %s618 = ssub.s32 %s33, %s40
    %p619 = scmp.eq.s32.totalorder %s618, 0
    %s621 = sadd.s32 %s620, 1
    %s622 = scalar_select %p619, %s620, %s621
    %p625 = pneg %p619
    %p626 = scmp.eq.s32.totalorder %s33, 1
    %p627 = por %p625, %p626
    %p628 = scmp.ne.s32.totalorder %s620, %s623
    %p629 = scmp.eq.s32.totalorder %s33, 0
    %p630 = por %p628, %p629
    %p631 = scmp.ne.s32.totalorder %s620, %s623
    %p632 = scmp.eq.s32.totalorder %s38, 1
    %p633 = por %p631, %p632
    %p634 = scmp.ne.s32.totalorder %s623, %s624
    %p635 = scmp.eq.s32.totalorder %s38, 0
    %p636 = por %p634, %p635
    %p637 = scmp.ne.s32.totalorder %s623, %s624
    %p638 = scmp.eq.s32.totalorder %s39, 1
    %p639 = por %p637, %p638
    %p641 = scmp.ne.s32.totalorder %s624, %s640
    %p642 = scmp.eq.s32.totalorder %s39, 0
    %p643 = por %p641, %p642
    %p644 = scmp.le.s32.totalorder 1, %s33
    %p645 = scmp.lt.s32.totalorder %s33, 3
    %p646 = pnand %p644, %p645
    %p647 = pneg %p646
    // Predicated region
    $region9: #{dgcnn_forward.1} parent=5 // pred_check
      _
    $region10: #{dgcnn_forward.1} parent=5 // pred_check_branch
      %649 = sbr.rel (%p646) target = $region12
    $region11: #{dgcnn_forward.1} parent=5 // pred_region
      %s650 = ssub.s32 %s33, 1
      // Predicated region
      $region13: #{dgcnn_forward.1} parent=11 // pred_check
        %p651 = pneg %p106
      $region14: #{dgcnn_forward.1} parent=11 // pred_check_branch
        %653 = sbr.rel (%p651) target = $region16
      $region15: #{dgcnn_forward.1} parent=11 // pred_region
        _
      $region16: #{dgcnn_forward.1} parent=11 // pred_fallthru
        _
      // Predicated region
      $region17: #{dgcnn_forward.1} parent=11 // pred_check
        %p654 = pneg %p127
      $region18: #{dgcnn_forward.1} parent=11 // pred_check_branch
        %656 = sbr.rel (%p654) target = $region20
      $region19: #{dgcnn_forward.1} parent=11 // pred_region
        _
      $region20: #{dgcnn_forward.1} parent=11 // pred_fallthru
        _
      // Predicated region
      $region21: #{dgcnn_forward.1} parent=11 // pred_check
        %p657 = pneg %p148
      $region22: #{dgcnn_forward.1} parent=11 // pred_check_branch
        %659 = sbr.rel (%p657) target = $region24
      $region23: #{dgcnn_forward.1} parent=11 // pred_region
        _
      $region24: #{dgcnn_forward.1} parent=11 // pred_fallthru
        _
      // Predicated region
      $region25: #{dgcnn_forward.1} parent=11 // pred_check
        %p660 = pneg %p169
      $region26: #{dgcnn_forward.1} parent=11 // pred_check_branch
        %662 = sbr.rel (%p660) target = $region28
      $region27: #{dgcnn_forward.1} parent=11 // pred_region
        _
      $region28: #{dgcnn_forward.1} parent=11 // pred_fallthru
        _
      // Predicated region
      $region29: #{dgcnn_forward.1} parent=11 // pred_check
        %p663 = pneg %p190
      $region30: #{dgcnn_forward.1} parent=11 // pred_check_branch
        %665 = sbr.rel (%p663) target = $region32
      $region31: #{dgcnn_forward.1} parent=11 // pred_region
        _
      $region32: #{dgcnn_forward.1} parent=11 // pred_fallthru
        _
      // Predicated region
      $region33: #{dgcnn_forward.1} parent=11 // pred_check
        %p666 = pneg %p211
      $region34: #{dgcnn_forward.1} parent=11 // pred_check_branch
        %668 = sbr.rel (%p666) target = $region36
      $region35: #{dgcnn_forward.1} parent=11 // pred_region
        _
      $region36: #{dgcnn_forward.1} parent=11 // pred_fallthru
        _
      // Predicated region
      $region37: #{dgcnn_forward.1} parent=11 // pred_check
        %p669 = pneg %p232
      $region38: #{dgcnn_forward.1} parent=11 // pred_check_branch
        %671 = sbr.rel (%p669) target = $region40
      $region39: #{dgcnn_forward.1} parent=11 // pred_region
        _
      $region40: #{dgcnn_forward.1} parent=11 // pred_fallthru
        _
      // Predicated region
      $region41: #{dgcnn_forward.1} parent=11 // pred_check
        %p672 = pneg %p253
      $region42: #{dgcnn_forward.1} parent=11 // pred_check_branch
        %674 = sbr.rel (%p672) target = $region44
      $region43: #{dgcnn_forward.1} parent=11 // pred_region
        _
      $region44: #{dgcnn_forward.1} parent=11 // pred_fallthru
        _
      // Predicated region
      $region45: #{dgcnn_forward.1} parent=11 // pred_check
        %p675 = pneg %p274
      $region46: #{dgcnn_forward.1} parent=11 // pred_check_branch
        %677 = sbr.rel (%p675) target = $region48
      $region47: #{dgcnn_forward.1} parent=11 // pred_region
        _
      $region48: #{dgcnn_forward.1} parent=11 // pred_fallthru
        _
      // Predicated region
      $region49: #{dgcnn_forward.1} parent=11 // pred_check
        %p678 = pneg %p295
      $region50: #{dgcnn_forward.1} parent=11 // pred_check_branch
        %680 = sbr.rel (%p678) target = $region52
      $region51: #{dgcnn_forward.1} parent=11 // pred_region
        _
      $region52: #{dgcnn_forward.1} parent=11 // pred_fallthru
        _
      // Predicated region
      $region53: #{dgcnn_forward.1} parent=11 // pred_check
        %p681 = pneg %p316
      $region54: #{dgcnn_forward.1} parent=11 // pred_check_branch
        %683 = sbr.rel (%p681) target = $region56
      $region55: #{dgcnn_forward.1} parent=11 // pred_region
        _
      $region56: #{dgcnn_forward.1} parent=11 // pred_fallthru
        _
      // Predicated region
      $region57: #{dgcnn_forward.1} parent=11 // pred_check
        %p684 = pneg %p337
      $region58: #{dgcnn_forward.1} parent=11 // pred_check_branch
        %686 = sbr.rel (%p684) target = $region60
      $region59: #{dgcnn_forward.1} parent=11 // pred_region
        _
      $region60: #{dgcnn_forward.1} parent=11 // pred_fallthru
        _
      // Predicated region
      $region61: #{dgcnn_forward.1} parent=11 // pred_check
        %p687 = pneg %p358
      $region62: #{dgcnn_forward.1} parent=11 // pred_check_branch
        %689 = sbr.rel (%p687) target = $region64
      $region63: #{dgcnn_forward.1} parent=11 // pred_region
        _
      $region64: #{dgcnn_forward.1} parent=11 // pred_fallthru
        _
      // Predicated region
      $region65: #{dgcnn_forward.1} parent=11 // pred_check
        %p690 = pneg %p379
      $region66: #{dgcnn_forward.1} parent=11 // pred_check_branch
        %692 = sbr.rel (%p690) target = $region68
      $region67: #{dgcnn_forward.1} parent=11 // pred_region
        _
      $region68: #{dgcnn_forward.1} parent=11 // pred_fallthru
        _
      // Predicated region
      $region69: #{dgcnn_forward.1} parent=11 // pred_check
        %p693 = pneg %p400
      $region70: #{dgcnn_forward.1} parent=11 // pred_check_branch
        %695 = sbr.rel (%p693) target = $region72
      $region71: #{dgcnn_forward.1} parent=11 // pred_region
        _
      $region72: #{dgcnn_forward.1} parent=11 // pred_fallthru
        _
      // Predicated region
      $region73: #{dgcnn_forward.1} parent=11 // pred_check
        %p696 = pneg %p421
      $region74: #{dgcnn_forward.1} parent=11 // pred_check_branch
        %698 = sbr.rel (%p696) target = $region76
      $region75: #{dgcnn_forward.1} parent=11 // pred_region
        _
      $region76: #{dgcnn_forward.1} parent=11 // pred_fallthru
        _
      // Predicated region
      $region77: #{dgcnn_forward.1} parent=11 // pred_check
        %p699 = pneg %p442
      $region78: #{dgcnn_forward.1} parent=11 // pred_check_branch
        %701 = sbr.rel (%p699) target = $region80
      $region79: #{dgcnn_forward.1} parent=11 // pred_region
        _
      $region80: #{dgcnn_forward.1} parent=11 // pred_fallthru
        _
      // Predicated region
      $region81: #{dgcnn_forward.1} parent=11 // pred_check
        %p702 = pneg %p463
      $region82: #{dgcnn_forward.1} parent=11 // pred_check_branch
        %704 = sbr.rel (%p702) target = $region84
      $region83: #{dgcnn_forward.1} parent=11 // pred_region
        _
      $region84: #{dgcnn_forward.1} parent=11 // pred_fallthru
        _
      // Predicated region
      $region85: #{dgcnn_forward.1} parent=11 // pred_check
        %p705 = pneg %p484
      $region86: #{dgcnn_forward.1} parent=11 // pred_check_branch
        %707 = sbr.rel (%p705) target = $region88
      $region87: #{dgcnn_forward.1} parent=11 // pred_region
        _
      $region88: #{dgcnn_forward.1} parent=11 // pred_fallthru
        _
      // Predicated region
      $region89: #{dgcnn_forward.1} parent=11 // pred_check
        %p708 = pneg %p505
      $region90: #{dgcnn_forward.1} parent=11 // pred_check_branch
        %710 = sbr.rel (%p708) target = $region92
      $region91: #{dgcnn_forward.1} parent=11 // pred_region
        _
      $region92: #{dgcnn_forward.1} parent=11 // pred_fallthru
        _
      // Predicated region
      $region93: #{dgcnn_forward.1} parent=11 // pred_check
        %p711 = pneg %p526
      $region94: #{dgcnn_forward.1} parent=11 // pred_check_branch
        %713 = sbr.rel (%p711) target = $region96
      $region95: #{dgcnn_forward.1} parent=11 // pred_region
        _
      $region96: #{dgcnn_forward.1} parent=11 // pred_fallthru
        _
      // Predicated region
      $region97: #{dgcnn_forward.1} parent=11 // pred_check
        %p714 = pneg %p547
      $region98: #{dgcnn_forward.1} parent=11 // pred_check_branch
        %716 = sbr.rel (%p714) target = $region100
      $region99: #{dgcnn_forward.1} parent=11 // pred_region
        _
      $region100: #{dgcnn_forward.1} parent=11 // pred_fallthru
        _
      // Predicated region
      $region101: #{dgcnn_forward.1} parent=11 // pred_check
        %p717 = pneg %p568
      $region102: #{dgcnn_forward.1} parent=11 // pred_check_branch
        %719 = sbr.rel (%p717) target = $region104
      $region103: #{dgcnn_forward.1} parent=11 // pred_region
        _
      $region104: #{dgcnn_forward.1} parent=11 // pred_fallthru
        _
      // Predicated region
      $region105: #{dgcnn_forward.1} parent=11 // pred_check
        %p720 = pneg %p589
      $region106: #{dgcnn_forward.1} parent=11 // pred_check_branch
        %722 = sbr.rel (%p720) target = $region108
      $region107: #{dgcnn_forward.1} parent=11 // pred_region
        _
      $region108: #{dgcnn_forward.1} parent=11 // pred_fallthru
        _
      // Predicated region
      $region109: #{dgcnn_forward.1} parent=11 // pred_check
        %p723 = pneg %p610
      $region110: #{dgcnn_forward.1} parent=11 // pred_check_branch
        %725 = sbr.rel (%p723) target = $region112
      $region111: #{dgcnn_forward.1} parent=11 // pred_region
        _
      $region112: #{dgcnn_forward.1} parent=11 // pred_fallthru
        _
    $region12: #{dgcnn_forward.1} parent=5 // pred_fallthru
      _
    %p726 = scmp.lt.s32.totalorder %s33, 2
    // Predicated region
    $region113: #{dgcnn_forward.1} parent=5 // pred_check
      %p727 = pneg %p726
    $region114: #{dgcnn_forward.1} parent=5 // pred_check_branch
      %729 = sbr.rel (%p727) target = $region116
    $region115: #{dgcnn_forward.1} parent=5 // pred_region
      // Predicated region
      $region117: #{dgcnn_forward.1} parent=115 // pred_check
        %p730 = pneg %p53
      $region118: #{dgcnn_forward.1} parent=115 // pred_check_branch
        %732 = sbr.rel (%p730) target = $region120
      $region119: #{dgcnn_forward.1} parent=115 // pred_region
        %p733 = scmp.lt.s32.totalorder %s33, 1
        %s734 = scalar_select %p733, %s33, 1
        %s735 = smul.addr %s734, 8
        %s736 = scalar_lea.vmem %s0, %s735
      $region120: #{dgcnn_forward.1} parent=115 // pred_fallthru
        _
      // Predicated region
      $region121: #{dgcnn_forward.1} parent=115 // pred_check
        %p737 = pneg %p79
      $region122: #{dgcnn_forward.1} parent=115 // pred_check_branch
        %739 = sbr.rel (%p737) target = $region124
      $region123: #{dgcnn_forward.1} parent=115 // pred_region
        %p740 = scmp.lt.s32.totalorder %s33, 1
        %s741 = scalar_select %p740, %s33, 1
        %s742 = scalar_lea.vmem %s1, %s741
      $region124: #{dgcnn_forward.1} parent=115 // pred_fallthru
        _
    $region116: #{dgcnn_forward.1} parent=5 // pred_fallthru
      _
    %p743 = scmp.le.s32.totalorder 1, %s33
    %p744 = scmp.lt.s32.totalorder %s33, 3
    %p745 = pnand %p743, %p744
    %p746 = pneg %p745
    // Predicated region
    $region125: #{dgcnn_forward.1} parent=5 // pred_check
      _
    $region126: #{dgcnn_forward.1} parent=5 // pred_check_branch
      %748 = sbr.rel (%p745) target = $region128
    $region127: #{dgcnn_forward.1} parent=5 // pred_region
      %s749 = ssub.s32 %s33, 1
      %p750 = scmp.lt.s32.totalorder %s38, 1
      %s751 = scalar_select %p750, %s38, 1
      %s752 = smul.addr %s751, 8
      %s753 = scalar_lea.vmem %s0, %s752
      %p754 = pneg %p59
      %p755 = pneg %p56
      %p756 = scmp.lt.s32.totalorder %s38, 1
      %s757 = scalar_select %p756, %s38, 1
      %s758 = scalar_lea.vmem %s1, %s757
      %p759 = pneg %p85
      %p760 = pneg %p82
      %p761 = pneg %p106
      %p762 = pneg %p103
      %p763 = pneg %p127
      %p764 = pneg %p124
      %p765 = pneg %p148
      %p766 = pneg %p145
      %p767 = pneg %p169
      %p768 = pneg %p166
      %p769 = pneg %p190
      %p770 = pneg %p187
      %p771 = pneg %p211
      %p772 = pneg %p208
      %p773 = pneg %p232
      %p774 = pneg %p229
      %p775 = pneg %p253
      %p776 = pneg %p250
      %p777 = pneg %p274
      %p778 = pneg %p271
      %p779 = pneg %p295
      %p780 = pneg %p292
      %p781 = pneg %p316
      %p782 = pneg %p313
      %p783 = pneg %p337
      %p784 = pneg %p334
      %p785 = pneg %p358
      %p786 = pneg %p355
      %p787 = pneg %p379
      %p788 = pneg %p376
      %p789 = pneg %p400
      %p790 = pneg %p397
      %p791 = pneg %p421
      %p792 = pneg %p418
      %p793 = pneg %p442
      %p794 = pneg %p439
      %p795 = pneg %p463
      %p796 = pneg %p460
      %p797 = pneg %p484
      %p798 = pneg %p481
      %p799 = pneg %p505
      %p800 = pneg %p502
      %p801 = pneg %p526
      %p802 = pneg %p523
      %p803 = pneg %p547
      %p804 = pneg %p544
      %p805 = pneg %p568
      %p806 = pneg %p565
      %p807 = pneg %p589
      %p808 = pneg %p586
      %p809 = pneg %p610
      %p810 = pneg %p607
      %p811 = pneg %p636
      %p812 = pneg %p633
      %p813 = scmp.lt.s32.totalorder %s38, 1
      %s814 = scalar_select %p813, %s38, 1
      %s815 = smul.addr %s814, 8
      %s816 = scalar_lea.vmem %s27, %s815
      %p817 = scmp.lt.s32.totalorder %s38, 1
      %s818 = scalar_select %p817, %s38, 1
      %s819 = smul.addr %s818, 8
      %s820 = scalar_lea.vmem %s0, %s819
      %p821 = scmp.lt.s32.totalorder %s38, 1
      %s822 = scalar_select %p821, %s38, 1
      %s823 = scalar_lea.vmem %s1, %s822
      %p824 = scmp.lt.s32.totalorder %s38, 1
      %s825 = scalar_select %p824, %s38, 1
      %s826 = smul.addr %s825, 8
      %s827 = scalar_lea.vmem %s27, %s826
      %v829 = vld [vmem:[%s820] sm:$0xff]
      %v830 = vld [vmem:[%s823] sm:$0x1]
      %v831 = vlaneseq
      %v832 = vand.u32 %v831, 127
      %v833 = vcvt.s32.f32 %v832
      %v834 = vld [vmem:[%s2] sm:$0x1]
      %v835 = vld [vmem:[%s3] sm:$0x1]
      %v836 = vld [vmem:[%s4] sm:$0x1]
      %v837 = vld [vmem:[%s5] sm:$0xff]
      %v838 = vld [vmem:[%s5 + $0x8] sm:$0xff]
      %v839 = vld [vmem:[%s6] sm:$0x1]
      %v840 = vmul.f32 %v829, %v829
      %v841 = vadd.f32 %v840, 0.0
      %vm842 = vcmask 7168
      %v844 = vsel %vm842, 1.0, 0
      %v847 = vsel %vm842, %v840, 0
      %849 = vmatprep.subr.mxu0 0.0
      %850 = vmatpush1.xpose.msra.mxu0 %v847
      %851 = vmatprep.subr.mxu0 0.0
      %852 = vmatpush1.xpose.msra.mxu0 0.0
      %853 = vmatprep.subr.mxu0 0.0
      %854 = vmatpush1.xpose.msra.mxu0 0.0
      %855 = vmatprep.subr.mxu0 0.0
      %856 = vmatpush1.xpose.msra.mxu0 0.0
      %857 = vmatprep.subr.mxu0 0.0
      %858 = vmatpush1.xpose.msra.mxu0 0.0
      %859 = vmatprep.subr.mxu0 0.0
      %860 = vmatpush1.xpose.msra.mxu0 0.0
      %861 = vmatprep.subr.mxu0 0.0
      %862 = vmatpush1.xpose.msra.mxu0 0.0
      %863 = vmatprep.subr.mxu0 0.0
      %864 = vmatpush1.xpose.msra.mxu0 0.0
      %865 = vmatprep.subr.mxu0 0.0
      %866 = vmatpush1.xpose.msra.mxu0 0.0
      %867 = vmatprep.subr.mxu0 0.0
      %868 = vmatpush1.xpose.msra.mxu0 0.0
      %869 = vmatprep.subr.mxu0 0.0
      %870 = vmatpush1.xpose.msra.mxu0 0.0
      %871 = vmatprep.subr.mxu0 0.0
      %872 = vmatpush1.xpose.msra.mxu0 0.0
      %873 = vmatprep.subr.mxu0 0.0
      %874 = vmatpush1.xpose.msra.mxu0 0.0
      %875 = vmatprep.subr.mxu0 0.0
      %876 = vmatpush1.xpose.msra.mxu0 0.0
      %877 = vmatprep.subr.mxu0 0.0
      %878 = vmatpush1.xpose.msra.mxu0 0.0
      %879 = vmatprep.subr.mxu0 0.0
      %880 = vmatpush1.xpose.msra.mxu0 0.0
      %881 = vmatprep.subr.mxu0 0.0
      %882 = vmatpush1.xpose.msra.mxu0 0.0
      %883 = vmatprep.subr.mxu0 0.0
      %884 = vmatpush1.xpose.msra.mxu0 0.0
      %885 = vmatprep.subr.mxu0 0.0
      %886 = vmatpush1.xpose.msra.mxu0 0.0
      %887 = vmatprep.subr.mxu0 0.0
      %888 = vmatpush1.xpose.msra.mxu0 0.0
      %889 = vmatprep.subr.mxu0 0.0
      %890 = vmatpush1.xpose.msra.mxu0 0.0
      %891 = vmatprep.subr.mxu0 0.0
      %892 = vmatpush1.xpose.msra.mxu0 0.0
      %893 = vmatprep.subr.mxu0 0.0
      %894 = vmatpush1.xpose.msra.mxu0 0.0
      %895 = vmatprep.subr.mxu0 0.0
      %896 = vmatpush1.xpose.msra.mxu0 0.0
      %897 = vmatprep.subr.mxu0 0.0
      %898 = vmatpush1.xpose.msra.mxu0 0.0
      %899 = vmatprep.subr.mxu0 0.0
      %900 = vmatpush1.xpose.msra.mxu0 0.0
      %901 = vmatprep.subr.mxu0 0.0
      %902 = vmatpush1.xpose.msra.mxu0 0.0
      %903 = vmatprep.subr.mxu0 0.0
      %904 = vmatpush1.xpose.msra.mxu0 0.0
      %905 = vmatprep.subr.mxu0 0.0
      %906 = vmatpush1.xpose.msra.mxu0 0.0
      %907 = vmatprep.subr.mxu0 0.0
      %908 = vmatpush1.xpose.msra.mxu0 0.0
      %909 = vmatprep.subr.mxu0 0.0
      %910 = vmatpush1.xpose.msra.mxu0 0.0
      %911 = vmatprep.subr.mxu0 0.0
      %912 = vmatpush1.xpose.msra.mxu0 0.0
      %913 = vmatprep.mubr.f32.mxu0 0.0
      %914 = vmatmul.mubr.f32.gmra.mrb[0].mxu0 %v844
      %v915 = vpop.f32.mrb[0].mxu0
      %v916 = vadd.f32 0.0, %v915
      %v917 = vpop.f32.mrb[0].mxu0
      %918 = vdwg.mxu0
      %v919 = vpack.c.bf16 %v829, %v829
      %v921 = vsel %vm842, %v919, 0
      %923 = vmatprep.subr.bf16.mxu0 0
      %924 = vmatpush1.bf16.xpose.msra.mxu0 %v921
      %925 = vmatprep.subr.bf16.mxu0 0
      %926 = vmatpush1.bf16.xpose.msra.mxu0 0
      %927 = vmatprep.subr.bf16.mxu0 0
      %928 = vmatpush1.bf16.xpose.msra.mxu0 0
      %929 = vmatprep.subr.bf16.mxu0 0
      %930 = vmatpush1.bf16.xpose.msra.mxu0 0
      %931 = vmatprep.subr.bf16.mxu0 0
      %932 = vmatpush1.bf16.xpose.msra.mxu0 0
      %933 = vmatprep.subr.bf16.mxu0 0
      %934 = vmatpush1.bf16.xpose.msra.mxu0 0
      %935 = vmatprep.subr.bf16.mxu0 0
      %936 = vmatpush1.bf16.xpose.msra.mxu0 0
      %937 = vmatprep.subr.bf16.mxu0 0
      %938 = vmatpush1.bf16.xpose.msra.mxu0 0
      %939 = vmatprep.subr.bf16.mxu0 0
      %940 = vmatpush1.bf16.xpose.msra.mxu0 0
      %941 = vmatprep.subr.bf16.mxu0 0
      %942 = vmatpush1.bf16.xpose.msra.mxu0 0
      %943 = vmatprep.subr.bf16.mxu0 0
      %944 = vmatpush1.bf16.xpose.msra.mxu0 0
      %945 = vmatprep.subr.bf16.mxu0 0
      %946 = vmatpush1.bf16.xpose.msra.mxu0 0
      %947 = vmatprep.subr.bf16.mxu0 0
      %948 = vmatpush1.bf16.xpose.msra.mxu0 0
      %949 = vmatprep.subr.bf16.mxu0 0
      %950 = vmatpush1.bf16.xpose.msra.mxu0 0
      %951 = vmatprep.subr.bf16.mxu0 0
      %952 = vmatpush1.bf16.xpose.msra.mxu0 0
      %953 = vmatprep.subr.bf16.mxu0 0
      %954 = vmatpush1.bf16.xpose.msra.mxu0 0
      %955 = vmatprep.mubr.bf16.mxu0 0
      %956 = vmatmul.mubr.bf16.gmra.mrb[0].mxu0 %v921
      %v957 = vpop.f32.mrb[0].mxu0
      %v958 = vadd.f32 0.0, %v957
      %v959 = vpop.f32.mrb[0].mxu0
      %v960 = vpop.f32.mrb[0].mxu0
      %v961 = vpop.f32.mrb[0].mxu0
      %962 = vdwg.mxu0
      %964 = vset.pattern.permute.xlu0 0
      %965 = vperm.xlu0 %964, %v841
      %v966 = vpop.permute.xlu0 %965
      %v968 = vlaneseq
      %v969 = vshrl.u32 %v968, 7
      %v970 = vsub.s32 0, %v969
      %v971 = vrot.slane %v916, %v970
      %v972 = vadd.f32 %v966, %v971
      %v973 = vmul.f32 %v958, 2.0
      %v974 = vsub.f32 %v972, %v973
      %v976 = vlaneseq
      %v977 = vshrl.u32 %v976, 7
      %v978 = vsub.s32 0, %v977
      %v979 = vrot.slane %v830, %v978
      %v981 = vadd.f32 %v974, %v979
      %983 = vset.pattern.permute.xlu0 0
      %984 = vperm.xlu0 %983, %v829
      %v985 = vpop.permute.xlu0 %984
      %v988 = vlaneseq
      %v989 = vshrl.u32 %v988, 7
      %v990 = vsub.s32 0, %v989
      %v991 = vrot.slane %v834, %v990
      %v993 = vmul.f32 %v985, %v991
      %v995 = vlaneseq
      %v996 = vshrl.u32 %v995, 7
      %v997 = vsub.s32 0, %v996
      %v998 = vrot.slane %v836, %v997
      %v1000 = vadd.f32 %v993, %v998
      %vm1001 = vcmask 64512
      %v1002 = vsel %vm1001, %v981, inf
      %1003 = vmin.xlane.f32.xlu0 %v1002
      %v1004 = vpop.xlane.xlu0 %1003
      %vm1005 = vcmp.le.f32.partialorder %v981, %v1004
      %v1006 = vsel %vm1005, %v833, 8.0
      %v1007 = vsel %vm1001, %v1006, inf
      %1008 = vmin.xlane.f32.xlu0 %v1007
      %v1009 = vpop.xlane.xlu0 %1008
      %vm1010 = vcmp.eq.f32.partialorder %v833, %v1009
      %v1011 = vsel %vm1010, 1e+30, %v981
      %v1012 = vsel %vm1010, 1, 0
      %v1013 = vcvt.s32.f32 %v1012
      %v1015 = vsel %vm1001, %v1013, 0
      %1017 = vmatprep.subr.mxu0 0.0
      %1018 = vmatpush1.msra.mxu0 %v829
      %1019 = vmatprep.subr.mxu0 0.0
      %1020 = vmatpush1.msra.mxu0 0.0
      %1021 = vmatprep.subr.mxu0 0.0
      %1022 = vmatpush1.msra.mxu0 0.0
      %1023 = vmatprep.subr.mxu0 0.0
      %1024 = vmatpush1.msra.mxu0 0.0
      %1025 = vmatprep.subr.mxu0 0.0
      %1026 = vmatpush1.msra.mxu0 0.0
      %1027 = vmatprep.subr.mxu0 0.0
      %1028 = vmatpush1.msra.mxu0 0.0
      %1029 = vmatprep.subr.mxu0 0.0
      %1030 = vmatpush1.msra.mxu0 0.0
      %1031 = vmatprep.subr.mxu0 0.0
      %1032 = vmatpush1.msra.mxu0 0.0
      %1033 = vmatprep.subr.mxu0 0.0
      %1034 = vmatpush1.msra.mxu0 0.0
      %1035 = vmatprep.subr.mxu0 0.0
      %1036 = vmatpush1.msra.mxu0 0.0
      %1037 = vmatprep.subr.mxu0 0.0
      %1038 = vmatpush1.msra.mxu0 0.0
      %1039 = vmatprep.subr.mxu0 0.0
      %1040 = vmatpush1.msra.mxu0 0.0
      %1041 = vmatprep.subr.mxu0 0.0
      %1042 = vmatpush1.msra.mxu0 0.0
      %1043 = vmatprep.subr.mxu0 0.0
      %1044 = vmatpush1.msra.mxu0 0.0
      %1045 = vmatprep.subr.mxu0 0.0
      %1046 = vmatpush1.msra.mxu0 0.0
      %1047 = vmatprep.subr.mxu0 0.0
      %1048 = vmatpush1.msra.mxu0 0.0
      %1049 = vmatprep.subr.mxu0 0.0
      %1050 = vmatpush1.msra.mxu0 0.0
      %1051 = vmatprep.subr.mxu0 0.0
      %1052 = vmatpush1.msra.mxu0 0.0
      %1053 = vmatprep.subr.mxu0 0.0
      %1054 = vmatpush1.msra.mxu0 0.0
      %1055 = vmatprep.subr.mxu0 0.0
      %1056 = vmatpush1.msra.mxu0 0.0
      %1057 = vmatprep.subr.mxu0 0.0
      %1058 = vmatpush1.msra.mxu0 0.0
      %1059 = vmatprep.subr.mxu0 0.0
      %1060 = vmatpush1.msra.mxu0 0.0
      %1061 = vmatprep.subr.mxu0 0.0
      %1062 = vmatpush1.msra.mxu0 0.0
      %1063 = vmatprep.subr.mxu0 0.0
      %1064 = vmatpush1.msra.mxu0 0.0
      %1065 = vmatprep.subr.mxu0 0.0
      %1066 = vmatpush1.msra.mxu0 0.0
      %1067 = vmatprep.subr.mxu0 0.0
      %1068 = vmatpush1.msra.mxu0 0.0
      %1069 = vmatprep.subr.mxu0 0.0
      %1070 = vmatpush1.msra.mxu0 0.0
      %1071 = vmatprep.subr.mxu0 0.0
      %1072 = vmatpush1.msra.mxu0 0.0
      %1073 = vmatprep.subr.mxu0 0.0
      %1074 = vmatpush1.msra.mxu0 0.0
      %1075 = vmatprep.subr.mxu0 0.0
      %1076 = vmatpush1.msra.mxu0 0.0
      %1077 = vmatprep.subr.mxu0 0.0
      %1078 = vmatpush1.msra.mxu0 0.0
      %1079 = vmatprep.subr.mxu0 0.0
      %1080 = vmatpush1.msra.mxu0 0.0
      %1081 = vmatprep.mubr.f32.mxu0 0.0
      %1082 = vmatmul.mubr.f32.gmra.mrb[0].mxu0 %v1015
      %v1083 = vpop.f32.mrb[0].mxu0
      %v1084 = vadd.f32 0.0, %v1083
      %v1085 = vpop.f32.mrb[0].mxu0
      %1086 = vdwg.mxu0
      %1088 = vset.pattern.permute.xlu0 0
      %1089 = vperm.xlu0 %1088, %v1084
      %v1090 = vpop.permute.xlu0 %1089
      %v1093 = vlaneseq
      %v1094 = vshrl.u32 %v1093, 7
      %v1095 = vsub.s32 0, %v1094
      %v1096 = vrot.slane %v835, %v1095
      %v1098 = vmul.f32 %v1090, %v1096
      %v1099 = vadd.f32 %v1000, %v1098
      %v1100 = vmax.f32 %v1099, 0.0
      %vm1101 = vcmask 130048
      %v1103 = vsel %vm1101, %v1100, 0
      %1105 = vmatprep.subr.mxu0 0.0
      %1106 = vmatpush1.msra.mxu0 %v837
      %1107 = vmatprep.subr.mxu0 0.0
      %1108 = vmatpush1.msra.mxu0 %v838
      %1109 = vmatprep.subr.mxu0 0.0
      %1110 = vmatpush1.msra.mxu0 0.0
      %1111 = vmatprep.subr.mxu0 0.0
      %1112 = vmatpush1.msra.mxu0 0.0
      %1113 = vmatprep.subr.mxu0 0.0
      %1114 = vmatpush1.msra.mxu0 0.0
      %1115 = vmatprep.subr.mxu0 0.0
      %1116 = vmatpush1.msra.mxu0 0.0
      %1117 = vmatprep.subr.mxu0 0.0
      %1118 = vmatpush1.msra.mxu0 0.0
      %1119 = vmatprep.subr.mxu0 0.0
      %1120 = vmatpush1.msra.mxu0 0.0
      %1121 = vmatprep.subr.mxu0 0.0
      %1122 = vmatpush1.msra.mxu0 0.0
      %1123 = vmatprep.subr.mxu0 0.0
      %1124 = vmatpush1.msra.mxu0 0.0
      %1125 = vmatprep.subr.mxu0 0.0
      %1126 = vmatpush1.msra.mxu0 0.0
      %1127 = vmatprep.subr.mxu0 0.0
      %1128 = vmatpush1.msra.mxu0 0.0
      %1129 = vmatprep.subr.mxu0 0.0
      %1130 = vmatpush1.msra.mxu0 0.0
      %1131 = vmatprep.subr.mxu0 0.0
      %1132 = vmatpush1.msra.mxu0 0.0
      %1133 = vmatprep.subr.mxu0 0.0
      %1134 = vmatpush1.msra.mxu0 0.0
      %1135 = vmatprep.subr.mxu0 0.0
      %1136 = vmatpush1.msra.mxu0 0.0
      %1137 = vmatprep.subr.mxu0 0.0
      %1138 = vmatpush1.msra.mxu0 0.0
      %1139 = vmatprep.subr.mxu0 0.0
      %1140 = vmatpush1.msra.mxu0 0.0
      %1141 = vmatprep.subr.mxu0 0.0
      %1142 = vmatpush1.msra.mxu0 0.0
      %1143 = vmatprep.subr.mxu0 0.0
      %1144 = vmatpush1.msra.mxu0 0.0
      %1145 = vmatprep.subr.mxu0 0.0
      %1146 = vmatpush1.msra.mxu0 0.0
      %1147 = vmatprep.subr.mxu0 0.0
      %1148 = vmatpush1.msra.mxu0 0.0
      %1149 = vmatprep.subr.mxu0 0.0
      %1150 = vmatpush1.msra.mxu0 0.0
      %1151 = vmatprep.subr.mxu0 0.0
      %1152 = vmatpush1.msra.mxu0 0.0
      %1153 = vmatprep.subr.mxu0 0.0
      %1154 = vmatpush1.msra.mxu0 0.0
      %1155 = vmatprep.subr.mxu0 0.0
      %1156 = vmatpush1.msra.mxu0 0.0
      %1157 = vmatprep.subr.mxu0 0.0
      %1158 = vmatpush1.msra.mxu0 0.0
      %1159 = vmatprep.subr.mxu0 0.0
      %1160 = vmatpush1.msra.mxu0 0.0
      %1161 = vmatprep.subr.mxu0 0.0
      %1162 = vmatpush1.msra.mxu0 0.0
      %1163 = vmatprep.subr.mxu0 0.0
      %1164 = vmatpush1.msra.mxu0 0.0
      %1165 = vmatprep.subr.mxu0 0.0
      %1166 = vmatpush1.msra.mxu0 0.0
      %1167 = vmatprep.subr.mxu0 0.0
      %1168 = vmatpush1.msra.mxu0 0.0
      %1169 = vmatprep.mubr.f32.mxu0 0.0
      %1170 = vmatmul.mubr.f32.gmra.mrb[0].mxu0 %v1103
      %v1171 = vpop.f32.mrb[0].mxu0
      %v1172 = vadd.f32 0.0, %v1171
      %v1173 = vpop.f32.mrb[0].mxu0
      %1174 = vdwg.mxu0
      %v1175 = vsel %vm1001, %v1011, inf
      %1176 = vmin.xlane.f32.xlu0 %v1175
      %v1177 = vpop.xlane.xlu0 %1176
      %vm1178 = vcmp.le.f32.partialorder %v1011, %v1177
      %v1179 = vsel %vm1178, %v833, 8.0
      %v1180 = vsel %vm1001, %v1179, inf
      %1181 = vmin.xlane.f32.xlu0 %v1180
      %v1182 = vpop.xlane.xlu0 %1181
      %vm1183 = vcmp.eq.f32.partialorder %v833, %v1182
      %v1184 = vsel %vm1183, 1e+30, %v1011
      %v1185 = vsel %vm1183, 1, 0
      %v1186 = vcvt.s32.f32 %v1185
      %v1188 = vsel %vm1001, %v1186, 0
      %1190 = vmatprep.subr.mxu0 0.0
      %1191 = vmatpush1.msra.mxu0 %v829
      %1192 = vmatprep.subr.mxu0 0.0
      %1193 = vmatpush1.msra.mxu0 0.0
      %1194 = vmatprep.subr.mxu0 0.0
      %1195 = vmatpush1.msra.mxu0 0.0
      %1196 = vmatprep.subr.mxu0 0.0
      %1197 = vmatpush1.msra.mxu0 0.0
      %1198 = vmatprep.subr.mxu0 0.0
      %1199 = vmatpush1.msra.mxu0 0.0
      %1200 = vmatprep.subr.mxu0 0.0
      %1201 = vmatpush1.msra.mxu0 0.0
      %1202 = vmatprep.subr.mxu0 0.0
      %1203 = vmatpush1.msra.mxu0 0.0
      %1204 = vmatprep.subr.mxu0 0.0
      %1205 = vmatpush1.msra.mxu0 0.0
      %1206 = vmatprep.subr.mxu0 0.0
      %1207 = vmatpush1.msra.mxu0 0.0
      %1208 = vmatprep.subr.mxu0 0.0
      %1209 = vmatpush1.msra.mxu0 0.0
      %1210 = vmatprep.subr.mxu0 0.0
      %1211 = vmatpush1.msra.mxu0 0.0
      %1212 = vmatprep.subr.mxu0 0.0
      %1213 = vmatpush1.msra.mxu0 0.0
      %1214 = vmatprep.subr.mxu0 0.0
      %1215 = vmatpush1.msra.mxu0 0.0
      %1216 = vmatprep.subr.mxu0 0.0
      %1217 = vmatpush1.msra.mxu0 0.0
      %1218 = vmatprep.subr.mxu0 0.0
      %1219 = vmatpush1.msra.mxu0 0.0
      %1220 = vmatprep.subr.mxu0 0.0
      %1221 = vmatpush1.msra.mxu0 0.0
      %1222 = vmatprep.subr.mxu0 0.0
      %1223 = vmatpush1.msra.mxu0 0.0
      %1224 = vmatprep.subr.mxu0 0.0
      %1225 = vmatpush1.msra.mxu0 0.0
      %1226 = vmatprep.subr.mxu0 0.0
      %1227 = vmatpush1.msra.mxu0 0.0
      %1228 = vmatprep.subr.mxu0 0.0
      %1229 = vmatpush1.msra.mxu0 0.0
      %1230 = vmatprep.subr.mxu0 0.0
      %1231 = vmatpush1.msra.mxu0 0.0
      %1232 = vmatprep.subr.mxu0 0.0
      %1233 = vmatpush1.msra.mxu0 0.0
      %1234 = vmatprep.subr.mxu0 0.0
      %1235 = vmatpush1.msra.mxu0 0.0
      %1236 = vmatprep.subr.mxu0 0.0
      %1237 = vmatpush1.msra.mxu0 0.0
      %1238 = vmatprep.subr.mxu0 0.0
      %1239 = vmatpush1.msra.mxu0 0.0
      %1240 = vmatprep.subr.mxu0 0.0
      %1241 = vmatpush1.msra.mxu0 0.0
      %1242 = vmatprep.subr.mxu0 0.0
      %1243 = vmatpush1.msra.mxu0 0.0
      %1244 = vmatprep.subr.mxu0 0.0
      %1245 = vmatpush1.msra.mxu0 0.0
      %1246 = vmatprep.subr.mxu0 0.0
      %1247 = vmatpush1.msra.mxu0 0.0
      %1248 = vmatprep.subr.mxu0 0.0
      %1249 = vmatpush1.msra.mxu0 0.0
      %1250 = vmatprep.subr.mxu0 0.0
      %1251 = vmatpush1.msra.mxu0 0.0
      %1252 = vmatprep.subr.mxu0 0.0
      %1253 = vmatpush1.msra.mxu0 0.0
      %1254 = vmatprep.mubr.f32.mxu0 0.0
      %1255 = vmatmul.mubr.f32.gmra.mrb[0].mxu0 %v1188
      %v1256 = vpop.f32.mrb[0].mxu0
      %v1257 = vadd.f32 0.0, %v1256
      %v1258 = vpop.f32.mrb[0].mxu0
      %1259 = vdwg.mxu0
      %1261 = vset.pattern.permute.xlu0 0
      %1262 = vperm.xlu0 %1261, %v1257
      %v1263 = vpop.permute.xlu0 %1262
      %v1265 = vmul.f32 %v1263, %v1096
      %v1266 = vadd.f32 %v1000, %v1265
      %v1267 = vmax.f32 %v1266, 0.0
      %v1269 = vsel %vm1101, %v1267, 0
      %1271 = vmatprep.subr.mxu0 0.0
      %1272 = vmatpush1.msra.mxu0 %v837
      %1273 = vmatprep.subr.mxu0 0.0
      %1274 = vmatpush1.msra.mxu0 %v838
      %1275 = vmatprep.subr.mxu0 0.0
      %1276 = vmatpush1.msra.mxu0 0.0
      %1277 = vmatprep.subr.mxu0 0.0
      %1278 = vmatpush1.msra.mxu0 0.0
      %1279 = vmatprep.subr.mxu0 0.0
      %1280 = vmatpush1.msra.mxu0 0.0
      %1281 = vmatprep.subr.mxu0 0.0
      %1282 = vmatpush1.msra.mxu0 0.0
      %1283 = vmatprep.subr.mxu0 0.0
      %1284 = vmatpush1.msra.mxu0 0.0
      %1285 = vmatprep.subr.mxu0 0.0
      %1286 = vmatpush1.msra.mxu0 0.0
      %1287 = vmatprep.subr.mxu0 0.0
      %1288 = vmatpush1.msra.mxu0 0.0
      %1289 = vmatprep.subr.mxu0 0.0
      %1290 = vmatpush1.msra.mxu0 0.0
      %1291 = vmatprep.subr.mxu0 0.0
      %1292 = vmatpush1.msra.mxu0 0.0
      %1293 = vmatprep.subr.mxu0 0.0
      %1294 = vmatpush1.msra.mxu0 0.0
      %1295 = vmatprep.subr.mxu0 0.0
      %1296 = vmatpush1.msra.mxu0 0.0
      %1297 = vmatprep.subr.mxu0 0.0
      %1298 = vmatpush1.msra.mxu0 0.0
      %1299 = vmatprep.subr.mxu0 0.0
      %1300 = vmatpush1.msra.mxu0 0.0
      %1301 = vmatprep.subr.mxu0 0.0
      %1302 = vmatpush1.msra.mxu0 0.0
      %1303 = vmatprep.subr.mxu0 0.0
      %1304 = vmatpush1.msra.mxu0 0.0
      %1305 = vmatprep.subr.mxu0 0.0
      %1306 = vmatpush1.msra.mxu0 0.0
      %1307 = vmatprep.subr.mxu0 0.0
      %1308 = vmatpush1.msra.mxu0 0.0
      %1309 = vmatprep.subr.mxu0 0.0
      %1310 = vmatpush1.msra.mxu0 0.0
      %1311 = vmatprep.subr.mxu0 0.0
      %1312 = vmatpush1.msra.mxu0 0.0
      %1313 = vmatprep.subr.mxu0 0.0
      %1314 = vmatpush1.msra.mxu0 0.0
      %1315 = vmatprep.subr.mxu0 0.0
      %1316 = vmatpush1.msra.mxu0 0.0
      %1317 = vmatprep.subr.mxu0 0.0
      %1318 = vmatpush1.msra.mxu0 0.0
      %1319 = vmatprep.subr.mxu0 0.0
      %1320 = vmatpush1.msra.mxu0 0.0
      %1321 = vmatprep.subr.mxu0 0.0
      %1322 = vmatpush1.msra.mxu0 0.0
      %1323 = vmatprep.subr.mxu0 0.0
      %1324 = vmatpush1.msra.mxu0 0.0
      %1325 = vmatprep.subr.mxu0 0.0
      %1326 = vmatpush1.msra.mxu0 0.0
      %1327 = vmatprep.subr.mxu0 0.0
      %1328 = vmatpush1.msra.mxu0 0.0
      %1329 = vmatprep.subr.mxu0 0.0
      %1330 = vmatpush1.msra.mxu0 0.0
      %1331 = vmatprep.subr.mxu0 0.0
      %1332 = vmatpush1.msra.mxu0 0.0
      %1333 = vmatprep.subr.mxu0 0.0
      %1334 = vmatpush1.msra.mxu0 0.0
      %1335 = vmatprep.mubr.f32.mxu0 0.0
      %1336 = vmatmul.mubr.f32.gmra.mrb[0].mxu0 %v1269
      %v1337 = vpop.f32.mrb[0].mxu0
      %v1338 = vadd.f32 0.0, %v1337
      %v1339 = vpop.f32.mrb[0].mxu0
      %1340 = vdwg.mxu0
      %v1341 = vmax.f32 %v1172, %v1338
      %v1342 = vsel %vm1001, %v1184, inf
      %1343 = vmin.xlane.f32.xlu0 %v1342
      %v1344 = vpop.xlane.xlu0 %1343
      %vm1345 = vcmp.le.f32.partialorder %v1184, %v1344
      %v1346 = vsel %vm1345, %v833, 8.0
      %v1347 = vsel %vm1001, %v1346, inf
      %1348 = vmin.xlane.f32.xlu0 %v1347
      %v1349 = vpop.xlane.xlu0 %1348
      %vm1350 = vcmp.eq.f32.partialorder %v833, %v1349
      %v1351 = vsel %vm1350, 1e+30, %v1184
      %v1352 = vsel %vm1350, 1, 0
      %v1353 = vcvt.s32.f32 %v1352
      %v1355 = vsel %vm1001, %v1353, 0
      %1357 = vmatprep.subr.mxu0 0.0
      %1358 = vmatpush1.msra.mxu0 %v829
      %1359 = vmatprep.subr.mxu0 0.0
      %1360 = vmatpush1.msra.mxu0 0.0
      %1361 = vmatprep.subr.mxu0 0.0
      %1362 = vmatpush1.msra.mxu0 0.0
      %1363 = vmatprep.subr.mxu0 0.0
      %1364 = vmatpush1.msra.mxu0 0.0
      %1365 = vmatprep.subr.mxu0 0.0
      %1366 = vmatpush1.msra.mxu0 0.0
      %1367 = vmatprep.subr.mxu0 0.0
      %1368 = vmatpush1.msra.mxu0 0.0
      %1369 = vmatprep.subr.mxu0 0.0
      %1370 = vmatpush1.msra.mxu0 0.0
      %1371 = vmatprep.subr.mxu0 0.0
      %1372 = vmatpush1.msra.mxu0 0.0
      %1373 = vmatprep.subr.mxu0 0.0
      %1374 = vmatpush1.msra.mxu0 0.0
      %1375 = vmatprep.subr.mxu0 0.0
      %1376 = vmatpush1.msra.mxu0 0.0
      %1377 = vmatprep.subr.mxu0 0.0
      %1378 = vmatpush1.msra.mxu0 0.0
      %1379 = vmatprep.subr.mxu0 0.0
      %1380 = vmatpush1.msra.mxu0 0.0
      %1381 = vmatprep.subr.mxu0 0.0
      %1382 = vmatpush1.msra.mxu0 0.0
      %1383 = vmatprep.subr.mxu0 0.0
      %1384 = vmatpush1.msra.mxu0 0.0
      %1385 = vmatprep.subr.mxu0 0.0
      %1386 = vmatpush1.msra.mxu0 0.0
      %1387 = vmatprep.subr.mxu0 0.0
      %1388 = vmatpush1.msra.mxu0 0.0
      %1389 = vmatprep.subr.mxu0 0.0
      %1390 = vmatpush1.msra.mxu0 0.0
      %1391 = vmatprep.subr.mxu0 0.0
      %1392 = vmatpush1.msra.mxu0 0.0
      %1393 = vmatprep.subr.mxu0 0.0
      %1394 = vmatpush1.msra.mxu0 0.0
      %1395 = vmatprep.subr.mxu0 0.0
      %1396 = vmatpush1.msra.mxu0 0.0
      %1397 = vmatprep.subr.mxu0 0.0
      %1398 = vmatpush1.msra.mxu0 0.0
      %1399 = vmatprep.subr.mxu0 0.0
      %1400 = vmatpush1.msra.mxu0 0.0
      %1401 = vmatprep.subr.mxu0 0.0
      %1402 = vmatpush1.msra.mxu0 0.0
      %1403 = vmatprep.subr.mxu0 0.0
      %1404 = vmatpush1.msra.mxu0 0.0
      %1405 = vmatprep.subr.mxu0 0.0
      %1406 = vmatpush1.msra.mxu0 0.0
      %1407 = vmatprep.subr.mxu0 0.0
      %1408 = vmatpush1.msra.mxu0 0.0
      %1409 = vmatprep.subr.mxu0 0.0
      %1410 = vmatpush1.msra.mxu0 0.0
      %1411 = vmatprep.subr.mxu0 0.0
      %1412 = vmatpush1.msra.mxu0 0.0
      %1413 = vmatprep.subr.mxu0 0.0
      %1414 = vmatpush1.msra.mxu0 0.0
      %1415 = vmatprep.subr.mxu0 0.0
      %1416 = vmatpush1.msra.mxu0 0.0
      %1417 = vmatprep.subr.mxu0 0.0
      %1418 = vmatpush1.msra.mxu0 0.0
      %1419 = vmatprep.subr.mxu0 0.0
      %1420 = vmatpush1.msra.mxu0 0.0
      %1421 = vmatprep.mubr.f32.mxu0 0.0
      %1422 = vmatmul.mubr.f32.gmra.mrb[0].mxu0 %v1355
      %v1423 = vpop.f32.mrb[0].mxu0
      %v1424 = vadd.f32 0.0, %v1423
      %v1425 = vpop.f32.mrb[0].mxu0
      %1426 = vdwg.mxu0
      %1428 = vset.pattern.permute.xlu0 0
      %1429 = vperm.xlu0 %1428, %v1424
      %v1430 = vpop.permute.xlu0 %1429
      %v1432 = vmul.f32 %v1430, %v1096
      %v1433 = vadd.f32 %v1000, %v1432
      %v1434 = vmax.f32 %v1433, 0.0
      %v1436 = vsel %vm1101, %v1434, 0
      %1438 = vmatprep.subr.mxu0 0.0
      %1439 = vmatpush1.msra.mxu0 %v837
      %1440 = vmatprep.subr.mxu0 0.0
      %1441 = vmatpush1.msra.mxu0 %v838
      %1442 = vmatprep.subr.mxu0 0.0
      %1443 = vmatpush1.msra.mxu0 0.0
      %1444 = vmatprep.subr.mxu0 0.0
      %1445 = vmatpush1.msra.mxu0 0.0
      %1446 = vmatprep.subr.mxu0 0.0
      %1447 = vmatpush1.msra.mxu0 0.0
      %1448 = vmatprep.subr.mxu0 0.0
      %1449 = vmatpush1.msra.mxu0 0.0
      %1450 = vmatprep.subr.mxu0 0.0
      %1451 = vmatpush1.msra.mxu0 0.0
      %1452 = vmatprep.subr.mxu0 0.0
      %1453 = vmatpush1.msra.mxu0 0.0
      %1454 = vmatprep.subr.mxu0 0.0
      %1455 = vmatpush1.msra.mxu0 0.0
      %1456 = vmatprep.subr.mxu0 0.0
      %1457 = vmatpush1.msra.mxu0 0.0
      %1458 = vmatprep.subr.mxu0 0.0
      %1459 = vmatpush1.msra.mxu0 0.0
      %1460 = vmatprep.subr.mxu0 0.0
      %1461 = vmatpush1.msra.mxu0 0.0
      %1462 = vmatprep.subr.mxu0 0.0
      %1463 = vmatpush1.msra.mxu0 0.0
      %1464 = vmatprep.subr.mxu0 0.0
      %1465 = vmatpush1.msra.mxu0 0.0
      %1466 = vmatprep.subr.mxu0 0.0
      %1467 = vmatpush1.msra.mxu0 0.0
      %1468 = vmatprep.subr.mxu0 0.0
      %1469 = vmatpush1.msra.mxu0 0.0
      %1470 = vmatprep.subr.mxu0 0.0
      %1471 = vmatpush1.msra.mxu0 0.0
      %1472 = vmatprep.subr.mxu0 0.0
      %1473 = vmatpush1.msra.mxu0 0.0
      %1474 = vmatprep.subr.mxu0 0.0
      %1475 = vmatpush1.msra.mxu0 0.0
      %1476 = vmatprep.subr.mxu0 0.0
      %1477 = vmatpush1.msra.mxu0 0.0
      %1478 = vmatprep.subr.mxu0 0.0
      %1479 = vmatpush1.msra.mxu0 0.0
      %1480 = vmatprep.subr.mxu0 0.0
      %1481 = vmatpush1.msra.mxu0 0.0
      %1482 = vmatprep.subr.mxu0 0.0
      %1483 = vmatpush1.msra.mxu0 0.0
      %1484 = vmatprep.subr.mxu0 0.0
      %1485 = vmatpush1.msra.mxu0 0.0
      %1486 = vmatprep.subr.mxu0 0.0
      %1487 = vmatpush1.msra.mxu0 0.0
      %1488 = vmatprep.subr.mxu0 0.0
      %1489 = vmatpush1.msra.mxu0 0.0
      %1490 = vmatprep.subr.mxu0 0.0
      %1491 = vmatpush1.msra.mxu0 0.0
      %1492 = vmatprep.subr.mxu0 0.0
      %1493 = vmatpush1.msra.mxu0 0.0
      %1494 = vmatprep.subr.mxu0 0.0
      %1495 = vmatpush1.msra.mxu0 0.0
      %1496 = vmatprep.subr.mxu0 0.0
      %1497 = vmatpush1.msra.mxu0 0.0
      %1498 = vmatprep.subr.mxu0 0.0
      %1499 = vmatpush1.msra.mxu0 0.0
      %1500 = vmatprep.subr.mxu0 0.0
      %1501 = vmatpush1.msra.mxu0 0.0
      %1502 = vmatprep.mubr.f32.mxu0 0.0
      %1503 = vmatmul.mubr.f32.gmra.mrb[0].mxu0 %v1436
      %v1504 = vpop.f32.mrb[0].mxu0
      %v1505 = vadd.f32 0.0, %v1504
      %v1506 = vpop.f32.mrb[0].mxu0
      %1507 = vdwg.mxu0
      %v1508 = vmax.f32 %v1341, %v1505
      %v1509 = vsel %vm1001, %v1351, inf
      %1510 = vmin.xlane.f32.xlu0 %v1509
      %v1511 = vpop.xlane.xlu0 %1510
      %vm1512 = vcmp.le.f32.partialorder %v1351, %v1511
      %v1513 = vsel %vm1512, %v833, 8.0
      %v1514 = vsel %vm1001, %v1513, inf
      %1515 = vmin.xlane.f32.xlu0 %v1514
      %v1516 = vpop.xlane.xlu0 %1515
      %vm1517 = vcmp.eq.f32.partialorder %v833, %v1516
      %v1518 = vsel %vm1517, 1, 0
      %v1519 = vcvt.s32.f32 %v1518
      %v1521 = vsel %vm1001, %v1519, 0
      %1523 = vmatprep.subr.mxu0 0.0
      %1524 = vmatpush1.msra.mxu0 %v829
      %1525 = vmatprep.subr.mxu0 0.0
      %1526 = vmatpush1.msra.mxu0 0.0
      %1527 = vmatprep.subr.mxu0 0.0
      %1528 = vmatpush1.msra.mxu0 0.0
      %1529 = vmatprep.subr.mxu0 0.0
      %1530 = vmatpush1.msra.mxu0 0.0
      %1531 = vmatprep.subr.mxu0 0.0
      %1532 = vmatpush1.msra.mxu0 0.0
      %1533 = vmatprep.subr.mxu0 0.0
      %1534 = vmatpush1.msra.mxu0 0.0
      %1535 = vmatprep.subr.mxu0 0.0
      %1536 = vmatpush1.msra.mxu0 0.0
      %1537 = vmatprep.subr.mxu0 0.0
      %1538 = vmatpush1.msra.mxu0 0.0
      %1539 = vmatprep.subr.mxu0 0.0
      %1540 = vmatpush1.msra.mxu0 0.0
      %1541 = vmatprep.subr.mxu0 0.0
      %1542 = vmatpush1.msra.mxu0 0.0
      %1543 = vmatprep.subr.mxu0 0.0
      %1544 = vmatpush1.msra.mxu0 0.0
      %1545 = vmatprep.subr.mxu0 0.0
      %1546 = vmatpush1.msra.mxu0 0.0
      %1547 = vmatprep.subr.mxu0 0.0
      %1548 = vmatpush1.msra.mxu0 0.0
      %1549 = vmatprep.subr.mxu0 0.0
      %1550 = vmatpush1.msra.mxu0 0.0
      %1551 = vmatprep.subr.mxu0 0.0
      %1552 = vmatpush1.msra.mxu0 0.0
      %1553 = vmatprep.subr.mxu0 0.0
      %1554 = vmatpush1.msra.mxu0 0.0
      %1555 = vmatprep.subr.mxu0 0.0
      %1556 = vmatpush1.msra.mxu0 0.0
      %1557 = vmatprep.subr.mxu0 0.0
      %1558 = vmatpush1.msra.mxu0 0.0
      %1559 = vmatprep.subr.mxu0 0.0
      %1560 = vmatpush1.msra.mxu0 0.0
      %1561 = vmatprep.subr.mxu0 0.0
      %1562 = vmatpush1.msra.mxu0 0.0
      %1563 = vmatprep.subr.mxu0 0.0
      %1564 = vmatpush1.msra.mxu0 0.0
      %1565 = vmatprep.subr.mxu0 0.0
      %1566 = vmatpush1.msra.mxu0 0.0
      %1567 = vmatprep.subr.mxu0 0.0
      %1568 = vmatpush1.msra.mxu0 0.0
      %1569 = vmatprep.subr.mxu0 0.0
      %1570 = vmatpush1.msra.mxu0 0.0
      %1571 = vmatprep.subr.mxu0 0.0
      %1572 = vmatpush1.msra.mxu0 0.0
      %1573 = vmatprep.subr.mxu0 0.0
      %1574 = vmatpush1.msra.mxu0 0.0
      %1575 = vmatprep.subr.mxu0 0.0
      %1576 = vmatpush1.msra.mxu0 0.0
      %1577 = vmatprep.subr.mxu0 0.0
      %1578 = vmatpush1.msra.mxu0 0.0
      %1579 = vmatprep.subr.mxu0 0.0
      %1580 = vmatpush1.msra.mxu0 0.0
      %1581 = vmatprep.subr.mxu0 0.0
      %1582 = vmatpush1.msra.mxu0 0.0
      %1583 = vmatprep.subr.mxu0 0.0
      %1584 = vmatpush1.msra.mxu0 0.0
      %1585 = vmatprep.subr.mxu0 0.0
      %1586 = vmatpush1.msra.mxu0 0.0
      %1587 = vmatprep.mubr.f32.mxu0 0.0
      %1588 = vmatmul.mubr.f32.gmra.mrb[0].mxu0 %v1521
      %v1589 = vpop.f32.mrb[0].mxu0
      %v1590 = vadd.f32 0.0, %v1589
      %v1591 = vpop.f32.mrb[0].mxu0
      %1592 = vdwg.mxu0
      %1594 = vset.pattern.permute.xlu0 0
      %1595 = vperm.xlu0 %1594, %v1590
      %v1596 = vpop.permute.xlu0 %1595
      %v1598 = vmul.f32 %v1596, %v1096
      %v1599 = vadd.f32 %v1000, %v1598
      %v1600 = vmax.f32 %v1599, 0.0
      %v1602 = vsel %vm1101, %v1600, 0
      %1604 = vmatprep.subr.mxu0 0.0
      %1605 = vmatpush1.msra.mxu0 %v837
      %1606 = vmatprep.subr.mxu0 0.0
      %1607 = vmatpush1.msra.mxu0 %v838
      %1608 = vmatprep.subr.mxu0 0.0
      %1609 = vmatpush1.msra.mxu0 0.0
      %1610 = vmatprep.subr.mxu0 0.0
      %1611 = vmatpush1.msra.mxu0 0.0
      %1612 = vmatprep.subr.mxu0 0.0
      %1613 = vmatpush1.msra.mxu0 0.0
      %1614 = vmatprep.subr.mxu0 0.0
      %1615 = vmatpush1.msra.mxu0 0.0
      %1616 = vmatprep.subr.mxu0 0.0
      %1617 = vmatpush1.msra.mxu0 0.0
      %1618 = vmatprep.subr.mxu0 0.0
      %1619 = vmatpush1.msra.mxu0 0.0
      %1620 = vmatprep.subr.mxu0 0.0
      %1621 = vmatpush1.msra.mxu0 0.0
      %1622 = vmatprep.subr.mxu0 0.0
      %1623 = vmatpush1.msra.mxu0 0.0
      %1624 = vmatprep.subr.mxu0 0.0
      %1625 = vmatpush1.msra.mxu0 0.0
      %1626 = vmatprep.subr.mxu0 0.0
      %1627 = vmatpush1.msra.mxu0 0.0
      %1628 = vmatprep.subr.mxu0 0.0
      %1629 = vmatpush1.msra.mxu0 0.0
      %1630 = vmatprep.subr.mxu0 0.0
      %1631 = vmatpush1.msra.mxu0 0.0
      %1632 = vmatprep.subr.mxu0 0.0
      %1633 = vmatpush1.msra.mxu0 0.0
      %1634 = vmatprep.subr.mxu0 0.0
      %1635 = vmatpush1.msra.mxu0 0.0
      %1636 = vmatprep.subr.mxu0 0.0
      %1637 = vmatpush1.msra.mxu0 0.0
      %1638 = vmatprep.subr.mxu0 0.0
      %1639 = vmatpush1.msra.mxu0 0.0
      %1640 = vmatprep.subr.mxu0 0.0
      %1641 = vmatpush1.msra.mxu0 0.0
      %1642 = vmatprep.subr.mxu0 0.0
      %1643 = vmatpush1.msra.mxu0 0.0
      %1644 = vmatprep.subr.mxu0 0.0
      %1645 = vmatpush1.msra.mxu0 0.0
      %1646 = vmatprep.subr.mxu0 0.0
      %1647 = vmatpush1.msra.mxu0 0.0
      %1648 = vmatprep.subr.mxu0 0.0
      %1649 = vmatpush1.msra.mxu0 0.0
      %1650 = vmatprep.subr.mxu0 0.0
      %1651 = vmatpush1.msra.mxu0 0.0
      %1652 = vmatprep.subr.mxu0 0.0
      %1653 = vmatpush1.msra.mxu0 0.0
      %1654 = vmatprep.subr.mxu0 0.0
      %1655 = vmatpush1.msra.mxu0 0.0
      %1656 = vmatprep.subr.mxu0 0.0
      %1657 = vmatpush1.msra.mxu0 0.0
      %1658 = vmatprep.subr.mxu0 0.0
      %1659 = vmatpush1.msra.mxu0 0.0
      %1660 = vmatprep.subr.mxu0 0.0
      %1661 = vmatpush1.msra.mxu0 0.0
      %1662 = vmatprep.subr.mxu0 0.0
      %1663 = vmatpush1.msra.mxu0 0.0
      %1664 = vmatprep.subr.mxu0 0.0
      %1665 = vmatpush1.msra.mxu0 0.0
      %1666 = vmatprep.subr.mxu0 0.0
      %1667 = vmatpush1.msra.mxu0 0.0
      %1668 = vmatprep.mubr.f32.mxu0 0.0
      %1669 = vmatmul.mubr.f32.gmra.mrb[0].mxu0 %v1602
      %v1670 = vpop.f32.mrb[0].mxu0
      %v1671 = vadd.f32 0.0, %v1670
      %v1672 = vpop.f32.mrb[0].mxu0
      %1673 = vdwg.mxu0
      %v1674 = vmax.f32 %v1508, %v1671
      %v1676 = vlaneseq
      %v1677 = vshrl.u32 %v1676, 7
      %v1678 = vsub.s32 0, %v1677
      %v1679 = vrot.slane %v839, %v1678
      %v1681 = vadd.f32 %v1674, %v1679
      %v1682 = vld [vmem:[%s7] sm:$0xff]
      %v1683 = vld [vmem:[%s7 + $0x8] sm:$0xff]
      %v1684 = vld [vmem:[%s8] sm:$0xff]
      %v1685 = vld [vmem:[%s8 + $0x8] sm:$0xff]
      %v1686 = vld [vmem:[%s9] sm:$0x1]
      %v1687 = vld [vmem:[%s10] sm:$0xff]
      %v1688 = vld [vmem:[%s10 + $0x8] sm:$0xff]
      %v1689 = vld [vmem:[%s11] sm:$0x1]
      %v1690 = vmul.f32 %v1681, %v1681
      %v1691 = vsel %vm1101, %v1690, 0.0
      %1692 = vadd.xlane.f32.xlu0 %v1691
      %v1693 = vpop.xlane.xlu0 %1692
      %v1694 = vsel %vm1101, 1.0, 0
      %v1697 = vsel %vm1101, %v1690, 0
      %1699 = vmatprep.subr.mxu0 0.0
      %1700 = vmatpush1.xpose.msra.mxu0 %v1697
      %1701 = vmatprep.subr.mxu0 0.0
      %1702 = vmatpush1.xpose.msra.mxu0 0.0
      %1703 = vmatprep.subr.mxu0 0.0
      %1704 = vmatpush1.xpose.msra.mxu0 0.0
      %1705 = vmatprep.subr.mxu0 0.0
      %1706 = vmatpush1.xpose.msra.mxu0 0.0
      %1707 = vmatprep.subr.mxu0 0.0
      %1708 = vmatpush1.xpose.msra.mxu0 0.0
      %1709 = vmatprep.subr.mxu0 0.0
      %1710 = vmatpush1.xpose.msra.mxu0 0.0
      %1711 = vmatprep.subr.mxu0 0.0
      %1712 = vmatpush1.xpose.msra.mxu0 0.0
      %1713 = vmatprep.subr.mxu0 0.0
      %1714 = vmatpush1.xpose.msra.mxu0 0.0
      %1715 = vmatprep.subr.mxu0 0.0
      %1716 = vmatpush1.xpose.msra.mxu0 0.0
      %1717 = vmatprep.subr.mxu0 0.0
      %1718 = vmatpush1.xpose.msra.mxu0 0.0
      %1719 = vmatprep.subr.mxu0 0.0
      %1720 = vmatpush1.xpose.msra.mxu0 0.0
      %1721 = vmatprep.subr.mxu0 0.0
      %1722 = vmatpush1.xpose.msra.mxu0 0.0
      %1723 = vmatprep.subr.mxu0 0.0
      %1724 = vmatpush1.xpose.msra.mxu0 0.0
      %1725 = vmatprep.subr.mxu0 0.0
      %1726 = vmatpush1.xpose.msra.mxu0 0.0
      %1727 = vmatprep.subr.mxu0 0.0
      %1728 = vmatpush1.xpose.msra.mxu0 0.0
      %1729 = vmatprep.subr.mxu0 0.0
      %1730 = vmatpush1.xpose.msra.mxu0 0.0
      %1731 = vmatprep.subr.mxu0 0.0
      %1732 = vmatpush1.xpose.msra.mxu0 0.0
      %1733 = vmatprep.subr.mxu0 0.0
      %1734 = vmatpush1.xpose.msra.mxu0 0.0
      %1735 = vmatprep.subr.mxu0 0.0
      %1736 = vmatpush1.xpose.msra.mxu0 0.0
      %1737 = vmatprep.subr.mxu0 0.0
      %1738 = vmatpush1.xpose.msra.mxu0 0.0
      %1739 = vmatprep.subr.mxu0 0.0
      %1740 = vmatpush1.xpose.msra.mxu0 0.0
      %1741 = vmatprep.subr.mxu0 0.0
      %1742 = vmatpush1.xpose.msra.mxu0 0.0
      %1743 = vmatprep.subr.mxu0 0.0
      %1744 = vmatpush1.xpose.msra.mxu0 0.0
      %1745 = vmatprep.subr.mxu0 0.0
      %1746 = vmatpush1.xpose.msra.mxu0 0.0
      %1747 = vmatprep.subr.mxu0 0.0
      %1748 = vmatpush1.xpose.msra.mxu0 0.0
      %1749 = vmatprep.subr.mxu0 0.0
      %1750 = vmatpush1.xpose.msra.mxu0 0.0
      %1751 = vmatprep.subr.mxu0 0.0
      %1752 = vmatpush1.xpose.msra.mxu0 0.0
      %1753 = vmatprep.subr.mxu0 0.0
      %1754 = vmatpush1.xpose.msra.mxu0 0.0
      %1755 = vmatprep.subr.mxu0 0.0
      %1756 = vmatpush1.xpose.msra.mxu0 0.0
      %1757 = vmatprep.subr.mxu0 0.0
      %1758 = vmatpush1.xpose.msra.mxu0 0.0
      %1759 = vmatprep.subr.mxu0 0.0
      %1760 = vmatpush1.xpose.msra.mxu0 0.0
      %1761 = vmatprep.subr.mxu0 0.0
      %1762 = vmatpush1.xpose.msra.mxu0 0.0
      %1763 = vmatprep.mubr.f32.mxu0 0.0
      %1764 = vmatmul.mubr.f32.gmra.mrb[0].mxu0 %v1694
      %v1765 = vpop.f32.mrb[0].mxu0
      %v1766 = vadd.f32 0.0, %v1765
      %v1767 = vpop.f32.mrb[0].mxu0
      %1768 = vdwg.mxu0
      %v1769 = vpack.c.bf16 %v1681, %v1681
      %v1771 = vsel %vm1101, %v1769, 0
      %1773 = vmatprep.subr.bf16.mxu0 0
      %1774 = vmatpush1.bf16.xpose.msra.mxu0 %v1771
      %1775 = vmatprep.subr.bf16.mxu0 0
      %1776 = vmatpush1.bf16.xpose.msra.mxu0 0
      %1777 = vmatprep.subr.bf16.mxu0 0
      %1778 = vmatpush1.bf16.xpose.msra.mxu0 0
      %1779 = vmatprep.subr.bf16.mxu0 0
      %1780 = vmatpush1.bf16.xpose.msra.mxu0 0
      %1781 = vmatprep.subr.bf16.mxu0 0
      %1782 = vmatpush1.bf16.xpose.msra.mxu0 0
      %1783 = vmatprep.subr.bf16.mxu0 0
      %1784 = vmatpush1.bf16.xpose.msra.mxu0 0
      %1785 = vmatprep.subr.bf16.mxu0 0
      %1786 = vmatpush1.bf16.xpose.msra.mxu0 0
      %1787 = vmatprep.subr.bf16.mxu0 0
      %1788 = vmatpush1.bf16.xpose.msra.mxu0 0
      %1789 = vmatprep.subr.bf16.mxu0 0
      %1790 = vmatpush1.bf16.xpose.msra.mxu0 0
      %1791 = vmatprep.subr.bf16.mxu0 0
      %1792 = vmatpush1.bf16.xpose.msra.mxu0 0
      %1793 = vmatprep.subr.bf16.mxu0 0
      %1794 = vmatpush1.bf16.xpose.msra.mxu0 0
      %1795 = vmatprep.subr.bf16.mxu0 0
      %1796 = vmatpush1.bf16.xpose.msra.mxu0 0
      %1797 = vmatprep.subr.bf16.mxu0 0
      %1798 = vmatpush1.bf16.xpose.msra.mxu0 0
      %1799 = vmatprep.subr.bf16.mxu0 0
      %1800 = vmatpush1.bf16.xpose.msra.mxu0 0
      %1801 = vmatprep.subr.bf16.mxu0 0
      %1802 = vmatpush1.bf16.xpose.msra.mxu0 0
      %1803 = vmatprep.subr.bf16.mxu0 0
      %1804 = vmatpush1.bf16.xpose.msra.mxu0 0
      %1805 = vmatprep.mubr.bf16.mxu0 0
      %1806 = vmatmul.mubr.bf16.gmra.mrb[0].mxu0 %v1771
      %v1807 = vpop.f32.mrb[0].mxu0
      %v1808 = vadd.f32 0.0, %v1807
      %v1809 = vpop.f32.mrb[0].mxu0
      %v1810 = vpop.f32.mrb[0].mxu0
      %v1811 = vpop.f32.mrb[0].mxu0
      %1812 = vdwg.mxu0
      %v1813 = vlaneseq
      %v1814 = vshrl.u32 %v1813, 7
      %v1815 = vsub.s32 0, %v1814
      %v1816 = vrot.slane %v1766, %v1815
      %v1817 = vadd.f32 %v1693, %v1816
      %v1818 = vmul.f32 %v1808, 2.0
      %v1819 = vsub.f32 %v1817, %v1818
      %v1820 = vadd.f32 %v1819, %v979
      %v1822 = vlaneseq
      %v1823 = vshrl.u32 %v1822, 7
      %v1824 = vsub.s32 0, %v1823
      %v1825 = vrot.slane %v1686, %v1824
      %v1828 = vsel %vm1101, %v1681, 0
      %1830 = vmatprep.subr.mxu0 0.0
      %1831 = vmatpush1.msra.mxu0 %v1682
      %1832 = vmatprep.subr.mxu0 0.0
      %1833 = vmatpush1.msra.mxu0 %v1683
      %1834 = vmatprep.subr.mxu0 0.0
      %1835 = vmatpush1.msra.mxu0 0.0
      %1836 = vmatprep.subr.mxu0 0.0
      %1837 = vmatpush1.msra.mxu0 0.0
      %1838 = vmatprep.subr.mxu0 0.0
      %1839 = vmatpush1.msra.mxu0 0.0
      %1840 = vmatprep.subr.mxu0 0.0
      %1841 = vmatpush1.msra.mxu0 0.0
      %1842 = vmatprep.subr.mxu0 0.0
      %1843 = vmatpush1.msra.mxu0 0.0
      %1844 = vmatprep.subr.mxu0 0.0
      %1845 = vmatpush1.msra.mxu0 0.0
      %1846 = vmatprep.subr.mxu0 0.0
      %1847 = vmatpush1.msra.mxu0 0.0
      %1848 = vmatprep.subr.mxu0 0.0
      %1849 = vmatpush1.msra.mxu0 0.0
      %1850 = vmatprep.subr.mxu0 0.0
      %1851 = vmatpush1.msra.mxu0 0.0
      %1852 = vmatprep.subr.mxu0 0.0
      %1853 = vmatpush1.msra.mxu0 0.0
      %1854 = vmatprep.subr.mxu0 0.0
      %1855 = vmatpush1.msra.mxu0 0.0
      %1856 = vmatprep.subr.mxu0 0.0
      %1857 = vmatpush1.msra.mxu0 0.0
      %1858 = vmatprep.subr.mxu0 0.0
      %1859 = vmatpush1.msra.mxu0 0.0
      %1860 = vmatprep.subr.mxu0 0.0
      %1861 = vmatpush1.msra.mxu0 0.0
      %1862 = vmatprep.subr.mxu0 0.0
      %1863 = vmatpush1.msra.mxu0 0.0
      %1864 = vmatprep.subr.mxu0 0.0
      %1865 = vmatpush1.msra.mxu0 0.0
      %1866 = vmatprep.subr.mxu0 0.0
      %1867 = vmatpush1.msra.mxu0 0.0
      %1868 = vmatprep.subr.mxu0 0.0
      %1869 = vmatpush1.msra.mxu0 0.0
      %1870 = vmatprep.subr.mxu0 0.0
      %1871 = vmatpush1.msra.mxu0 0.0
      %1872 = vmatprep.subr.mxu0 0.0
      %1873 = vmatpush1.msra.mxu0 0.0
      %1874 = vmatprep.subr.mxu0 0.0
      %1875 = vmatpush1.msra.mxu0 0.0
      %1876 = vmatprep.subr.mxu0 0.0
      %1877 = vmatpush1.msra.mxu0 0.0
      %1878 = vmatprep.subr.mxu0 0.0
      %1879 = vmatpush1.msra.mxu0 0.0
      %1880 = vmatprep.subr.mxu0 0.0
      %1881 = vmatpush1.msra.mxu0 0.0
      %1882 = vmatprep.subr.mxu0 0.0
      %1883 = vmatpush1.msra.mxu0 0.0
      %1884 = vmatprep.subr.mxu0 0.0
      %1885 = vmatpush1.msra.mxu0 0.0
      %1886 = vmatprep.subr.mxu0 0.0
      %1887 = vmatpush1.msra.mxu0 0.0
      %1888 = vmatprep.subr.mxu0 0.0
      %1889 = vmatpush1.msra.mxu0 0.0
      %1890 = vmatprep.subr.mxu0 0.0
      %1891 = vmatpush1.msra.mxu0 0.0
      %1892 = vmatprep.subr.mxu0 0.0
      %1893 = vmatpush1.msra.mxu0 0.0
      %1894 = vmatprep.mubr.f32.mxu0 0.0
      %1895 = vmatmul.mubr.f32.gmra.mrb[0].mxu0 %v1828
      %v1896 = vpop.f32.mrb[0].mxu0
      %v1897 = vadd.f32 %v1825, %v1896
      %v1898 = vpop.f32.mrb[0].mxu0
      %1899 = vdwg.mxu0
      %v1900 = vsel %vm1001, %v1820, inf
      %1901 = vmin.xlane.f32.xlu0 %v1900
      %v1902 = vpop.xlane.xlu0 %1901
      %vm1903 = vcmp.le.f32.partialorder %v1820, %v1902
      %v1904 = vsel %vm1903, %v833, 8.0
      %v1905 = vsel %vm1001, %v1904, inf
      %1906 = vmin.xlane.f32.xlu0 %v1905
      %v1907 = vpop.xlane.xlu0 %1906
      %vm1908 = vcmp.eq.f32.partialorder %v833, %v1907
      %v1909 = vsel %vm1908, 1e+30, %v1820
      %v1910 = vsel %vm1908, 1, 0
      %v1911 = vcvt.s32.f32 %v1910
      %v1913 = vsel %vm1001, %v1911, 0
      %1915 = vmatprep.subr.mxu0 0.0
      %1916 = vmatpush1.msra.mxu0 %v1681
      %1917 = vmatprep.subr.mxu0 0.0
      %1918 = vmatpush1.msra.mxu0 0.0
      %1919 = vmatprep.subr.mxu0 0.0
      %1920 = vmatpush1.msra.mxu0 0.0
      %1921 = vmatprep.subr.mxu0 0.0
      %1922 = vmatpush1.msra.mxu0 0.0
      %1923 = vmatprep.subr.mxu0 0.0
      %1924 = vmatpush1.msra.mxu0 0.0
      %1925 = vmatprep.subr.mxu0 0.0
      %1926 = vmatpush1.msra.mxu0 0.0
      %1927 = vmatprep.subr.mxu0 0.0
      %1928 = vmatpush1.msra.mxu0 0.0
      %1929 = vmatprep.subr.mxu0 0.0
      %1930 = vmatpush1.msra.mxu0 0.0
      %1931 = vmatprep.subr.mxu0 0.0
      %1932 = vmatpush1.msra.mxu0 0.0
      %1933 = vmatprep.subr.mxu0 0.0
      %1934 = vmatpush1.msra.mxu0 0.0
      %1935 = vmatprep.subr.mxu0 0.0
      %1936 = vmatpush1.msra.mxu0 0.0
      %1937 = vmatprep.subr.mxu0 0.0
      %1938 = vmatpush1.msra.mxu0 0.0
      %1939 = vmatprep.subr.mxu0 0.0
      %1940 = vmatpush1.msra.mxu0 0.0
      %1941 = vmatprep.subr.mxu0 0.0
      %1942 = vmatpush1.msra.mxu0 0.0
      %1943 = vmatprep.subr.mxu0 0.0
      %1944 = vmatpush1.msra.mxu0 0.0
      %1945 = vmatprep.subr.mxu0 0.0
      %1946 = vmatpush1.msra.mxu0 0.0
      %1947 = vmatprep.subr.mxu0 0.0
      %1948 = vmatpush1.msra.mxu0 0.0
      %1949 = vmatprep.subr.mxu0 0.0
      %1950 = vmatpush1.msra.mxu0 0.0
      %1951 = vmatprep.subr.mxu0 0.0
      %1952 = vmatpush1.msra.mxu0 0.0
      %1953 = vmatprep.subr.mxu0 0.0
      %1954 = vmatpush1.msra.mxu0 0.0
      %1955 = vmatprep.subr.mxu0 0.0
      %1956 = vmatpush1.msra.mxu0 0.0
      %1957 = vmatprep.subr.mxu0 0.0
      %1958 = vmatpush1.msra.mxu0 0.0
      %1959 = vmatprep.subr.mxu0 0.0
      %1960 = vmatpush1.msra.mxu0 0.0
      %1961 = vmatprep.subr.mxu0 0.0
      %1962 = vmatpush1.msra.mxu0 0.0
      %1963 = vmatprep.subr.mxu0 0.0
      %1964 = vmatpush1.msra.mxu0 0.0
      %1965 = vmatprep.subr.mxu0 0.0
      %1966 = vmatpush1.msra.mxu0 0.0
      %1967 = vmatprep.subr.mxu0 0.0
      %1968 = vmatpush1.msra.mxu0 0.0
      %1969 = vmatprep.subr.mxu0 0.0
      %1970 = vmatpush1.msra.mxu0 0.0
      %1971 = vmatprep.subr.mxu0 0.0
      %1972 = vmatpush1.msra.mxu0 0.0
      %1973 = vmatprep.subr.mxu0 0.0
      %1974 = vmatpush1.msra.mxu0 0.0
      %1975 = vmatprep.subr.mxu0 0.0
      %1976 = vmatpush1.msra.mxu0 0.0
      %1977 = vmatprep.subr.mxu0 0.0
      %1978 = vmatpush1.msra.mxu0 0.0
      %1979 = vmatprep.mubr.f32.mxu0 0.0
      %1980 = vmatmul.mubr.f32.gmra.mrb[0].mxu0 %v1913
      %v1981 = vpop.f32.mrb[0].mxu0
      %v1982 = vadd.f32 0.0, %v1981
      %v1983 = vpop.f32.mrb[0].mxu0
      %1984 = vdwg.mxu0
      %v1986 = vsel %vm1101, %v1982, 0
      %1988 = vmatprep.subr.mxu0 0.0
      %1989 = vmatpush1.msra.mxu0 %v1684
      %1990 = vmatprep.subr.mxu0 0.0
      %1991 = vmatpush1.msra.mxu0 %v1685
      %1992 = vmatprep.subr.mxu0 0.0
      %1993 = vmatpush1.msra.mxu0 0.0
      %1994 = vmatprep.subr.mxu0 0.0
      %1995 = vmatpush1.msra.mxu0 0.0
      %1996 = vmatprep.subr.mxu0 0.0
      %1997 = vmatpush1.msra.mxu0 0.0
      %1998 = vmatprep.subr.mxu0 0.0
      %1999 = vmatpush1.msra.mxu0 0.0
      %2000 = vmatprep.subr.mxu0 0.0
      %2001 = vmatpush1.msra.mxu0 0.0
      %2002 = vmatprep.subr.mxu0 0.0
      %2003 = vmatpush1.msra.mxu0 0.0
      %2004 = vmatprep.subr.mxu0 0.0
      %2005 = vmatpush1.msra.mxu0 0.0
      %2006 = vmatprep.subr.mxu0 0.0
      %2007 = vmatpush1.msra.mxu0 0.0
      %2008 = vmatprep.subr.mxu0 0.0
      %2009 = vmatpush1.msra.mxu0 0.0
      %2010 = vmatprep.subr.mxu0 0.0
      %2011 = vmatpush1.msra.mxu0 0.0
      %2012 = vmatprep.subr.mxu0 0.0
      %2013 = vmatpush1.msra.mxu0 0.0
      %2014 = vmatprep.subr.mxu0 0.0
      %2015 = vmatpush1.msra.mxu0 0.0
      %2016 = vmatprep.subr.mxu0 0.0
      %2017 = vmatpush1.msra.mxu0 0.0
      %2018 = vmatprep.subr.mxu0 0.0
      %2019 = vmatpush1.msra.mxu0 0.0
      %2020 = vmatprep.subr.mxu0 0.0
      %2021 = vmatpush1.msra.mxu0 0.0
      %2022 = vmatprep.subr.mxu0 0.0
      %2023 = vmatpush1.msra.mxu0 0.0
      %2024 = vmatprep.subr.mxu0 0.0
      %2025 = vmatpush1.msra.mxu0 0.0
      %2026 = vmatprep.subr.mxu0 0.0
      %2027 = vmatpush1.msra.mxu0 0.0
      %2028 = vmatprep.subr.mxu0 0.0
      %2029 = vmatpush1.msra.mxu0 0.0
      %2030 = vmatprep.subr.mxu0 0.0
      %2031 = vmatpush1.msra.mxu0 0.0
      %2032 = vmatprep.subr.mxu0 0.0
      %2033 = vmatpush1.msra.mxu0 0.0
      %2034 = vmatprep.subr.mxu0 0.0
      %2035 = vmatpush1.msra.mxu0 0.0
      %2036 = vmatprep.subr.mxu0 0.0
      %2037 = vmatpush1.msra.mxu0 0.0
      %2038 = vmatprep.subr.mxu0 0.0
      %2039 = vmatpush1.msra.mxu0 0.0
      %2040 = vmatprep.subr.mxu0 0.0
      %2041 = vmatpush1.msra.mxu0 0.0
      %2042 = vmatprep.subr.mxu0 0.0
      %2043 = vmatpush1.msra.mxu0 0.0
      %2044 = vmatprep.subr.mxu0 0.0
      %2045 = vmatpush1.msra.mxu0 0.0
      %2046 = vmatprep.subr.mxu0 0.0
      %2047 = vmatpush1.msra.mxu0 0.0
      %2048 = vmatprep.subr.mxu0 0.0
      %2049 = vmatpush1.msra.mxu0 0.0
      %2050 = vmatprep.subr.mxu0 0.0
      %2051 = vmatpush1.msra.mxu0 0.0
      %2052 = vmatprep.mubr.f32.mxu0 0.0
      %2053 = vmatmul.mubr.f32.gmra.mrb[0].mxu0 %v1986
      %v2054 = vpop.f32.mrb[0].mxu0
      %v2055 = vadd.f32 0.0, %v2054
      %v2056 = vpop.f32.mrb[0].mxu0
      %2057 = vdwg.mxu0
      %v2058 = vadd.f32 %v1897, %v2055
      %v2059 = vmax.f32 %v2058, 0.0
      %v2061 = vsel %vm1101, %v2059, 0
      %2063 = vmatprep.subr.mxu0 0.0
      %2064 = vmatpush1.msra.mxu0 %v1687
      %2065 = vmatprep.subr.mxu0 0.0
      %2066 = vmatpush1.msra.mxu0 %v1688
      %2067 = vmatprep.subr.mxu0 0.0
      %2068 = vmatpush1.msra.mxu0 0.0
      %2069 = vmatprep.subr.mxu0 0.0
      %2070 = vmatpush1.msra.mxu0 0.0
      %2071 = vmatprep.subr.mxu0 0.0
      %2072 = vmatpush1.msra.mxu0 0.0
      %2073 = vmatprep.subr.mxu0 0.0
      %2074 = vmatpush1.msra.mxu0 0.0
      %2075 = vmatprep.subr.mxu0 0.0
      %2076 = vmatpush1.msra.mxu0 0.0
      %2077 = vmatprep.subr.mxu0 0.0
      %2078 = vmatpush1.msra.mxu0 0.0
      %2079 = vmatprep.subr.mxu0 0.0
      %2080 = vmatpush1.msra.mxu0 0.0
      %2081 = vmatprep.subr.mxu0 0.0
      %2082 = vmatpush1.msra.mxu0 0.0
      %2083 = vmatprep.subr.mxu0 0.0
      %2084 = vmatpush1.msra.mxu0 0.0
      %2085 = vmatprep.subr.mxu0 0.0
      %2086 = vmatpush1.msra.mxu0 0.0
      %2087 = vmatprep.subr.mxu0 0.0
      %2088 = vmatpush1.msra.mxu0 0.0
      %2089 = vmatprep.subr.mxu0 0.0
      %2090 = vmatpush1.msra.mxu0 0.0
      %2091 = vmatprep.subr.mxu0 0.0
      %2092 = vmatpush1.msra.mxu0 0.0
      %2093 = vmatprep.subr.mxu0 0.0
      %2094 = vmatpush1.msra.mxu0 0.0
      %2095 = vmatprep.subr.mxu0 0.0
      %2096 = vmatpush1.msra.mxu0 0.0
      %2097 = vmatprep.subr.mxu0 0.0
      %2098 = vmatpush1.msra.mxu0 0.0
      %2099 = vmatprep.subr.mxu0 0.0
      %2100 = vmatpush1.msra.mxu0 0.0
      %2101 = vmatprep.subr.mxu0 0.0
      %2102 = vmatpush1.msra.mxu0 0.0
      %2103 = vmatprep.subr.mxu0 0.0
      %2104 = vmatpush1.msra.mxu0 0.0
      %2105 = vmatprep.subr.mxu0 0.0
      %2106 = vmatpush1.msra.mxu0 0.0
      %2107 = vmatprep.subr.mxu0 0.0
      %2108 = vmatpush1.msra.mxu0 0.0
      %2109 = vmatprep.subr.mxu0 0.0
      %2110 = vmatpush1.msra.mxu0 0.0
      %2111 = vmatprep.subr.mxu0 0.0
      %2112 = vmatpush1.msra.mxu0 0.0
      %2113 = vmatprep.subr.mxu0 0.0
      %2114 = vmatpush1.msra.mxu0 0.0
      %2115 = vmatprep.subr.mxu0 0.0
      %2116 = vmatpush1.msra.mxu0 0.0
      %2117 = vmatprep.subr.mxu0 0.0
      %2118 = vmatpush1.msra.mxu0 0.0
      %2119 = vmatprep.subr.mxu0 0.0
      %2120 = vmatpush1.msra.mxu0 0.0
      %2121 = vmatprep.subr.mxu0 0.0
      %2122 = vmatpush1.msra.mxu0 0.0
      %2123 = vmatprep.subr.mxu0 0.0
      %2124 = vmatpush1.msra.mxu0 0.0
      %2125 = vmatprep.subr.mxu0 0.0
      %2126 = vmatpush1.msra.mxu0 0.0
      %2127 = vmatprep.mubr.f32.mxu0 0.0
      %2128 = vmatmul.mubr.f32.gmra.mrb[0].mxu0 %v2061
      %v2129 = vpop.f32.mrb[0].mxu0
      %v2130 = vadd.f32 0.0, %v2129
      %v2131 = vpop.f32.mrb[0].mxu0
      %2132 = vdwg.mxu0
      %v2133 = vsel %vm1001, %v1909, inf
      %2134 = vmin.xlane.f32.xlu0 %v2133
      %v2135 = vpop.xlane.xlu0 %2134
      %vm2136 = vcmp.le.f32.partialorder %v1909, %v2135
      %v2137 = vsel %vm2136, %v833, 8.0
      %v2138 = vsel %vm1001, %v2137, inf
      %2139 = vmin.xlane.f32.xlu0 %v2138
      %v2140 = vpop.xlane.xlu0 %2139
      %vm2141 = vcmp.eq.f32.partialorder %v833, %v2140
      %v2142 = vsel %vm2141, 1e+30, %v1909
      %v2143 = vsel %vm2141, 1, 0
      %v2144 = vcvt.s32.f32 %v2143
      %v2146 = vsel %vm1001, %v2144, 0
      %2148 = vmatprep.subr.mxu0 0.0
      %2149 = vmatpush1.msra.mxu0 %v1681
      %2150 = vmatprep.subr.mxu0 0.0
      %2151 = vmatpush1.msra.mxu0 0.0
      %2152 = vmatprep.subr.mxu0 0.0
      %2153 = vmatpush1.msra.mxu0 0.0
      %2154 = vmatprep.subr.mxu0 0.0
      %2155 = vmatpush1.msra.mxu0 0.0
      %2156 = vmatprep.subr.mxu0 0.0
      %2157 = vmatpush1.msra.mxu0 0.0
      %2158 = vmatprep.subr.mxu0 0.0
      %2159 = vmatpush1.msra.mxu0 0.0
      %2160 = vmatprep.subr.mxu0 0.0
      %2161 = vmatpush1.msra.mxu0 0.0
      %2162 = vmatprep.subr.mxu0 0.0
      %2163 = vmatpush1.msra.mxu0 0.0
      %2164 = vmatprep.subr.mxu0 0.0
      %2165 = vmatpush1.msra.mxu0 0.0
      %2166 = vmatprep.subr.mxu0 0.0
      %2167 = vmatpush1.msra.mxu0 0.0
      %2168 = vmatprep.subr.mxu0 0.0
      %2169 = vmatpush1.msra.mxu0 0.0
      %2170 = vmatprep.subr.mxu0 0.0
      %2171 = vmatpush1.msra.mxu0 0.0
      %2172 = vmatprep.subr.mxu0 0.0
      %2173 = vmatpush1.msra.mxu0 0.0
      %2174 = vmatprep.subr.mxu0 0.0
      %2175 = vmatpush1.msra.mxu0 0.0
      %2176 = vmatprep.subr.mxu0 0.0
      %2177 = vmatpush1.msra.mxu0 0.0
      %2178 = vmatprep.subr.mxu0 0.0
      %2179 = vmatpush1.msra.mxu0 0.0
      %2180 = vmatprep.subr.mxu0 0.0
      %2181 = vmatpush1.msra.mxu0 0.0
      %2182 = vmatprep.subr.mxu0 0.0
      %2183 = vmatpush1.msra.mxu0 0.0
      %2184 = vmatprep.subr.mxu0 0.0
      %2185 = vmatpush1.msra.mxu0 0.0
      %2186 = vmatprep.subr.mxu0 0.0
      %2187 = vmatpush1.msra.mxu0 0.0
      %2188 = vmatprep.subr.mxu0 0.0
      %2189 = vmatpush1.msra.mxu0 0.0
      %2190 = vmatprep.subr.mxu0 0.0
      %2191 = vmatpush1.msra.mxu0 0.0
      %2192 = vmatprep.subr.mxu0 0.0
      %2193 = vmatpush1.msra.mxu0 0.0
      %2194 = vmatprep.subr.mxu0 0.0
      %2195 = vmatpush1.msra.mxu0 0.0
      %2196 = vmatprep.subr.mxu0 0.0
      %2197 = vmatpush1.msra.mxu0 0.0
      %2198 = vmatprep.subr.mxu0 0.0
      %2199 = vmatpush1.msra.mxu0 0.0
      %2200 = vmatprep.subr.mxu0 0.0
      %2201 = vmatpush1.msra.mxu0 0.0
      %2202 = vmatprep.subr.mxu0 0.0
      %2203 = vmatpush1.msra.mxu0 0.0
      %2204 = vmatprep.subr.mxu0 0.0
      %2205 = vmatpush1.msra.mxu0 0.0
      %2206 = vmatprep.subr.mxu0 0.0
      %2207 = vmatpush1.msra.mxu0 0.0
      %2208 = vmatprep.subr.mxu0 0.0
      %2209 = vmatpush1.msra.mxu0 0.0
      %2210 = vmatprep.subr.mxu0 0.0
      %2211 = vmatpush1.msra.mxu0 0.0
      %2212 = vmatprep.mubr.f32.mxu0 0.0
      %2213 = vmatmul.mubr.f32.gmra.mrb[0].mxu0 %v2146
      %v2214 = vpop.f32.mrb[0].mxu0
      %v2215 = vadd.f32 0.0, %v2214
      %v2216 = vpop.f32.mrb[0].mxu0
      %2217 = vdwg.mxu0
      %v2219 = vsel %vm1101, %v2215, 0
      %2221 = vmatprep.subr.mxu0 0.0
      %2222 = vmatpush1.msra.mxu0 %v1684
      %2223 = vmatprep.subr.mxu0 0.0
      %2224 = vmatpush1.msra.mxu0 %v1685
      %2225 = vmatprep.subr.mxu0 0.0
      %2226 = vmatpush1.msra.mxu0 0.0
      %2227 = vmatprep.subr.mxu0 0.0
      %2228 = vmatpush1.msra.mxu0 0.0
      %2229 = vmatprep.subr.mxu0 0.0
      %2230 = vmatpush1.msra.mxu0 0.0
      %2231 = vmatprep.subr.mxu0 0.0
      %2232 = vmatpush1.msra.mxu0 0.0
      %2233 = vmatprep.subr.mxu0 0.0
      %2234 = vmatpush1.msra.mxu0 0.0
      %2235 = vmatprep.subr.mxu0 0.0
      %2236 = vmatpush1.msra.mxu0 0.0
      %2237 = vmatprep.subr.mxu0 0.0
      %2238 = vmatpush1.msra.mxu0 0.0
      %2239 = vmatprep.subr.mxu0 0.0
      %2240 = vmatpush1.msra.mxu0 0.0
      %2241 = vmatprep.subr.mxu0 0.0
      %2242 = vmatpush1.msra.mxu0 0.0
      %2243 = vmatprep.subr.mxu0 0.0
      %2244 = vmatpush1.msra.mxu0 0.0
      %2245 = vmatprep.subr.mxu0 0.0
      %2246 = vmatpush1.msra.mxu0 0.0
      %2247 = vmatprep.subr.mxu0 0.0
      %2248 = vmatpush1.msra.mxu0 0.0
      %2249 = vmatprep.subr.mxu0 0.0
      %2250 = vmatpush1.msra.mxu0 0.0
      %2251 = vmatprep.subr.mxu0 0.0
      %2252 = vmatpush1.msra.mxu0 0.0
      %2253 = vmatprep.subr.mxu0 0.0
      %2254 = vmatpush1.msra.mxu0 0.0
      %2255 = vmatprep.subr.mxu0 0.0
      %2256 = vmatpush1.msra.mxu0 0.0
      %2257 = vmatprep.subr.mxu0 0.0
      %2258 = vmatpush1.msra.mxu0 0.0
      %2259 = vmatprep.subr.mxu0 0.0
      %2260 = vmatpush1.msra.mxu0 0.0
      %2261 = vmatprep.subr.mxu0 0.0
      %2262 = vmatpush1.msra.mxu0 0.0
      %2263 = vmatprep.subr.mxu0 0.0
      %2264 = vmatpush1.msra.mxu0 0.0
      %2265 = vmatprep.subr.mxu0 0.0
      %2266 = vmatpush1.msra.mxu0 0.0
      %2267 = vmatprep.subr.mxu0 0.0
      %2268 = vmatpush1.msra.mxu0 0.0
      %2269 = vmatprep.subr.mxu0 0.0
      %2270 = vmatpush1.msra.mxu0 0.0
      %2271 = vmatprep.subr.mxu0 0.0
      %2272 = vmatpush1.msra.mxu0 0.0
      %2273 = vmatprep.subr.mxu0 0.0
      %2274 = vmatpush1.msra.mxu0 0.0
      %2275 = vmatprep.subr.mxu0 0.0
      %2276 = vmatpush1.msra.mxu0 0.0
      %2277 = vmatprep.subr.mxu0 0.0
      %2278 = vmatpush1.msra.mxu0 0.0
      %2279 = vmatprep.subr.mxu0 0.0
      %2280 = vmatpush1.msra.mxu0 0.0
      %2281 = vmatprep.subr.mxu0 0.0
      %2282 = vmatpush1.msra.mxu0 0.0
      %2283 = vmatprep.subr.mxu0 0.0
      %2284 = vmatpush1.msra.mxu0 0.0
      %2285 = vmatprep.mubr.f32.mxu0 0.0
      %2286 = vmatmul.mubr.f32.gmra.mrb[0].mxu0 %v2219
      %v2287 = vpop.f32.mrb[0].mxu0
      %v2288 = vadd.f32 0.0, %v2287
      %v2289 = vpop.f32.mrb[0].mxu0
      %2290 = vdwg.mxu0
      %v2291 = vadd.f32 %v1897, %v2288
      %v2292 = vmax.f32 %v2291, 0.0
      %v2294 = vsel %vm1101, %v2292, 0
      %2296 = vmatprep.subr.mxu0 0.0
      %2297 = vmatpush1.msra.mxu0 %v1687
      %2298 = vmatprep.subr.mxu0 0.0
      %2299 = vmatpush1.msra.mxu0 %v1688
      %2300 = vmatprep.subr.mxu0 0.0
      %2301 = vmatpush1.msra.mxu0 0.0
      %2302 = vmatprep.subr.mxu0 0.0
      %2303 = vmatpush1.msra.mxu0 0.0
      %2304 = vmatprep.subr.mxu0 0.0
      %2305 = vmatpush1.msra.mxu0 0.0
      %2306 = vmatprep.subr.mxu0 0.0
      %2307 = vmatpush1.msra.mxu0 0.0
      %2308 = vmatprep.subr.mxu0 0.0
      %2309 = vmatpush1.msra.mxu0 0.0
      %2310 = vmatprep.subr.mxu0 0.0
      %2311 = vmatpush1.msra.mxu0 0.0
      %2312 = vmatprep.subr.mxu0 0.0
      %2313 = vmatpush1.msra.mxu0 0.0
      %2314 = vmatprep.subr.mxu0 0.0
      %2315 = vmatpush1.msra.mxu0 0.0
      %2316 = vmatprep.subr.mxu0 0.0
      %2317 = vmatpush1.msra.mxu0 0.0
      %2318 = vmatprep.subr.mxu0 0.0
      %2319 = vmatpush1.msra.mxu0 0.0
      %2320 = vmatprep.subr.mxu0 0.0
      %2321 = vmatpush1.msra.mxu0 0.0
      %2322 = vmatprep.subr.mxu0 0.0
      %2323 = vmatpush1.msra.mxu0 0.0
      %2324 = vmatprep.subr.mxu0 0.0
      %2325 = vmatpush1.msra.mxu0 0.0
      %2326 = vmatprep.subr.mxu0 0.0
      %2327 = vmatpush1.msra.mxu0 0.0
      %2328 = vmatprep.subr.mxu0 0.0
      %2329 = vmatpush1.msra.mxu0 0.0
      %2330 = vmatprep.subr.mxu0 0.0
      %2331 = vmatpush1.msra.mxu0 0.0
      %2332 = vmatprep.subr.mxu0 0.0
      %2333 = vmatpush1.msra.mxu0 0.0
      %2334 = vmatprep.subr.mxu0 0.0
      %2335 = vmatpush1.msra.mxu0 0.0
      %2336 = vmatprep.subr.mxu0 0.0
      %2337 = vmatpush1.msra.mxu0 0.0
      %2338 = vmatprep.subr.mxu0 0.0
      %2339 = vmatpush1.msra.mxu0 0.0
      %2340 = vmatprep.subr.mxu0 0.0
      %2341 = vmatpush1.msra.mxu0 0.0
      %2342 = vmatprep.subr.mxu0 0.0
      %2343 = vmatpush1.msra.mxu0 0.0
      %2344 = vmatprep.subr.mxu0 0.0
      %2345 = vmatpush1.msra.mxu0 0.0
      %2346 = vmatprep.subr.mxu0 0.0
      %2347 = vmatpush1.msra.mxu0 0.0
      %2348 = vmatprep.subr.mxu0 0.0
      %2349 = vmatpush1.msra.mxu0 0.0
      %2350 = vmatprep.subr.mxu0 0.0
      %2351 = vmatpush1.msra.mxu0 0.0
      %2352 = vmatprep.subr.mxu0 0.0
      %2353 = vmatpush1.msra.mxu0 0.0
      %2354 = vmatprep.subr.mxu0 0.0
      %2355 = vmatpush1.msra.mxu0 0.0
      %2356 = vmatprep.subr.mxu0 0.0
      %2357 = vmatpush1.msra.mxu0 0.0
      %2358 = vmatprep.subr.mxu0 0.0
      %2359 = vmatpush1.msra.mxu0 0.0
      %2360 = vmatprep.mubr.f32.mxu0 0.0
      %2361 = vmatmul.mubr.f32.gmra.mrb[0].mxu0 %v2294
      %v2362 = vpop.f32.mrb[0].mxu0
      %v2363 = vadd.f32 0.0, %v2362
      %v2364 = vpop.f32.mrb[0].mxu0
      %2365 = vdwg.mxu0
      %v2366 = vmax.f32 %v2130, %v2363
      %v2367 = vsel %vm1001, %v2142, inf
      %2368 = vmin.xlane.f32.xlu0 %v2367
      %v2369 = vpop.xlane.xlu0 %2368
      %vm2370 = vcmp.le.f32.partialorder %v2142, %v2369
      %v2371 = vsel %vm2370, %v833, 8.0
      %v2372 = vsel %vm1001, %v2371, inf
      %2373 = vmin.xlane.f32.xlu0 %v2372
      %v2374 = vpop.xlane.xlu0 %2373
      %vm2375 = vcmp.eq.f32.partialorder %v833, %v2374
      %v2376 = vsel %vm2375, 1e+30, %v2142
      %v2377 = vsel %vm2375, 1, 0
      %v2378 = vcvt.s32.f32 %v2377
      %v2380 = vsel %vm1001, %v2378, 0
      %2382 = vmatprep.subr.mxu0 0.0
      %2383 = vmatpush1.msra.mxu0 %v1681
      %2384 = vmatprep.subr.mxu0 0.0
      %2385 = vmatpush1.msra.mxu0 0.0
      %2386 = vmatprep.subr.mxu0 0.0
      %2387 = vmatpush1.msra.mxu0 0.0
      %2388 = vmatprep.subr.mxu0 0.0
      %2389 = vmatpush1.msra.mxu0 0.0
      %2390 = vmatprep.subr.mxu0 0.0
      %2391 = vmatpush1.msra.mxu0 0.0
      %2392 = vmatprep.subr.mxu0 0.0
      %2393 = vmatpush1.msra.mxu0 0.0
      %2394 = vmatprep.subr.mxu0 0.0
      %2395 = vmatpush1.msra.mxu0 0.0
      %2396 = vmatprep.subr.mxu0 0.0
      %2397 = vmatpush1.msra.mxu0 0.0
      %2398 = vmatprep.subr.mxu0 0.0
      %2399 = vmatpush1.msra.mxu0 0.0
      %2400 = vmatprep.subr.mxu0 0.0
      %2401 = vmatpush1.msra.mxu0 0.0
      %2402 = vmatprep.subr.mxu0 0.0
      %2403 = vmatpush1.msra.mxu0 0.0
      %2404 = vmatprep.subr.mxu0 0.0
      %2405 = vmatpush1.msra.mxu0 0.0
      %2406 = vmatprep.subr.mxu0 0.0
      %2407 = vmatpush1.msra.mxu0 0.0
      %2408 = vmatprep.subr.mxu0 0.0
      %2409 = vmatpush1.msra.mxu0 0.0
      %2410 = vmatprep.subr.mxu0 0.0
      %2411 = vmatpush1.msra.mxu0 0.0
      %2412 = vmatprep.subr.mxu0 0.0
      %2413 = vmatpush1.msra.mxu0 0.0
      %2414 = vmatprep.subr.mxu0 0.0
      %2415 = vmatpush1.msra.mxu0 0.0
      %2416 = vmatprep.subr.mxu0 0.0
      %2417 = vmatpush1.msra.mxu0 0.0
      %2418 = vmatprep.subr.mxu0 0.0
      %2419 = vmatpush1.msra.mxu0 0.0
      %2420 = vmatprep.subr.mxu0 0.0
      %2421 = vmatpush1.msra.mxu0 0.0
      %2422 = vmatprep.subr.mxu0 0.0
      %2423 = vmatpush1.msra.mxu0 0.0
      %2424 = vmatprep.subr.mxu0 0.0
      %2425 = vmatpush1.msra.mxu0 0.0
      %2426 = vmatprep.subr.mxu0 0.0
      %2427 = vmatpush1.msra.mxu0 0.0
      %2428 = vmatprep.subr.mxu0 0.0
      %2429 = vmatpush1.msra.mxu0 0.0
      %2430 = vmatprep.subr.mxu0 0.0
      %2431 = vmatpush1.msra.mxu0 0.0
      %2432 = vmatprep.subr.mxu0 0.0
      %2433 = vmatpush1.msra.mxu0 0.0
      %2434 = vmatprep.subr.mxu0 0.0
      %2435 = vmatpush1.msra.mxu0 0.0
      %2436 = vmatprep.subr.mxu0 0.0
      %2437 = vmatpush1.msra.mxu0 0.0
      %2438 = vmatprep.subr.mxu0 0.0
      %2439 = vmatpush1.msra.mxu0 0.0
      %2440 = vmatprep.subr.mxu0 0.0
      %2441 = vmatpush1.msra.mxu0 0.0
      %2442 = vmatprep.subr.mxu0 0.0
      %2443 = vmatpush1.msra.mxu0 0.0
      %2444 = vmatprep.subr.mxu0 0.0
      %2445 = vmatpush1.msra.mxu0 0.0
      %2446 = vmatprep.mubr.f32.mxu0 0.0
      %2447 = vmatmul.mubr.f32.gmra.mrb[0].mxu0 %v2380
      %v2448 = vpop.f32.mrb[0].mxu0
      %v2449 = vadd.f32 0.0, %v2448
      %v2450 = vpop.f32.mrb[0].mxu0
      %2451 = vdwg.mxu0
      %v2453 = vsel %vm1101, %v2449, 0
      %2455 = vmatprep.subr.mxu0 0.0
      %2456 = vmatpush1.msra.mxu0 %v1684
      %2457 = vmatprep.subr.mxu0 0.0
      %2458 = vmatpush1.msra.mxu0 %v1685
      %2459 = vmatprep.subr.mxu0 0.0
      %2460 = vmatpush1.msra.mxu0 0.0
      %2461 = vmatprep.subr.mxu0 0.0
      %2462 = vmatpush1.msra.mxu0 0.0
      %2463 = vmatprep.subr.mxu0 0.0
      %2464 = vmatpush1.msra.mxu0 0.0
      %2465 = vmatprep.subr.mxu0 0.0
      %2466 = vmatpush1.msra.mxu0 0.0
      %2467 = vmatprep.subr.mxu0 0.0
      %2468 = vmatpush1.msra.mxu0 0.0
      %2469 = vmatprep.subr.mxu0 0.0
      %2470 = vmatpush1.msra.mxu0 0.0
      %2471 = vmatprep.subr.mxu0 0.0
      %2472 = vmatpush1.msra.mxu0 0.0
      %2473 = vmatprep.subr.mxu0 0.0
      %2474 = vmatpush1.msra.mxu0 0.0
      %2475 = vmatprep.subr.mxu0 0.0
      %2476 = vmatpush1.msra.mxu0 0.0
      %2477 = vmatprep.subr.mxu0 0.0
      %2478 = vmatpush1.msra.mxu0 0.0
      %2479 = vmatprep.subr.mxu0 0.0
      %2480 = vmatpush1.msra.mxu0 0.0
      %2481 = vmatprep.subr.mxu0 0.0
      %2482 = vmatpush1.msra.mxu0 0.0
      %2483 = vmatprep.subr.mxu0 0.0
      %2484 = vmatpush1.msra.mxu0 0.0
      %2485 = vmatprep.subr.mxu0 0.0
      %2486 = vmatpush1.msra.mxu0 0.0
      %2487 = vmatprep.subr.mxu0 0.0
      %2488 = vmatpush1.msra.mxu0 0.0
      %2489 = vmatprep.subr.mxu0 0.0
      %2490 = vmatpush1.msra.mxu0 0.0
      %2491 = vmatprep.subr.mxu0 0.0
      %2492 = vmatpush1.msra.mxu0 0.0
      %2493 = vmatprep.subr.mxu0 0.0
      %2494 = vmatpush1.msra.mxu0 0.0
      %2495 = vmatprep.subr.mxu0 0.0
      %2496 = vmatpush1.msra.mxu0 0.0
      %2497 = vmatprep.subr.mxu0 0.0
      %2498 = vmatpush1.msra.mxu0 0.0
      %2499 = vmatprep.subr.mxu0 0.0
      %2500 = vmatpush1.msra.mxu0 0.0
      %2501 = vmatprep.subr.mxu0 0.0
      %2502 = vmatpush1.msra.mxu0 0.0
      %2503 = vmatprep.subr.mxu0 0.0
      %2504 = vmatpush1.msra.mxu0 0.0
      %2505 = vmatprep.subr.mxu0 0.0
      %2506 = vmatpush1.msra.mxu0 0.0
      %2507 = vmatprep.subr.mxu0 0.0
      %2508 = vmatpush1.msra.mxu0 0.0
      %2509 = vmatprep.subr.mxu0 0.0
      %2510 = vmatpush1.msra.mxu0 0.0
      %2511 = vmatprep.subr.mxu0 0.0
      %2512 = vmatpush1.msra.mxu0 0.0
      %2513 = vmatprep.subr.mxu0 0.0
      %2514 = vmatpush1.msra.mxu0 0.0
      %2515 = vmatprep.subr.mxu0 0.0
      %2516 = vmatpush1.msra.mxu0 0.0
      %2517 = vmatprep.subr.mxu0 0.0
      %2518 = vmatpush1.msra.mxu0 0.0
      %2519 = vmatprep.mubr.f32.mxu0 0.0
      %2520 = vmatmul.mubr.f32.gmra.mrb[0].mxu0 %v2453
      %v2521 = vpop.f32.mrb[0].mxu0
      %v2522 = vadd.f32 0.0, %v2521
      %v2523 = vpop.f32.mrb[0].mxu0
      %2524 = vdwg.mxu0
      %v2525 = vadd.f32 %v1897, %v2522
      %v2526 = vmax.f32 %v2525, 0.0
      %v2528 = vsel %vm1101, %v2526, 0
      %2530 = vmatprep.subr.mxu0 0.0
      %2531 = vmatpush1.msra.mxu0 %v1687
      %2532 = vmatprep.subr.mxu0 0.0
      %2533 = vmatpush1.msra.mxu0 %v1688
      %2534 = vmatprep.subr.mxu0 0.0
      %2535 = vmatpush1.msra.mxu0 0.0
      %2536 = vmatprep.subr.mxu0 0.0
      %2537 = vmatpush1.msra.mxu0 0.0
      %2538 = vmatprep.subr.mxu0 0.0
      %2539 = vmatpush1.msra.mxu0 0.0
      %2540 = vmatprep.subr.mxu0 0.0
      %2541 = vmatpush1.msra.mxu0 0.0
      %2542 = vmatprep.subr.mxu0 0.0
      %2543 = vmatpush1.msra.mxu0 0.0
      %2544 = vmatprep.subr.mxu0 0.0
      %2545 = vmatpush1.msra.mxu0 0.0
      %2546 = vmatprep.subr.mxu0 0.0
      %2547 = vmatpush1.msra.mxu0 0.0
      %2548 = vmatprep.subr.mxu0 0.0
      %2549 = vmatpush1.msra.mxu0 0.0
      %2550 = vmatprep.subr.mxu0 0.0
      %2551 = vmatpush1.msra.mxu0 0.0
      %2552 = vmatprep.subr.mxu0 0.0
      %2553 = vmatpush1.msra.mxu0 0.0
      %2554 = vmatprep.subr.mxu0 0.0
      %2555 = vmatpush1.msra.mxu0 0.0
      %2556 = vmatprep.subr.mxu0 0.0
      %2557 = vmatpush1.msra.mxu0 0.0
      %2558 = vmatprep.subr.mxu0 0.0
      %2559 = vmatpush1.msra.mxu0 0.0
      %2560 = vmatprep.subr.mxu0 0.0
      %2561 = vmatpush1.msra.mxu0 0.0
      %2562 = vmatprep.subr.mxu0 0.0
      %2563 = vmatpush1.msra.mxu0 0.0
      %2564 = vmatprep.subr.mxu0 0.0
      %2565 = vmatpush1.msra.mxu0 0.0
      %2566 = vmatprep.subr.mxu0 0.0
      %2567 = vmatpush1.msra.mxu0 0.0
      %2568 = vmatprep.subr.mxu0 0.0
      %2569 = vmatpush1.msra.mxu0 0.0
      %2570 = vmatprep.subr.mxu0 0.0
      %2571 = vmatpush1.msra.mxu0 0.0
      %2572 = vmatprep.subr.mxu0 0.0
      %2573 = vmatpush1.msra.mxu0 0.0
      %2574 = vmatprep.subr.mxu0 0.0
      %2575 = vmatpush1.msra.mxu0 0.0
      %2576 = vmatprep.subr.mxu0 0.0
      %2577 = vmatpush1.msra.mxu0 0.0
      %2578 = vmatprep.subr.mxu0 0.0
      %2579 = vmatpush1.msra.mxu0 0.0
      %2580 = vmatprep.subr.mxu0 0.0
      %2581 = vmatpush1.msra.mxu0 0.0
      %2582 = vmatprep.subr.mxu0 0.0
      %2583 = vmatpush1.msra.mxu0 0.0
      %2584 = vmatprep.subr.mxu0 0.0
      %2585 = vmatpush1.msra.mxu0 0.0
      %2586 = vmatprep.subr.mxu0 0.0
      %2587 = vmatpush1.msra.mxu0 0.0
      %2588 = vmatprep.subr.mxu0 0.0
      %2589 = vmatpush1.msra.mxu0 0.0
      %2590 = vmatprep.subr.mxu0 0.0
      %2591 = vmatpush1.msra.mxu0 0.0
      %2592 = vmatprep.subr.mxu0 0.0
      %2593 = vmatpush1.msra.mxu0 0.0
      %2594 = vmatprep.mubr.f32.mxu0 0.0
      %2595 = vmatmul.mubr.f32.gmra.mrb[0].mxu0 %v2528
      %v2596 = vpop.f32.mrb[0].mxu0
      %v2597 = vadd.f32 0.0, %v2596
      %v2598 = vpop.f32.mrb[0].mxu0
      %2599 = vdwg.mxu0
      %v2600 = vmax.f32 %v2366, %v2597
      %v2601 = vsel %vm1001, %v2376, inf
      %2602 = vmin.xlane.f32.xlu0 %v2601
      %v2603 = vpop.xlane.xlu0 %2602
      %vm2604 = vcmp.le.f32.partialorder %v2376, %v2603
      %v2605 = vsel %vm2604, %v833, 8.0
      %v2606 = vsel %vm1001, %v2605, inf
      %2607 = vmin.xlane.f32.xlu0 %v2606
      %v2608 = vpop.xlane.xlu0 %2607
      %vm2609 = vcmp.eq.f32.partialorder %v833, %v2608
      %v2610 = vsel %vm2609, 1, 0
      %v2611 = vcvt.s32.f32 %v2610
      %v2613 = vsel %vm1001, %v2611, 0
      %2615 = vmatprep.subr.mxu0 0.0
      %2616 = vmatpush1.msra.mxu0 %v1681
      %2617 = vmatprep.subr.mxu0 0.0
      %2618 = vmatpush1.msra.mxu0 0.0
      %2619 = vmatprep.subr.mxu0 0.0
      %2620 = vmatpush1.msra.mxu0 0.0
      %2621 = vmatprep.subr.mxu0 0.0
      %2622 = vmatpush1.msra.mxu0 0.0
      %2623 = vmatprep.subr.mxu0 0.0
      %2624 = vmatpush1.msra.mxu0 0.0
      %2625 = vmatprep.subr.mxu0 0.0
      %2626 = vmatpush1.msra.mxu0 0.0
      %2627 = vmatprep.subr.mxu0 0.0
      %2628 = vmatpush1.msra.mxu0 0.0
      %2629 = vmatprep.subr.mxu0 0.0
      %2630 = vmatpush1.msra.mxu0 0.0
      %2631 = vmatprep.subr.mxu0 0.0
      %2632 = vmatpush1.msra.mxu0 0.0
      %2633 = vmatprep.subr.mxu0 0.0
      %2634 = vmatpush1.msra.mxu0 0.0
      %2635 = vmatprep.subr.mxu0 0.0
      %2636 = vmatpush1.msra.mxu0 0.0
      %2637 = vmatprep.subr.mxu0 0.0
      %2638 = vmatpush1.msra.mxu0 0.0
      %2639 = vmatprep.subr.mxu0 0.0
      %2640 = vmatpush1.msra.mxu0 0.0
      %2641 = vmatprep.subr.mxu0 0.0
      %2642 = vmatpush1.msra.mxu0 0.0
      %2643 = vmatprep.subr.mxu0 0.0
      %2644 = vmatpush1.msra.mxu0 0.0
      %2645 = vmatprep.subr.mxu0 0.0
      %2646 = vmatpush1.msra.mxu0 0.0
      %2647 = vmatprep.subr.mxu0 0.0
      %2648 = vmatpush1.msra.mxu0 0.0
      %2649 = vmatprep.subr.mxu0 0.0
      %2650 = vmatpush1.msra.mxu0 0.0
      %2651 = vmatprep.subr.mxu0 0.0
      %2652 = vmatpush1.msra.mxu0 0.0
      %2653 = vmatprep.subr.mxu0 0.0
      %2654 = vmatpush1.msra.mxu0 0.0
      %2655 = vmatprep.subr.mxu0 0.0
      %2656 = vmatpush1.msra.mxu0 0.0
      %2657 = vmatprep.subr.mxu0 0.0
      %2658 = vmatpush1.msra.mxu0 0.0
      %2659 = vmatprep.subr.mxu0 0.0
      %2660 = vmatpush1.msra.mxu0 0.0
      %2661 = vmatprep.subr.mxu0 0.0
      %2662 = vmatpush1.msra.mxu0 0.0
      %2663 = vmatprep.subr.mxu0 0.0
      %2664 = vmatpush1.msra.mxu0 0.0
      %2665 = vmatprep.subr.mxu0 0.0
      %2666 = vmatpush1.msra.mxu0 0.0
      %2667 = vmatprep.subr.mxu0 0.0
      %2668 = vmatpush1.msra.mxu0 0.0
      %2669 = vmatprep.subr.mxu0 0.0
      %2670 = vmatpush1.msra.mxu0 0.0
      %2671 = vmatprep.subr.mxu0 0.0
      %2672 = vmatpush1.msra.mxu0 0.0
      %2673 = vmatprep.subr.mxu0 0.0
      %2674 = vmatpush1.msra.mxu0 0.0
      %2675 = vmatprep.subr.mxu0 0.0
      %2676 = vmatpush1.msra.mxu0 0.0
      %2677 = vmatprep.subr.mxu0 0.0
      %2678 = vmatpush1.msra.mxu0 0.0
      %2679 = vmatprep.mubr.f32.mxu0 0.0
      %2680 = vmatmul.mubr.f32.gmra.mrb[0].mxu0 %v2613
      %v2681 = vpop.f32.mrb[0].mxu0
      %v2682 = vadd.f32 0.0, %v2681
      %v2683 = vpop.f32.mrb[0].mxu0
      %2684 = vdwg.mxu0
      %v2686 = vsel %vm1101, %v2682, 0
      %2688 = vmatprep.subr.mxu0 0.0
      %2689 = vmatpush1.msra.mxu0 %v1684
      %2690 = vmatprep.subr.mxu0 0.0
      %2691 = vmatpush1.msra.mxu0 %v1685
      %2692 = vmatprep.subr.mxu0 0.0
      %2693 = vmatpush1.msra.mxu0 0.0
      %2694 = vmatprep.subr.mxu0 0.0
      %2695 = vmatpush1.msra.mxu0 0.0
      %2696 = vmatprep.subr.mxu0 0.0
      %2697 = vmatpush1.msra.mxu0 0.0
      %2698 = vmatprep.subr.mxu0 0.0
      %2699 = vmatpush1.msra.mxu0 0.0
      %2700 = vmatprep.subr.mxu0 0.0
      %2701 = vmatpush1.msra.mxu0 0.0
      %2702 = vmatprep.subr.mxu0 0.0
      %2703 = vmatpush1.msra.mxu0 0.0
      %2704 = vmatprep.subr.mxu0 0.0
      %2705 = vmatpush1.msra.mxu0 0.0
      %2706 = vmatprep.subr.mxu0 0.0
      %2707 = vmatpush1.msra.mxu0 0.0
      %2708 = vmatprep.subr.mxu0 0.0
      %2709 = vmatpush1.msra.mxu0 0.0
      %2710 = vmatprep.subr.mxu0 0.0
      %2711 = vmatpush1.msra.mxu0 0.0
      %2712 = vmatprep.subr.mxu0 0.0
      %2713 = vmatpush1.msra.mxu0 0.0
      %2714 = vmatprep.subr.mxu0 0.0
      %2715 = vmatpush1.msra.mxu0 0.0
      %2716 = vmatprep.subr.mxu0 0.0
      %2717 = vmatpush1.msra.mxu0 0.0
      %2718 = vmatprep.subr.mxu0 0.0
      %2719 = vmatpush1.msra.mxu0 0.0
      %2720 = vmatprep.subr.mxu0 0.0
      %2721 = vmatpush1.msra.mxu0 0.0
      %2722 = vmatprep.subr.mxu0 0.0
      %2723 = vmatpush1.msra.mxu0 0.0
      %2724 = vmatprep.subr.mxu0 0.0
      %2725 = vmatpush1.msra.mxu0 0.0
      %2726 = vmatprep.subr.mxu0 0.0
      %2727 = vmatpush1.msra.mxu0 0.0
      %2728 = vmatprep.subr.mxu0 0.0
      %2729 = vmatpush1.msra.mxu0 0.0
      %2730 = vmatprep.subr.mxu0 0.0
      %2731 = vmatpush1.msra.mxu0 0.0
      %2732 = vmatprep.subr.mxu0 0.0
      %2733 = vmatpush1.msra.mxu0 0.0
      %2734 = vmatprep.subr.mxu0 0.0
      %2735 = vmatpush1.msra.mxu0 0.0
      %2736 = vmatprep.subr.mxu0 0.0
      %2737 = vmatpush1.msra.mxu0 0.0
      %2738 = vmatprep.subr.mxu0 0.0
      %2739 = vmatpush1.msra.mxu0 0.0
      %2740 = vmatprep.subr.mxu0 0.0
      %2741 = vmatpush1.msra.mxu0 0.0
      %2742 = vmatprep.subr.mxu0 0.0
      %2743 = vmatpush1.msra.mxu0 0.0
      %2744 = vmatprep.subr.mxu0 0.0
      %2745 = vmatpush1.msra.mxu0 0.0
      %2746 = vmatprep.subr.mxu0 0.0
      %2747 = vmatpush1.msra.mxu0 0.0
      %2748 = vmatprep.subr.mxu0 0.0
      %2749 = vmatpush1.msra.mxu0 0.0
      %2750 = vmatprep.subr.mxu0 0.0
      %2751 = vmatpush1.msra.mxu0 0.0
      %2752 = vmatprep.mubr.f32.mxu0 0.0
      %2753 = vmatmul.mubr.f32.gmra.mrb[0].mxu0 %v2686
      %v2754 = vpop.f32.mrb[0].mxu0
      %v2755 = vadd.f32 0.0, %v2754
      %v2756 = vpop.f32.mrb[0].mxu0
      %2757 = vdwg.mxu0
      %v2758 = vadd.f32 %v1897, %v2755
      %v2759 = vmax.f32 %v2758, 0.0
      %v2761 = vsel %vm1101, %v2759, 0
      %2763 = vmatprep.subr.mxu0 0.0
      %2764 = vmatpush1.msra.mxu0 %v1687
      %2765 = vmatprep.subr.mxu0 0.0
      %2766 = vmatpush1.msra.mxu0 %v1688
      %2767 = vmatprep.subr.mxu0 0.0
      %2768 = vmatpush1.msra.mxu0 0.0
      %2769 = vmatprep.subr.mxu0 0.0
      %2770 = vmatpush1.msra.mxu0 0.0
      %2771 = vmatprep.subr.mxu0 0.0
      %2772 = vmatpush1.msra.mxu0 0.0
      %2773 = vmatprep.subr.mxu0 0.0
      %2774 = vmatpush1.msra.mxu0 0.0
      %2775 = vmatprep.subr.mxu0 0.0
      %2776 = vmatpush1.msra.mxu0 0.0
      %2777 = vmatprep.subr.mxu0 0.0
      %2778 = vmatpush1.msra.mxu0 0.0
      %2779 = vmatprep.subr.mxu0 0.0
      %2780 = vmatpush1.msra.mxu0 0.0
      %2781 = vmatprep.subr.mxu0 0.0
      %2782 = vmatpush1.msra.mxu0 0.0
      %2783 = vmatprep.subr.mxu0 0.0
      %2784 = vmatpush1.msra.mxu0 0.0
      %2785 = vmatprep.subr.mxu0 0.0
      %2786 = vmatpush1.msra.mxu0 0.0
      %2787 = vmatprep.subr.mxu0 0.0
      %2788 = vmatpush1.msra.mxu0 0.0
      %2789 = vmatprep.subr.mxu0 0.0
      %2790 = vmatpush1.msra.mxu0 0.0
      %2791 = vmatprep.subr.mxu0 0.0
      %2792 = vmatpush1.msra.mxu0 0.0
      %2793 = vmatprep.subr.mxu0 0.0
      %2794 = vmatpush1.msra.mxu0 0.0
      %2795 = vmatprep.subr.mxu0 0.0
      %2796 = vmatpush1.msra.mxu0 0.0
      %2797 = vmatprep.subr.mxu0 0.0
      %2798 = vmatpush1.msra.mxu0 0.0
      %2799 = vmatprep.subr.mxu0 0.0
      %2800 = vmatpush1.msra.mxu0 0.0
      %2801 = vmatprep.subr.mxu0 0.0
      %2802 = vmatpush1.msra.mxu0 0.0
      %2803 = vmatprep.subr.mxu0 0.0
      %2804 = vmatpush1.msra.mxu0 0.0
      %2805 = vmatprep.subr.mxu0 0.0
      %2806 = vmatpush1.msra.mxu0 0.0
      %2807 = vmatprep.subr.mxu0 0.0
      %2808 = vmatpush1.msra.mxu0 0.0
      %2809 = vmatprep.subr.mxu0 0.0
      %2810 = vmatpush1.msra.mxu0 0.0
      %2811 = vmatprep.subr.mxu0 0.0
      %2812 = vmatpush1.msra.mxu0 0.0
      %2813 = vmatprep.subr.mxu0 0.0
      %2814 = vmatpush1.msra.mxu0 0.0
      %2815 = vmatprep.subr.mxu0 0.0
      %2816 = vmatpush1.msra.mxu0 0.0
      %2817 = vmatprep.subr.mxu0 0.0
      %2818 = vmatpush1.msra.mxu0 0.0
      %2819 = vmatprep.subr.mxu0 0.0
      %2820 = vmatpush1.msra.mxu0 0.0
      %2821 = vmatprep.subr.mxu0 0.0
      %2822 = vmatpush1.msra.mxu0 0.0
      %2823 = vmatprep.subr.mxu0 0.0
      %2824 = vmatpush1.msra.mxu0 0.0
      %2825 = vmatprep.subr.mxu0 0.0
      %2826 = vmatpush1.msra.mxu0 0.0
      %2827 = vmatprep.mubr.f32.mxu0 0.0
      %2828 = vmatmul.mubr.f32.gmra.mrb[0].mxu0 %v2761
      %v2829 = vpop.f32.mrb[0].mxu0
      %v2830 = vadd.f32 0.0, %v2829
      %v2831 = vpop.f32.mrb[0].mxu0
      %2832 = vdwg.mxu0
      %v2833 = vmax.f32 %v2600, %v2830
      %v2835 = vlaneseq
      %v2836 = vshrl.u32 %v2835, 7
      %v2837 = vsub.s32 0, %v2836
      %v2838 = vrot.slane %v1689, %v2837
      %v2840 = vadd.f32 %v2833, %v2838
      %v2841 = vld [vmem:[%s12] sm:$0xff]
      %v2842 = vld [vmem:[%s12 + $0x8] sm:$0xff]
      %v2843 = vld [vmem:[%s13] sm:$0xff]
      %v2844 = vld [vmem:[%s13 + $0x8] sm:$0xff]
      %v2845 = vld [vmem:[%s14] sm:$0x1]
      %v2846 = vld [vmem:[%s15] sm:$0xff]
      %v2847 = vld [vmem:[%s15 + $0x8] sm:$0xff]
      %v2848 = vld [vmem:[%s15 + $0x10] sm:$0xff]
      %v2849 = vld [vmem:[%s15 + $0x18] sm:$0xff]
      %v2850 = vld [vmem:[%s16] sm:$0x1]
      %v2851 = vmul.f32 %v2840, %v2840
      %v2852 = vsel %vm1101, %v2851, 0.0
      %2853 = vadd.xlane.f32.xlu0 %v2852
      %v2854 = vpop.xlane.xlu0 %2853
      %v2856 = vsel %vm1101, %v2851, 0
      %2858 = vmatprep.subr.mxu0 0.0
      %2859 = vmatpush1.xpose.msra.mxu0 %v2856
      %2860 = vmatprep.subr.mxu0 0.0
      %2861 = vmatpush1.xpose.msra.mxu0 0.0
      %2862 = vmatprep.subr.mxu0 0.0
      %2863 = vmatpush1.xpose.msra.mxu0 0.0
      %2864 = vmatprep.subr.mxu0 0.0
      %2865 = vmatpush1.xpose.msra.mxu0 0.0
      %2866 = vmatprep.subr.mxu0 0.0
      %2867 = vmatpush1.xpose.msra.mxu0 0.0
      %2868 = vmatprep.subr.mxu0 0.0
      %2869 = vmatpush1.xpose.msra.mxu0 0.0
      %2870 = vmatprep.subr.mxu0 0.0
      %2871 = vmatpush1.xpose.msra.mxu0 0.0
      %2872 = vmatprep.subr.mxu0 0.0
      %2873 = vmatpush1.xpose.msra.mxu0 0.0
      %2874 = vmatprep.subr.mxu0 0.0
      %2875 = vmatpush1.xpose.msra.mxu0 0.0
      %2876 = vmatprep.subr.mxu0 0.0
      %2877 = vmatpush1.xpose.msra.mxu0 0.0
      %2878 = vmatprep.subr.mxu0 0.0
      %2879 = vmatpush1.xpose.msra.mxu0 0.0
      %2880 = vmatprep.subr.mxu0 0.0
      %2881 = vmatpush1.xpose.msra.mxu0 0.0
      %2882 = vmatprep.subr.mxu0 0.0
      %2883 = vmatpush1.xpose.msra.mxu0 0.0
      %2884 = vmatprep.subr.mxu0 0.0
      %2885 = vmatpush1.xpose.msra.mxu0 0.0
      %2886 = vmatprep.subr.mxu0 0.0
      %2887 = vmatpush1.xpose.msra.mxu0 0.0
      %2888 = vmatprep.subr.mxu0 0.0
      %2889 = vmatpush1.xpose.msra.mxu0 0.0
      %2890 = vmatprep.subr.mxu0 0.0
      %2891 = vmatpush1.xpose.msra.mxu0 0.0
      %2892 = vmatprep.subr.mxu0 0.0
      %2893 = vmatpush1.xpose.msra.mxu0 0.0
      %2894 = vmatprep.subr.mxu0 0.0
      %2895 = vmatpush1.xpose.msra.mxu0 0.0
      %2896 = vmatprep.subr.mxu0 0.0
      %2897 = vmatpush1.xpose.msra.mxu0 0.0
      %2898 = vmatprep.subr.mxu0 0.0
      %2899 = vmatpush1.xpose.msra.mxu0 0.0
      %2900 = vmatprep.subr.mxu0 0.0
      %2901 = vmatpush1.xpose.msra.mxu0 0.0
      %2902 = vmatprep.subr.mxu0 0.0
      %2903 = vmatpush1.xpose.msra.mxu0 0.0
      %2904 = vmatprep.subr.mxu0 0.0
      %2905 = vmatpush1.xpose.msra.mxu0 0.0
      %2906 = vmatprep.subr.mxu0 0.0
      %2907 = vmatpush1.xpose.msra.mxu0 0.0
      %2908 = vmatprep.subr.mxu0 0.0
      %2909 = vmatpush1.xpose.msra.mxu0 0.0
      %2910 = vmatprep.subr.mxu0 0.0
      %2911 = vmatpush1.xpose.msra.mxu0 0.0
      %2912 = vmatprep.subr.mxu0 0.0
      %2913 = vmatpush1.xpose.msra.mxu0 0.0
      %2914 = vmatprep.subr.mxu0 0.0
      %2915 = vmatpush1.xpose.msra.mxu0 0.0
      %2916 = vmatprep.subr.mxu0 0.0
      %2917 = vmatpush1.xpose.msra.mxu0 0.0
      %2918 = vmatprep.subr.mxu0 0.0
      %2919 = vmatpush1.xpose.msra.mxu0 0.0
      %2920 = vmatprep.subr.mxu0 0.0
      %2921 = vmatpush1.xpose.msra.mxu0 0.0
      %2922 = vmatprep.mubr.f32.mxu0 0.0
      %2923 = vmatmul.mubr.f32.gmra.mrb[0].mxu0 %v1694
      %v2924 = vpop.f32.mrb[0].mxu0
      %v2925 = vadd.f32 0.0, %v2924
      %v2926 = vpop.f32.mrb[0].mxu0
      %2927 = vdwg.mxu0
      %v2928 = vpack.c.bf16 %v2840, %v2840
      %v2930 = vsel %vm1101, %v2928, 0
      %2932 = vmatprep.subr.bf16.mxu0 0
      %2933 = vmatpush1.bf16.xpose.msra.mxu0 %v2930
      %2934 = vmatprep.subr.bf16.mxu0 0
      %2935 = vmatpush1.bf16.xpose.msra.mxu0 0
      %2936 = vmatprep.subr.bf16.mxu0 0
      %2937 = vmatpush1.bf16.xpose.msra.mxu0 0
      %2938 = vmatprep.subr.bf16.mxu0 0
      %2939 = vmatpush1.bf16.xpose.msra.mxu0 0
      %2940 = vmatprep.subr.bf16.mxu0 0
      %2941 = vmatpush1.bf16.xpose.msra.mxu0 0
      %2942 = vmatprep.subr.bf16.mxu0 0
      %2943 = vmatpush1.bf16.xpose.msra.mxu0 0
      %2944 = vmatprep.subr.bf16.mxu0 0
      %2945 = vmatpush1.bf16.xpose.msra.mxu0 0
      %2946 = vmatprep.subr.bf16.mxu0 0
      %2947 = vmatpush1.bf16.xpose.msra.mxu0 0
      %2948 = vmatprep.subr.bf16.mxu0 0
      %2949 = vmatpush1.bf16.xpose.msra.mxu0 0
      %2950 = vmatprep.subr.bf16.mxu0 0
      %2951 = vmatpush1.bf16.xpose.msra.mxu0 0
      %2952 = vmatprep.subr.bf16.mxu0 0
      %2953 = vmatpush1.bf16.xpose.msra.mxu0 0
      %2954 = vmatprep.subr.bf16.mxu0 0
      %2955 = vmatpush1.bf16.xpose.msra.mxu0 0
      %2956 = vmatprep.subr.bf16.mxu0 0
      %2957 = vmatpush1.bf16.xpose.msra.mxu0 0
      %2958 = vmatprep.subr.bf16.mxu0 0
      %2959 = vmatpush1.bf16.xpose.msra.mxu0 0
      %2960 = vmatprep.subr.bf16.mxu0 0
      %2961 = vmatpush1.bf16.xpose.msra.mxu0 0
      %2962 = vmatprep.subr.bf16.mxu0 0
      %2963 = vmatpush1.bf16.xpose.msra.mxu0 0
      %2964 = vmatprep.mubr.bf16.mxu0 0
      %2965 = vmatmul.mubr.bf16.gmra.mrb[0].mxu0 %v2930
      %v2966 = vpop.f32.mrb[0].mxu0
      %v2967 = vadd.f32 0.0, %v2966
      %v2968 = vpop.f32.mrb[0].mxu0
      %v2969 = vpop.f32.mrb[0].mxu0
      %v2970 = vpop.f32.mrb[0].mxu0
      %2971 = vdwg.mxu0
      %v2972 = vlaneseq
      %v2973 = vshrl.u32 %v2972, 7
      %v2974 = vsub.s32 0, %v2973
      %v2975 = vrot.slane %v2925, %v2974
      %v2976 = vadd.f32 %v2854, %v2975
      %v2977 = vmul.f32 %v2967, 2.0
      %v2978 = vsub.f32 %v2976, %v2977
      %v2979 = vadd.f32 %v2978, %v979
      %v2981 = vlaneseq
      %v2982 = vshrl.u32 %v2981, 7
      %v2983 = vsub.s32 0, %v2982
      %v2984 = vrot.slane %v2845, %v2983
      %v2987 = vsel %vm1101, %v2840, 0
      %2989 = vmatprep.subr.mxu0 0.0
      %2990 = vmatpush1.msra.mxu0 %v2841
      %2991 = vmatprep.subr.mxu0 0.0
      %2992 = vmatpush1.msra.mxu0 %v2842
      %2993 = vmatprep.subr.mxu0 0.0
      %2994 = vmatpush1.msra.mxu0 0.0
      %2995 = vmatprep.subr.mxu0 0.0
      %2996 = vmatpush1.msra.mxu0 0.0
      %2997 = vmatprep.subr.mxu0 0.0
      %2998 = vmatpush1.msra.mxu0 0.0
      %2999 = vmatprep.subr.mxu0 0.0
      %3000 = vmatpush1.msra.mxu0 0.0
      %3001 = vmatprep.subr.mxu0 0.0
      %3002 = vmatpush1.msra.mxu0 0.0
      %3003 = vmatprep.subr.mxu0 0.0
      %3004 = vmatpush1.msra.mxu0 0.0
      %3005 = vmatprep.subr.mxu0 0.0
      %3006 = vmatpush1.msra.mxu0 0.0
      %3007 = vmatprep.subr.mxu0 0.0
      %3008 = vmatpush1.msra.mxu0 0.0
      %3009 = vmatprep.subr.mxu0 0.0
      %3010 = vmatpush1.msra.mxu0 0.0
      %3011 = vmatprep.subr.mxu0 0.0
      %3012 = vmatpush1.msra.mxu0 0.0
      %3013 = vmatprep.subr.mxu0 0.0
      %3014 = vmatpush1.msra.mxu0 0.0
      %3015 = vmatprep.subr.mxu0 0.0
      %3016 = vmatpush1.msra.mxu0 0.0
      %3017 = vmatprep.subr.mxu0 0.0
      %3018 = vmatpush1.msra.mxu0 0.0
      %3019 = vmatprep.subr.mxu0 0.0
      %3020 = vmatpush1.msra.mxu0 0.0
      %3021 = vmatprep.subr.mxu0 0.0
      %3022 = vmatpush1.msra.mxu0 0.0
      %3023 = vmatprep.subr.mxu0 0.0
      %3024 = vmatpush1.msra.mxu0 0.0
      %3025 = vmatprep.subr.mxu0 0.0
      %3026 = vmatpush1.msra.mxu0 0.0
      %3027 = vmatprep.subr.mxu0 0.0
      %3028 = vmatpush1.msra.mxu0 0.0
      %3029 = vmatprep.subr.mxu0 0.0
      %3030 = vmatpush1.msra.mxu0 0.0
      %3031 = vmatprep.subr.mxu0 0.0
      %3032 = vmatpush1.msra.mxu0 0.0
      %3033 = vmatprep.subr.mxu0 0.0
      %3034 = vmatpush1.msra.mxu0 0.0
      %3035 = vmatprep.subr.mxu0 0.0
      %3036 = vmatpush1.msra.mxu0 0.0
      %3037 = vmatprep.subr.mxu0 0.0
      %3038 = vmatpush1.msra.mxu0 0.0
      %3039 = vmatprep.subr.mxu0 0.0
      %3040 = vmatpush1.msra.mxu0 0.0
      %3041 = vmatprep.subr.mxu0 0.0
      %3042 = vmatpush1.msra.mxu0 0.0
      %3043 = vmatprep.subr.mxu0 0.0
      %3044 = vmatpush1.msra.mxu0 0.0
      %3045 = vmatprep.subr.mxu0 0.0
      %3046 = vmatpush1.msra.mxu0 0.0
      %3047 = vmatprep.subr.mxu0 0.0
      %3048 = vmatpush1.msra.mxu0 0.0
      %3049 = vmatprep.subr.mxu0 0.0
      %3050 = vmatpush1.msra.mxu0 0.0
      %3051 = vmatprep.subr.mxu0 0.0
      %3052 = vmatpush1.msra.mxu0 0.0
      %3053 = vmatprep.mubr.f32.mxu0 0.0
      %3054 = vmatmul.mubr.f32.gmra.mrb[0].mxu0 %v2987
      %v3055 = vpop.f32.mrb[0].mxu0
      %v3056 = vadd.f32 %v2984, %v3055
      %v3057 = vpop.f32.mrb[0].mxu0
      %3058 = vdwg.mxu0
      %v3059 = vsel %vm1001, %v2979, inf
      %3060 = vmin.xlane.f32.xlu0 %v3059
      %v3061 = vpop.xlane.xlu0 %3060
      %vm3062 = vcmp.le.f32.partialorder %v2979, %v3061
      %v3063 = vsel %vm3062, %v833, 8.0
      %v3064 = vsel %vm1001, %v3063, inf
      %3065 = vmin.xlane.f32.xlu0 %v3064
      %v3066 = vpop.xlane.xlu0 %3065
      %vm3067 = vcmp.eq.f32.partialorder %v833, %v3066
      %v3068 = vsel %vm3067, 1e+30, %v2979
      %v3069 = vsel %vm3067, 1, 0
      %v3070 = vcvt.s32.f32 %v3069
      %v3072 = vsel %vm1001, %v3070, 0
      %3074 = vmatprep.subr.mxu0 0.0
      %3075 = vmatpush1.msra.mxu0 %v2840
      %3076 = vmatprep.subr.mxu0 0.0
      %3077 = vmatpush1.msra.mxu0 0.0
      %3078 = vmatprep.subr.mxu0 0.0
      %3079 = vmatpush1.msra.mxu0 0.0
      %3080 = vmatprep.subr.mxu0 0.0
      %3081 = vmatpush1.msra.mxu0 0.0
      %3082 = vmatprep.subr.mxu0 0.0
      %3083 = vmatpush1.msra.mxu0 0.0
      %3084 = vmatprep.subr.mxu0 0.0
      %3085 = vmatpush1.msra.mxu0 0.0
      %3086 = vmatprep.subr.mxu0 0.0
      %3087 = vmatpush1.msra.mxu0 0.0
      %3088 = vmatprep.subr.mxu0 0.0
      %3089 = vmatpush1.msra.mxu0 0.0
      %3090 = vmatprep.subr.mxu0 0.0
      %3091 = vmatpush1.msra.mxu0 0.0
      %3092 = vmatprep.subr.mxu0 0.0
      %3093 = vmatpush1.msra.mxu0 0.0
      %3094 = vmatprep.subr.mxu0 0.0
      %3095 = vmatpush1.msra.mxu0 0.0
      %3096 = vmatprep.subr.mxu0 0.0
      %3097 = vmatpush1.msra.mxu0 0.0
      %3098 = vmatprep.subr.mxu0 0.0
      %3099 = vmatpush1.msra.mxu0 0.0
      %3100 = vmatprep.subr.mxu0 0.0
      %3101 = vmatpush1.msra.mxu0 0.0
      %3102 = vmatprep.subr.mxu0 0.0
      %3103 = vmatpush1.msra.mxu0 0.0
      %3104 = vmatprep.subr.mxu0 0.0
      %3105 = vmatpush1.msra.mxu0 0.0
      %3106 = vmatprep.subr.mxu0 0.0
      %3107 = vmatpush1.msra.mxu0 0.0
      %3108 = vmatprep.subr.mxu0 0.0
      %3109 = vmatpush1.msra.mxu0 0.0
      %3110 = vmatprep.subr.mxu0 0.0
      %3111 = vmatpush1.msra.mxu0 0.0
      %3112 = vmatprep.subr.mxu0 0.0
      %3113 = vmatpush1.msra.mxu0 0.0
      %3114 = vmatprep.subr.mxu0 0.0
      %3115 = vmatpush1.msra.mxu0 0.0
      %3116 = vmatprep.subr.mxu0 0.0
      %3117 = vmatpush1.msra.mxu0 0.0
      %3118 = vmatprep.subr.mxu0 0.0
      %3119 = vmatpush1.msra.mxu0 0.0
      %3120 = vmatprep.subr.mxu0 0.0
      %3121 = vmatpush1.msra.mxu0 0.0
      %3122 = vmatprep.subr.mxu0 0.0
      %3123 = vmatpush1.msra.mxu0 0.0
      %3124 = vmatprep.subr.mxu0 0.0
      %3125 = vmatpush1.msra.mxu0 0.0
      %3126 = vmatprep.subr.mxu0 0.0
      %3127 = vmatpush1.msra.mxu0 0.0
      %3128 = vmatprep.subr.mxu0 0.0
      %3129 = vmatpush1.msra.mxu0 0.0
      %3130 = vmatprep.subr.mxu0 0.0
      %3131 = vmatpush1.msra.mxu0 0.0
      %3132 = vmatprep.subr.mxu0 0.0
      %3133 = vmatpush1.msra.mxu0 0.0
      %3134 = vmatprep.subr.mxu0 0.0
      %3135 = vmatpush1.msra.mxu0 0.0
      %3136 = vmatprep.subr.mxu0 0.0
      %3137 = vmatpush1.msra.mxu0 0.0
      %3138 = vmatprep.mubr.f32.mxu0 0.0
      %3139 = vmatmul.mubr.f32.gmra.mrb[0].mxu0 %v3072
      %v3140 = vpop.f32.mrb[0].mxu0
      %v3141 = vadd.f32 0.0, %v3140
      %v3142 = vpop.f32.mrb[0].mxu0
      %3143 = vdwg.mxu0
      %v3145 = vsel %vm1101, %v3141, 0
      %3147 = vmatprep.subr.mxu0 0.0
      %3148 = vmatpush1.msra.mxu0 %v2843
      %3149 = vmatprep.subr.mxu0 0.0
      %3150 = vmatpush1.msra.mxu0 %v2844
      %3151 = vmatprep.subr.mxu0 0.0
      %3152 = vmatpush1.msra.mxu0 0.0
      %3153 = vmatprep.subr.mxu0 0.0
      %3154 = vmatpush1.msra.mxu0 0.0
      %3155 = vmatprep.subr.mxu0 0.0
      %3156 = vmatpush1.msra.mxu0 0.0
      %3157 = vmatprep.subr.mxu0 0.0
      %3158 = vmatpush1.msra.mxu0 0.0
      %3159 = vmatprep.subr.mxu0 0.0
      %3160 = vmatpush1.msra.mxu0 0.0
      %3161 = vmatprep.subr.mxu0 0.0
      %3162 = vmatpush1.msra.mxu0 0.0
      %3163 = vmatprep.subr.mxu0 0.0
      %3164 = vmatpush1.msra.mxu0 0.0
      %3165 = vmatprep.subr.mxu0 0.0
      %3166 = vmatpush1.msra.mxu0 0.0
      %3167 = vmatprep.subr.mxu0 0.0
      %3168 = vmatpush1.msra.mxu0 0.0
      %3169 = vmatprep.subr.mxu0 0.0
      %3170 = vmatpush1.msra.mxu0 0.0
      %3171 = vmatprep.subr.mxu0 0.0
      %3172 = vmatpush1.msra.mxu0 0.0
      %3173 = vmatprep.subr.mxu0 0.0
      %3174 = vmatpush1.msra.mxu0 0.0
      %3175 = vmatprep.subr.mxu0 0.0
      %3176 = vmatpush1.msra.mxu0 0.0
      %3177 = vmatprep.subr.mxu0 0.0
      %3178 = vmatpush1.msra.mxu0 0.0
      %3179 = vmatprep.subr.mxu0 0.0
      %3180 = vmatpush1.msra.mxu0 0.0
      %3181 = vmatprep.subr.mxu0 0.0
      %3182 = vmatpush1.msra.mxu0 0.0
      %3183 = vmatprep.subr.mxu0 0.0
      %3184 = vmatpush1.msra.mxu0 0.0
      %3185 = vmatprep.subr.mxu0 0.0
      %3186 = vmatpush1.msra.mxu0 0.0
      %3187 = vmatprep.subr.mxu0 0.0
      %3188 = vmatpush1.msra.mxu0 0.0
      %3189 = vmatprep.subr.mxu0 0.0
      %3190 = vmatpush1.msra.mxu0 0.0
      %3191 = vmatprep.subr.mxu0 0.0
      %3192 = vmatpush1.msra.mxu0 0.0
      %3193 = vmatprep.subr.mxu0 0.0
      %3194 = vmatpush1.msra.mxu0 0.0
      %3195 = vmatprep.subr.mxu0 0.0
      %3196 = vmatpush1.msra.mxu0 0.0
      %3197 = vmatprep.subr.mxu0 0.0
      %3198 = vmatpush1.msra.mxu0 0.0
      %3199 = vmatprep.subr.mxu0 0.0
      %3200 = vmatpush1.msra.mxu0 0.0
      %3201 = vmatprep.subr.mxu0 0.0
      %3202 = vmatpush1.msra.mxu0 0.0
      %3203 = vmatprep.subr.mxu0 0.0
      %3204 = vmatpush1.msra.mxu0 0.0
      %3205 = vmatprep.subr.mxu0 0.0
      %3206 = vmatpush1.msra.mxu0 0.0
      %3207 = vmatprep.subr.mxu0 0.0
      %3208 = vmatpush1.msra.mxu0 0.0
      %3209 = vmatprep.subr.mxu0 0.0
      %3210 = vmatpush1.msra.mxu0 0.0
      %3211 = vmatprep.mubr.f32.mxu0 0.0
      %3212 = vmatmul.mubr.f32.gmra.mrb[0].mxu0 %v3145
      %v3213 = vpop.f32.mrb[0].mxu0
      %v3214 = vadd.f32 0.0, %v3213
      %v3215 = vpop.f32.mrb[0].mxu0
      %3216 = vdwg.mxu0
      %v3217 = vadd.f32 %v3056, %v3214
      %v3218 = vmax.f32 %v3217, 0.0
      %vm3219 = vcmask 261120
      %v3221 = vsel %vm3219, %v3218, 0
      %3223 = vmatprep.subr.mxu0 0.0
      %3224 = vmatpush1.msra.mxu0 %v2846
      %3225 = vmatprep.subr.mxu0 0.0
      %3226 = vmatpush1.msra.mxu0 %v2847
      %3227 = vmatprep.subr.mxu0 0.0
      %3228 = vmatpush1.msra.mxu0 %v2848
      %3229 = vmatprep.subr.mxu0 0.0
      %3230 = vmatpush1.msra.mxu0 %v2849
      %3231 = vmatprep.subr.mxu0 0.0
      %3232 = vmatpush1.msra.mxu0 0.0
      %3233 = vmatprep.subr.mxu0 0.0
      %3234 = vmatpush1.msra.mxu0 0.0
      %3235 = vmatprep.subr.mxu0 0.0
      %3236 = vmatpush1.msra.mxu0 0.0
      %3237 = vmatprep.subr.mxu0 0.0
      %3238 = vmatpush1.msra.mxu0 0.0
      %3239 = vmatprep.subr.mxu0 0.0
      %3240 = vmatpush1.msra.mxu0 0.0
      %3241 = vmatprep.subr.mxu0 0.0
      %3242 = vmatpush1.msra.mxu0 0.0
      %3243 = vmatprep.subr.mxu0 0.0
      %3244 = vmatpush1.msra.mxu0 0.0
      %3245 = vmatprep.subr.mxu0 0.0
      %3246 = vmatpush1.msra.mxu0 0.0
      %3247 = vmatprep.subr.mxu0 0.0
      %3248 = vmatpush1.msra.mxu0 0.0
      %3249 = vmatprep.subr.mxu0 0.0
      %3250 = vmatpush1.msra.mxu0 0.0
      %3251 = vmatprep.subr.mxu0 0.0
      %3252 = vmatpush1.msra.mxu0 0.0
      %3253 = vmatprep.subr.mxu0 0.0
      %3254 = vmatpush1.msra.mxu0 0.0
      %3255 = vmatprep.subr.mxu0 0.0
      %3256 = vmatpush1.msra.mxu0 0.0
      %3257 = vmatprep.subr.mxu0 0.0
      %3258 = vmatpush1.msra.mxu0 0.0
      %3259 = vmatprep.subr.mxu0 0.0
      %3260 = vmatpush1.msra.mxu0 0.0
      %3261 = vmatprep.subr.mxu0 0.0
      %3262 = vmatpush1.msra.mxu0 0.0
      %3263 = vmatprep.subr.mxu0 0.0
      %3264 = vmatpush1.msra.mxu0 0.0
      %3265 = vmatprep.subr.mxu0 0.0
      %3266 = vmatpush1.msra.mxu0 0.0
      %3267 = vmatprep.subr.mxu0 0.0
      %3268 = vmatpush1.msra.mxu0 0.0
      %3269 = vmatprep.subr.mxu0 0.0
      %3270 = vmatpush1.msra.mxu0 0.0
      %3271 = vmatprep.subr.mxu0 0.0
      %3272 = vmatpush1.msra.mxu0 0.0
      %3273 = vmatprep.subr.mxu0 0.0
      %3274 = vmatpush1.msra.mxu0 0.0
      %3275 = vmatprep.subr.mxu0 0.0
      %3276 = vmatpush1.msra.mxu0 0.0
      %3277 = vmatprep.subr.mxu0 0.0
      %3278 = vmatpush1.msra.mxu0 0.0
      %3279 = vmatprep.subr.mxu0 0.0
      %3280 = vmatpush1.msra.mxu0 0.0
      %3281 = vmatprep.subr.mxu0 0.0
      %3282 = vmatpush1.msra.mxu0 0.0
      %3283 = vmatprep.subr.mxu0 0.0
      %3284 = vmatpush1.msra.mxu0 0.0
      %3285 = vmatprep.subr.mxu0 0.0
      %3286 = vmatpush1.msra.mxu0 0.0
      %3287 = vmatprep.mubr.f32.mxu0 0.0
      %3288 = vmatmul.mubr.f32.gmra.mrb[0].mxu0 %v3221
      %v3289 = vpop.f32.mrb[0].mxu0
      %v3290 = vadd.f32 0.0, %v3289
      %v3291 = vpop.f32.mrb[0].mxu0
      %3292 = vdwg.mxu0
      %v3293 = vsel %vm1001, %v3068, inf
      %3294 = vmin.xlane.f32.xlu0 %v3293
      %v3295 = vpop.xlane.xlu0 %3294
      %vm3296 = vcmp.le.f32.partialorder %v3068, %v3295
      %v3297 = vsel %vm3296, %v833, 8.0
      %v3298 = vsel %vm1001, %v3297, inf
      %3299 = vmin.xlane.f32.xlu0 %v3298
      %v3300 = vpop.xlane.xlu0 %3299
      %vm3301 = vcmp.eq.f32.partialorder %v833, %v3300
      %v3302 = vsel %vm3301, 1e+30, %v3068
      %v3303 = vsel %vm3301, 1, 0
      %v3304 = vcvt.s32.f32 %v3303
      %v3306 = vsel %vm1001, %v3304, 0
      %3308 = vmatprep.subr.mxu0 0.0
      %3309 = vmatpush1.msra.mxu0 %v2840
      %3310 = vmatprep.subr.mxu0 0.0
      %3311 = vmatpush1.msra.mxu0 0.0
      %3312 = vmatprep.subr.mxu0 0.0
      %3313 = vmatpush1.msra.mxu0 0.0
      %3314 = vmatprep.subr.mxu0 0.0
      %3315 = vmatpush1.msra.mxu0 0.0
      %3316 = vmatprep.subr.mxu0 0.0
      %3317 = vmatpush1.msra.mxu0 0.0
      %3318 = vmatprep.subr.mxu0 0.0
      %3319 = vmatpush1.msra.mxu0 0.0
      %3320 = vmatprep.subr.mxu0 0.0
      %3321 = vmatpush1.msra.mxu0 0.0
      %3322 = vmatprep.subr.mxu0 0.0
      %3323 = vmatpush1.msra.mxu0 0.0
      %3324 = vmatprep.subr.mxu0 0.0
      %3325 = vmatpush1.msra.mxu0 0.0
      %3326 = vmatprep.subr.mxu0 0.0
      %3327 = vmatpush1.msra.mxu0 0.0
      %3328 = vmatprep.subr.mxu0 0.0
      %3329 = vmatpush1.msra.mxu0 0.0
      %3330 = vmatprep.subr.mxu0 0.0
      %3331 = vmatpush1.msra.mxu0 0.0
      %3332 = vmatprep.subr.mxu0 0.0
      %3333 = vmatpush1.msra.mxu0 0.0
      %3334 = vmatprep.subr.mxu0 0.0
      %3335 = vmatpush1.msra.mxu0 0.0
      %3336 = vmatprep.subr.mxu0 0.0
      %3337 = vmatpush1.msra.mxu0 0.0
      %3338 = vmatprep.subr.mxu0 0.0
      %3339 = vmatpush1.msra.mxu0 0.0
      %3340 = vmatprep.subr.mxu0 0.0
      %3341 = vmatpush1.msra.mxu0 0.0
      %3342 = vmatprep.subr.mxu0 0.0
      %3343 = vmatpush1.msra.mxu0 0.0
      %3344 = vmatprep.subr.mxu0 0.0
      %3345 = vmatpush1.msra.mxu0 0.0
      %3346 = vmatprep.subr.mxu0 0.0
      %3347 = vmatpush1.msra.mxu0 0.0
      %3348 = vmatprep.subr.mxu0 0.0
      %3349 = vmatpush1.msra.mxu0 0.0
      %3350 = vmatprep.subr.mxu0 0.0
      %3351 = vmatpush1.msra.mxu0 0.0
      %3352 = vmatprep.subr.mxu0 0.0
      %3353 = vmatpush1.msra.mxu0 0.0
      %3354 = vmatprep.subr.mxu0 0.0
      %3355 = vmatpush1.msra.mxu0 0.0
      %3356 = vmatprep.subr.mxu0 0.0
      %3357 = vmatpush1.msra.mxu0 0.0
      %3358 = vmatprep.subr.mxu0 0.0
      %3359 = vmatpush1.msra.mxu0 0.0
      %3360 = vmatprep.subr.mxu0 0.0
      %3361 = vmatpush1.msra.mxu0 0.0
      %3362 = vmatprep.subr.mxu0 0.0
      %3363 = vmatpush1.msra.mxu0 0.0
      %3364 = vmatprep.subr.mxu0 0.0
      %3365 = vmatpush1.msra.mxu0 0.0
      %3366 = vmatprep.subr.mxu0 0.0
      %3367 = vmatpush1.msra.mxu0 0.0
      %3368 = vmatprep.subr.mxu0 0.0
      %3369 = vmatpush1.msra.mxu0 0.0
      %3370 = vmatprep.subr.mxu0 0.0
      %3371 = vmatpush1.msra.mxu0 0.0
      %3372 = vmatprep.mubr.f32.mxu0 0.0
      %3373 = vmatmul.mubr.f32.gmra.mrb[0].mxu0 %v3306
      %v3374 = vpop.f32.mrb[0].mxu0
      %v3375 = vadd.f32 0.0, %v3374
      %v3376 = vpop.f32.mrb[0].mxu0
      %3377 = vdwg.mxu0
      %v3379 = vsel %vm1101, %v3375, 0
      %3381 = vmatprep.subr.mxu0 0.0
      %3382 = vmatpush1.msra.mxu0 %v2843
      %3383 = vmatprep.subr.mxu0 0.0
      %3384 = vmatpush1.msra.mxu0 %v2844
      %3385 = vmatprep.subr.mxu0 0.0
      %3386 = vmatpush1.msra.mxu0 0.0
      %3387 = vmatprep.subr.mxu0 0.0
      %3388 = vmatpush1.msra.mxu0 0.0
      %3389 = vmatprep.subr.mxu0 0.0
      %3390 = vmatpush1.msra.mxu0 0.0
      %3391 = vmatprep.subr.mxu0 0.0
      %3392 = vmatpush1.msra.mxu0 0.0
      %3393 = vmatprep.subr.mxu0 0.0
      %3394 = vmatpush1.msra.mxu0 0.0
      %3395 = vmatprep.subr.mxu0 0.0
      %3396 = vmatpush1.msra.mxu0 0.0
      %3397 = vmatprep.subr.mxu0 0.0
      %3398 = vmatpush1.msra.mxu0 0.0
      %3399 = vmatprep.subr.mxu0 0.0
      %3400 = vmatpush1.msra.mxu0 0.0
      %3401 = vmatprep.subr.mxu0 0.0
      %3402 = vmatpush1.msra.mxu0 0.0
      %3403 = vmatprep.subr.mxu0 0.0
      %3404 = vmatpush1.msra.mxu0 0.0
      %3405 = vmatprep.subr.mxu0 0.0
      %3406 = vmatpush1.msra.mxu0 0.0
      %3407 = vmatprep.subr.mxu0 0.0
      %3408 = vmatpush1.msra.mxu0 0.0
      %3409 = vmatprep.subr.mxu0 0.0
      %3410 = vmatpush1.msra.mxu0 0.0
      %3411 = vmatprep.subr.mxu0 0.0
      %3412 = vmatpush1.msra.mxu0 0.0
      %3413 = vmatprep.subr.mxu0 0.0
      %3414 = vmatpush1.msra.mxu0 0.0
      %3415 = vmatprep.subr.mxu0 0.0
      %3416 = vmatpush1.msra.mxu0 0.0
      %3417 = vmatprep.subr.mxu0 0.0
      %3418 = vmatpush1.msra.mxu0 0.0
      %3419 = vmatprep.subr.mxu0 0.0
      %3420 = vmatpush1.msra.mxu0 0.0
      %3421 = vmatprep.subr.mxu0 0.0
      %3422 = vmatpush1.msra.mxu0 0.0
      %3423 = vmatprep.subr.mxu0 0.0
      %3424 = vmatpush1.msra.mxu0 0.0
      %3425 = vmatprep.subr.mxu0 0.0
      %3426 = vmatpush1.msra.mxu0 0.0
      %3427 = vmatprep.subr.mxu0 0.0
      %3428 = vmatpush1.msra.mxu0 0.0
      %3429 = vmatprep.subr.mxu0 0.0
      %3430 = vmatpush1.msra.mxu0 0.0
      %3431 = vmatprep.subr.mxu0 0.0
      %3432 = vmatpush1.msra.mxu0 0.0
      %3433 = vmatprep.subr.mxu0 0.0
      %3434 = vmatpush1.msra.mxu0 0.0
      %3435 = vmatprep.subr.mxu0 0.0
      %3436 = vmatpush1.msra.mxu0 0.0
      %3437 = vmatprep.subr.mxu0 0.0
      %3438 = vmatpush1.msra.mxu0 0.0
      %3439 = vmatprep.subr.mxu0 0.0
      %3440 = vmatpush1.msra.mxu0 0.0
      %3441 = vmatprep.subr.mxu0 0.0
      %3442 = vmatpush1.msra.mxu0 0.0
      %3443 = vmatprep.subr.mxu0 0.0
      %3444 = vmatpush1.msra.mxu0 0.0
      %3445 = vmatprep.mubr.f32.mxu0 0.0
      %3446 = vmatmul.mubr.f32.gmra.mrb[0].mxu0 %v3379
      %v3447 = vpop.f32.mrb[0].mxu0
      %v3448 = vadd.f32 0.0, %v3447
      %v3449 = vpop.f32.mrb[0].mxu0
      %3450 = vdwg.mxu0
      %v3451 = vadd.f32 %v3056, %v3448
      %v3452 = vmax.f32 %v3451, 0.0
      %v3454 = vsel %vm3219, %v3452, 0
      %3456 = vmatprep.subr.mxu0 0.0
      %3457 = vmatpush1.msra.mxu0 %v2846
      %3458 = vmatprep.subr.mxu0 0.0
      %3459 = vmatpush1.msra.mxu0 %v2847
      %3460 = vmatprep.subr.mxu0 0.0
      %3461 = vmatpush1.msra.mxu0 %v2848
      %3462 = vmatprep.subr.mxu0 0.0
      %3463 = vmatpush1.msra.mxu0 %v2849
      %3464 = vmatprep.subr.mxu0 0.0
      %3465 = vmatpush1.msra.mxu0 0.0
      %3466 = vmatprep.subr.mxu0 0.0
      %3467 = vmatpush1.msra.mxu0 0.0
      %3468 = vmatprep.subr.mxu0 0.0
      %3469 = vmatpush1.msra.mxu0 0.0
      %3470 = vmatprep.subr.mxu0 0.0
      %3471 = vmatpush1.msra.mxu0 0.0
      %3472 = vmatprep.subr.mxu0 0.0
      %3473 = vmatpush1.msra.mxu0 0.0
      %3474 = vmatprep.subr.mxu0 0.0
      %3475 = vmatpush1.msra.mxu0 0.0
      %3476 = vmatprep.subr.mxu0 0.0
      %3477 = vmatpush1.msra.mxu0 0.0
      %3478 = vmatprep.subr.mxu0 0.0
      %3479 = vmatpush1.msra.mxu0 0.0
      %3480 = vmatprep.subr.mxu0 0.0
      %3481 = vmatpush1.msra.mxu0 0.0
      %3482 = vmatprep.subr.mxu0 0.0
      %3483 = vmatpush1.msra.mxu0 0.0
      %3484 = vmatprep.subr.mxu0 0.0
      %3485 = vmatpush1.msra.mxu0 0.0
      %3486 = vmatprep.subr.mxu0 0.0
      %3487 = vmatpush1.msra.mxu0 0.0
      %3488 = vmatprep.subr.mxu0 0.0
      %3489 = vmatpush1.msra.mxu0 0.0
      %3490 = vmatprep.subr.mxu0 0.0
      %3491 = vmatpush1.msra.mxu0 0.0
      %3492 = vmatprep.subr.mxu0 0.0
      %3493 = vmatpush1.msra.mxu0 0.0
      %3494 = vmatprep.subr.mxu0 0.0
      %3495 = vmatpush1.msra.mxu0 0.0
      %3496 = vmatprep.subr.mxu0 0.0
      %3497 = vmatpush1.msra.mxu0 0.0
      %3498 = vmatprep.subr.mxu0 0.0
      %3499 = vmatpush1.msra.mxu0 0.0
      %3500 = vmatprep.subr.mxu0 0.0
      %3501 = vmatpush1.msra.mxu0 0.0
      %3502 = vmatprep.subr.mxu0 0.0
      %3503 = vmatpush1.msra.mxu0 0.0
      %3504 = vmatprep.subr.mxu0 0.0
      %3505 = vmatpush1.msra.mxu0 0.0
      %3506 = vmatprep.subr.mxu0 0.0
      %3507 = vmatpush1.msra.mxu0 0.0
      %3508 = vmatprep.subr.mxu0 0.0
      %3509 = vmatpush1.msra.mxu0 0.0
      %3510 = vmatprep.subr.mxu0 0.0
      %3511 = vmatpush1.msra.mxu0 0.0
      %3512 = vmatprep.subr.mxu0 0.0
      %3513 = vmatpush1.msra.mxu0 0.0
      %3514 = vmatprep.subr.mxu0 0.0
      %3515 = vmatpush1.msra.mxu0 0.0
      %3516 = vmatprep.subr.mxu0 0.0
      %3517 = vmatpush1.msra.mxu0 0.0
      %3518 = vmatprep.subr.mxu0 0.0
      %3519 = vmatpush1.msra.mxu0 0.0
      %3520 = vmatprep.mubr.f32.mxu0 0.0
      %3521 = vmatmul.mubr.f32.gmra.mrb[0].mxu0 %v3454
      %v3522 = vpop.f32.mrb[0].mxu0
      %v3523 = vadd.f32 0.0, %v3522
      %v3524 = vpop.f32.mrb[0].mxu0
      %3525 = vdwg.mxu0
      %v3526 = vmax.f32 %v3290, %v3523
      %v3527 = vsel %vm1001, %v3302, inf
      %3528 = vmin.xlane.f32.xlu0 %v3527
      %v3529 = vpop.xlane.xlu0 %3528
      %vm3530 = vcmp.le.f32.partialorder %v3302, %v3529
      %v3531 = vsel %vm3530, %v833, 8.0
      %v3532 = vsel %vm1001, %v3531, inf
      %3533 = vmin.xlane.f32.xlu0 %v3532
      %v3534 = vpop.xlane.xlu0 %3533
      %vm3535 = vcmp.eq.f32.partialorder %v833, %v3534
      %v3536 = vsel %vm3535, 1e+30, %v3302
      %v3537 = vsel %vm3535, 1, 0
      %v3538 = vcvt.s32.f32 %v3537
      %v3540 = vsel %vm1001, %v3538, 0
      %3542 = vmatprep.subr.mxu0 0.0
      %3543 = vmatpush1.msra.mxu0 %v2840
      %3544 = vmatprep.subr.mxu0 0.0
      %3545 = vmatpush1.msra.mxu0 0.0
      %3546 = vmatprep.subr.mxu0 0.0
      %3547 = vmatpush1.msra.mxu0 0.0
      %3548 = vmatprep.subr.mxu0 0.0
      %3549 = vmatpush1.msra.mxu0 0.0
      %3550 = vmatprep.subr.mxu0 0.0
      %3551 = vmatpush1.msra.mxu0 0.0
      %3552 = vmatprep.subr.mxu0 0.0
      %3553 = vmatpush1.msra.mxu0 0.0
      %3554 = vmatprep.subr.mxu0 0.0
      %3555 = vmatpush1.msra.mxu0 0.0
      %3556 = vmatprep.subr.mxu0 0.0
      %3557 = vmatpush1.msra.mxu0 0.0
      %3558 = vmatprep.subr.mxu0 0.0
      %3559 = vmatpush1.msra.mxu0 0.0
      %3560 = vmatprep.subr.mxu0 0.0
      %3561 = vmatpush1.msra.mxu0 0.0
      %3562 = vmatprep.subr.mxu0 0.0
      %3563 = vmatpush1.msra.mxu0 0.0
      %3564 = vmatprep.subr.mxu0 0.0
      %3565 = vmatpush1.msra.mxu0 0.0
      %3566 = vmatprep.subr.mxu0 0.0
      %3567 = vmatpush1.msra.mxu0 0.0
      %3568 = vmatprep.subr.mxu0 0.0
      %3569 = vmatpush1.msra.mxu0 0.0
      %3570 = vmatprep.subr.mxu0 0.0
      %3571 = vmatpush1.msra.mxu0 0.0
      %3572 = vmatprep.subr.mxu0 0.0
      %3573 = vmatpush1.msra.mxu0 0.0
      %3574 = vmatprep.subr.mxu0 0.0
      %3575 = vmatpush1.msra.mxu0 0.0
      %3576 = vmatprep.subr.mxu0 0.0
      %3577 = vmatpush1.msra.mxu0 0.0
      %3578 = vmatprep.subr.mxu0 0.0
      %3579 = vmatpush1.msra.mxu0 0.0
      %3580 = vmatprep.subr.mxu0 0.0
      %3581 = vmatpush1.msra.mxu0 0.0
      %3582 = vmatprep.subr.mxu0 0.0
      %3583 = vmatpush1.msra.mxu0 0.0
      %3584 = vmatprep.subr.mxu0 0.0
      %3585 = vmatpush1.msra.mxu0 0.0
      %3586 = vmatprep.subr.mxu0 0.0
      %3587 = vmatpush1.msra.mxu0 0.0
      %3588 = vmatprep.subr.mxu0 0.0
      %3589 = vmatpush1.msra.mxu0 0.0
      %3590 = vmatprep.subr.mxu0 0.0
      %3591 = vmatpush1.msra.mxu0 0.0
      %3592 = vmatprep.subr.mxu0 0.0
      %3593 = vmatpush1.msra.mxu0 0.0
      %3594 = vmatprep.subr.mxu0 0.0
      %3595 = vmatpush1.msra.mxu0 0.0
      %3596 = vmatprep.subr.mxu0 0.0
      %3597 = vmatpush1.msra.mxu0 0.0
      %3598 = vmatprep.subr.mxu0 0.0
      %3599 = vmatpush1.msra.mxu0 0.0
      %3600 = vmatprep.subr.mxu0 0.0
      %3601 = vmatpush1.msra.mxu0 0.0
      %3602 = vmatprep.subr.mxu0 0.0
      %3603 = vmatpush1.msra.mxu0 0.0
      %3604 = vmatprep.subr.mxu0 0.0
      %3605 = vmatpush1.msra.mxu0 0.0
      %3606 = vmatprep.mubr.f32.mxu0 0.0
      %3607 = vmatmul.mubr.f32.gmra.mrb[0].mxu0 %v3540
      %v3608 = vpop.f32.mrb[0].mxu0
      %v3609 = vadd.f32 0.0, %v3608
      %v3610 = vpop.f32.mrb[0].mxu0
      %3611 = vdwg.mxu0
      %v3613 = vsel %vm1101, %v3609, 0
      %3615 = vmatprep.subr.mxu0 0.0
      %3616 = vmatpush1.msra.mxu0 %v2843
      %3617 = vmatprep.subr.mxu0 0.0
      %3618 = vmatpush1.msra.mxu0 %v2844
      %3619 = vmatprep.subr.mxu0 0.0
      %3620 = vmatpush1.msra.mxu0 0.0
      %3621 = vmatprep.subr.mxu0 0.0
      %3622 = vmatpush1.msra.mxu0 0.0
      %3623 = vmatprep.subr.mxu0 0.0
      %3624 = vmatpush1.msra.mxu0 0.0
      %3625 = vmatprep.subr.mxu0 0.0
      %3626 = vmatpush1.msra.mxu0 0.0
      %3627 = vmatprep.subr.mxu0 0.0
      %3628 = vmatpush1.msra.mxu0 0.0
      %3629 = vmatprep.subr.mxu0 0.0
      %3630 = vmatpush1.msra.mxu0 0.0
      %3631 = vmatprep.subr.mxu0 0.0
      %3632 = vmatpush1.msra.mxu0 0.0
      %3633 = vmatprep.subr.mxu0 0.0
      %3634 = vmatpush1.msra.mxu0 0.0
      %3635 = vmatprep.subr.mxu0 0.0
      %3636 = vmatpush1.msra.mxu0 0.0
      %3637 = vmatprep.subr.mxu0 0.0
      %3638 = vmatpush1.msra.mxu0 0.0
      %3639 = vmatprep.subr.mxu0 0.0
      %3640 = vmatpush1.msra.mxu0 0.0
      %3641 = vmatprep.subr.mxu0 0.0
      %3642 = vmatpush1.msra.mxu0 0.0
      %3643 = vmatprep.subr.mxu0 0.0
      %3644 = vmatpush1.msra.mxu0 0.0
      %3645 = vmatprep.subr.mxu0 0.0
      %3646 = vmatpush1.msra.mxu0 0.0
      %3647 = vmatprep.subr.mxu0 0.0
      %3648 = vmatpush1.msra.mxu0 0.0
      %3649 = vmatprep.subr.mxu0 0.0
      %3650 = vmatpush1.msra.mxu0 0.0
      %3651 = vmatprep.subr.mxu0 0.0
      %3652 = vmatpush1.msra.mxu0 0.0
      %3653 = vmatprep.subr.mxu0 0.0
      %3654 = vmatpush1.msra.mxu0 0.0
      %3655 = vmatprep.subr.mxu0 0.0
      %3656 = vmatpush1.msra.mxu0 0.0
      %3657 = vmatprep.subr.mxu0 0.0
      %3658 = vmatpush1.msra.mxu0 0.0
      %3659 = vmatprep.subr.mxu0 0.0
      %3660 = vmatpush1.msra.mxu0 0.0
      %3661 = vmatprep.subr.mxu0 0.0
      %3662 = vmatpush1.msra.mxu0 0.0
      %3663 = vmatprep.subr.mxu0 0.0
      %3664 = vmatpush1.msra.mxu0 0.0
      %3665 = vmatprep.subr.mxu0 0.0
      %3666 = vmatpush1.msra.mxu0 0.0
      %3667 = vmatprep.subr.mxu0 0.0
      %3668 = vmatpush1.msra.mxu0 0.0
      %3669 = vmatprep.subr.mxu0 0.0
      %3670 = vmatpush1.msra.mxu0 0.0
      %3671 = vmatprep.subr.mxu0 0.0
      %3672 = vmatpush1.msra.mxu0 0.0
      %3673 = vmatprep.subr.mxu0 0.0
      %3674 = vmatpush1.msra.mxu0 0.0
      %3675 = vmatprep.subr.mxu0 0.0
      %3676 = vmatpush1.msra.mxu0 0.0
      %3677 = vmatprep.subr.mxu0 0.0
      %3678 = vmatpush1.msra.mxu0 0.0
      %3679 = vmatprep.mubr.f32.mxu0 0.0
      %3680 = vmatmul.mubr.f32.gmra.mrb[0].mxu0 %v3613
      %v3681 = vpop.f32.mrb[0].mxu0
      %v3682 = vadd.f32 0.0, %v3681
      %v3683 = vpop.f32.mrb[0].mxu0
      %3684 = vdwg.mxu0
      %v3685 = vadd.f32 %v3056, %v3682
      %v3686 = vmax.f32 %v3685, 0.0
      %v3688 = vsel %vm3219, %v3686, 0
      %3690 = vmatprep.subr.mxu0 0.0
      %3691 = vmatpush1.msra.mxu0 %v2846
      %3692 = vmatprep.subr.mxu0 0.0
      %3693 = vmatpush1.msra.mxu0 %v2847
      %3694 = vmatprep.subr.mxu0 0.0
      %3695 = vmatpush1.msra.mxu0 %v2848
      %3696 = vmatprep.subr.mxu0 0.0
      %3697 = vmatpush1.msra.mxu0 %v2849
      %3698 = vmatprep.subr.mxu0 0.0
      %3699 = vmatpush1.msra.mxu0 0.0
      %3700 = vmatprep.subr.mxu0 0.0
      %3701 = vmatpush1.msra.mxu0 0.0
      %3702 = vmatprep.subr.mxu0 0.0
      %3703 = vmatpush1.msra.mxu0 0.0
      %3704 = vmatprep.subr.mxu0 0.0
      %3705 = vmatpush1.msra.mxu0 0.0
      %3706 = vmatprep.subr.mxu0 0.0
      %3707 = vmatpush1.msra.mxu0 0.0
      %3708 = vmatprep.subr.mxu0 0.0
      %3709 = vmatpush1.msra.mxu0 0.0
      %3710 = vmatprep.subr.mxu0 0.0
      %3711 = vmatpush1.msra.mxu0 0.0
      %3712 = vmatprep.subr.mxu0 0.0
      %3713 = vmatpush1.msra.mxu0 0.0
      %3714 = vmatprep.subr.mxu0 0.0
      %3715 = vmatpush1.msra.mxu0 0.0
      %3716 = vmatprep.subr.mxu0 0.0
      %3717 = vmatpush1.msra.mxu0 0.0
      %3718 = vmatprep.subr.mxu0 0.0
      %3719 = vmatpush1.msra.mxu0 0.0
      %3720 = vmatprep.subr.mxu0 0.0
      %3721 = vmatpush1.msra.mxu0 0.0
      %3722 = vmatprep.subr.mxu0 0.0
      %3723 = vmatpush1.msra.mxu0 0.0
      %3724 = vmatprep.subr.mxu0 0.0
      %3725 = vmatpush1.msra.mxu0 0.0
      %3726 = vmatprep.subr.mxu0 0.0
      %3727 = vmatpush1.msra.mxu0 0.0
      %3728 = vmatprep.subr.mxu0 0.0
      %3729 = vmatpush1.msra.mxu0 0.0
      %3730 = vmatprep.subr.mxu0 0.0
      %3731 = vmatpush1.msra.mxu0 0.0
      %3732 = vmatprep.subr.mxu0 0.0
      %3733 = vmatpush1.msra.mxu0 0.0
      %3734 = vmatprep.subr.mxu0 0.0
      %3735 = vmatpush1.msra.mxu0 0.0
      %3736 = vmatprep.subr.mxu0 0.0
      %3737 = vmatpush1.msra.mxu0 0.0
      %3738 = vmatprep.subr.mxu0 0.0
      %3739 = vmatpush1.msra.mxu0 0.0
      %3740 = vmatprep.subr.mxu0 0.0
      %3741 = vmatpush1.msra.mxu0 0.0
      %3742 = vmatprep.subr.mxu0 0.0
      %3743 = vmatpush1.msra.mxu0 0.0
      %3744 = vmatprep.subr.mxu0 0.0
      %3745 = vmatpush1.msra.mxu0 0.0
      %3746 = vmatprep.subr.mxu0 0.0
      %3747 = vmatpush1.msra.mxu0 0.0
      %3748 = vmatprep.subr.mxu0 0.0
      %3749 = vmatpush1.msra.mxu0 0.0
      %3750 = vmatprep.subr.mxu0 0.0
      %3751 = vmatpush1.msra.mxu0 0.0
      %3752 = vmatprep.subr.mxu0 0.0
      %3753 = vmatpush1.msra.mxu0 0.0
      %3754 = vmatprep.mubr.f32.mxu0 0.0
      %3755 = vmatmul.mubr.f32.gmra.mrb[0].mxu0 %v3688
      %v3756 = vpop.f32.mrb[0].mxu0
      %v3757 = vadd.f32 0.0, %v3756
      %v3758 = vpop.f32.mrb[0].mxu0
      %3759 = vdwg.mxu0
      %v3760 = vmax.f32 %v3526, %v3757
      %v3761 = vsel %vm1001, %v3536, inf
      %3762 = vmin.xlane.f32.xlu0 %v3761
      %v3763 = vpop.xlane.xlu0 %3762
      %vm3764 = vcmp.le.f32.partialorder %v3536, %v3763
      %v3765 = vsel %vm3764, %v833, 8.0
      %v3766 = vsel %vm1001, %v3765, inf
      %3767 = vmin.xlane.f32.xlu0 %v3766
      %v3768 = vpop.xlane.xlu0 %3767
      %vm3769 = vcmp.eq.f32.partialorder %v833, %v3768
      %v3770 = vsel %vm3769, 1, 0
      %v3771 = vcvt.s32.f32 %v3770
      %v3773 = vsel %vm1001, %v3771, 0
      %3775 = vmatprep.subr.mxu0 0.0
      %3776 = vmatpush1.msra.mxu0 %v2840
      %3777 = vmatprep.subr.mxu0 0.0
      %3778 = vmatpush1.msra.mxu0 0.0
      %3779 = vmatprep.subr.mxu0 0.0
      %3780 = vmatpush1.msra.mxu0 0.0
      %3781 = vmatprep.subr.mxu0 0.0
      %3782 = vmatpush1.msra.mxu0 0.0
      %3783 = vmatprep.subr.mxu0 0.0
      %3784 = vmatpush1.msra.mxu0 0.0
      %3785 = vmatprep.subr.mxu0 0.0
      %3786 = vmatpush1.msra.mxu0 0.0
      %3787 = vmatprep.subr.mxu0 0.0
      %3788 = vmatpush1.msra.mxu0 0.0
      %3789 = vmatprep.subr.mxu0 0.0
      %3790 = vmatpush1.msra.mxu0 0.0
      %3791 = vmatprep.subr.mxu0 0.0
      %3792 = vmatpush1.msra.mxu0 0.0
      %3793 = vmatprep.subr.mxu0 0.0
      %3794 = vmatpush1.msra.mxu0 0.0
      %3795 = vmatprep.subr.mxu0 0.0
      %3796 = vmatpush1.msra.mxu0 0.0
      %3797 = vmatprep.subr.mxu0 0.0
      %3798 = vmatpush1.msra.mxu0 0.0
      %3799 = vmatprep.subr.mxu0 0.0
      %3800 = vmatpush1.msra.mxu0 0.0
      %3801 = vmatprep.subr.mxu0 0.0
      %3802 = vmatpush1.msra.mxu0 0.0
      %3803 = vmatprep.subr.mxu0 0.0
      %3804 = vmatpush1.msra.mxu0 0.0
      %3805 = vmatprep.subr.mxu0 0.0
      %3806 = vmatpush1.msra.mxu0 0.0
      %3807 = vmatprep.subr.mxu0 0.0
      %3808 = vmatpush1.msra.mxu0 0.0
      %3809 = vmatprep.subr.mxu0 0.0
      %3810 = vmatpush1.msra.mxu0 0.0
      %3811 = vmatprep.subr.mxu0 0.0
      %3812 = vmatpush1.msra.mxu0 0.0
      %3813 = vmatprep.subr.mxu0 0.0
      %3814 = vmatpush1.msra.mxu0 0.0
      %3815 = vmatprep.subr.mxu0 0.0
      %3816 = vmatpush1.msra.mxu0 0.0
      %3817 = vmatprep.subr.mxu0 0.0
      %3818 = vmatpush1.msra.mxu0 0.0
      %3819 = vmatprep.subr.mxu0 0.0
      %3820 = vmatpush1.msra.mxu0 0.0
      %3821 = vmatprep.subr.mxu0 0.0
      %3822 = vmatpush1.msra.mxu0 0.0
      %3823 = vmatprep.subr.mxu0 0.0
      %3824 = vmatpush1.msra.mxu0 0.0
      %3825 = vmatprep.subr.mxu0 0.0
      %3826 = vmatpush1.msra.mxu0 0.0
      %3827 = vmatprep.subr.mxu0 0.0
      %3828 = vmatpush1.msra.mxu0 0.0
      %3829 = vmatprep.subr.mxu0 0.0
      %3830 = vmatpush1.msra.mxu0 0.0
      %3831 = vmatprep.subr.mxu0 0.0
      %3832 = vmatpush1.msra.mxu0 0.0
      %3833 = vmatprep.subr.mxu0 0.0
      %3834 = vmatpush1.msra.mxu0 0.0
      %3835 = vmatprep.subr.mxu0 0.0
      %3836 = vmatpush1.msra.mxu0 0.0
      %3837 = vmatprep.subr.mxu0 0.0
      %3838 = vmatpush1.msra.mxu0 0.0
      %3839 = vmatprep.mubr.f32.mxu0 0.0
      %3840 = vmatmul.mubr.f32.gmra.mrb[0].mxu0 %v3773
      %v3841 = vpop.f32.mrb[0].mxu0
      %v3842 = vadd.f32 0.0, %v3841
      %v3843 = vpop.f32.mrb[0].mxu0
      %3844 = vdwg.mxu0
      %v3846 = vsel %vm1101, %v3842, 0
      %3848 = vmatprep.subr.mxu0 0.0
      %3849 = vmatpush1.msra.mxu0 %v2843
      %3850 = vmatprep.subr.mxu0 0.0
      %3851 = vmatpush1.msra.mxu0 %v2844
      %3852 = vmatprep.subr.mxu0 0.0
      %3853 = vmatpush1.msra.mxu0 0.0
      %3854 = vmatprep.subr.mxu0 0.0
      %3855 = vmatpush1.msra.mxu0 0.0
      %3856 = vmatprep.subr.mxu0 0.0
      %3857 = vmatpush1.msra.mxu0 0.0
      %3858 = vmatprep.subr.mxu0 0.0
      %3859 = vmatpush1.msra.mxu0 0.0
      %3860 = vmatprep.subr.mxu0 0.0
      %3861 = vmatpush1.msra.mxu0 0.0
      %3862 = vmatprep.subr.mxu0 0.0
      %3863 = vmatpush1.msra.mxu0 0.0
      %3864 = vmatprep.subr.mxu0 0.0
      %3865 = vmatpush1.msra.mxu0 0.0
      %3866 = vmatprep.subr.mxu0 0.0
      %3867 = vmatpush1.msra.mxu0 0.0
      %3868 = vmatprep.subr.mxu0 0.0
      %3869 = vmatpush1.msra.mxu0 0.0
      %3870 = vmatprep.subr.mxu0 0.0
      %3871 = vmatpush1.msra.mxu0 0.0
      %3872 = vmatprep.subr.mxu0 0.0
      %3873 = vmatpush1.msra.mxu0 0.0
      %3874 = vmatprep.subr.mxu0 0.0
      %3875 = vmatpush1.msra.mxu0 0.0
      %3876 = vmatprep.subr.mxu0 0.0
      %3877 = vmatpush1.msra.mxu0 0.0
      %3878 = vmatprep.subr.mxu0 0.0
      %3879 = vmatpush1.msra.mxu0 0.0
      %3880 = vmatprep.subr.mxu0 0.0
      %3881 = vmatpush1.msra.mxu0 0.0
      %3882 = vmatprep.subr.mxu0 0.0
      %3883 = vmatpush1.msra.mxu0 0.0
      %3884 = vmatprep.subr.mxu0 0.0
      %3885 = vmatpush1.msra.mxu0 0.0
      %3886 = vmatprep.subr.mxu0 0.0
      %3887 = vmatpush1.msra.mxu0 0.0
      %3888 = vmatprep.subr.mxu0 0.0
      %3889 = vmatpush1.msra.mxu0 0.0
      %3890 = vmatprep.subr.mxu0 0.0
      %3891 = vmatpush1.msra.mxu0 0.0
      %3892 = vmatprep.subr.mxu0 0.0
      %3893 = vmatpush1.msra.mxu0 0.0
      %3894 = vmatprep.subr.mxu0 0.0
      %3895 = vmatpush1.msra.mxu0 0.0
      %3896 = vmatprep.subr.mxu0 0.0
      %3897 = vmatpush1.msra.mxu0 0.0
      %3898 = vmatprep.subr.mxu0 0.0
      %3899 = vmatpush1.msra.mxu0 0.0
      %3900 = vmatprep.subr.mxu0 0.0
      %3901 = vmatpush1.msra.mxu0 0.0
      %3902 = vmatprep.subr.mxu0 0.0
      %3903 = vmatpush1.msra.mxu0 0.0
      %3904 = vmatprep.subr.mxu0 0.0
      %3905 = vmatpush1.msra.mxu0 0.0
      %3906 = vmatprep.subr.mxu0 0.0
      %3907 = vmatpush1.msra.mxu0 0.0
      %3908 = vmatprep.subr.mxu0 0.0
      %3909 = vmatpush1.msra.mxu0 0.0
      %3910 = vmatprep.subr.mxu0 0.0
      %3911 = vmatpush1.msra.mxu0 0.0
      %3912 = vmatprep.mubr.f32.mxu0 0.0
      %3913 = vmatmul.mubr.f32.gmra.mrb[0].mxu0 %v3846
      %v3914 = vpop.f32.mrb[0].mxu0
      %v3915 = vadd.f32 0.0, %v3914
      %v3916 = vpop.f32.mrb[0].mxu0
      %3917 = vdwg.mxu0
      %v3918 = vadd.f32 %v3056, %v3915
      %v3919 = vmax.f32 %v3918, 0.0
      %v3921 = vsel %vm3219, %v3919, 0
      %3923 = vmatprep.subr.mxu0 0.0
      %3924 = vmatpush1.msra.mxu0 %v2846
      %3925 = vmatprep.subr.mxu0 0.0
      %3926 = vmatpush1.msra.mxu0 %v2847
      %3927 = vmatprep.subr.mxu0 0.0
      %3928 = vmatpush1.msra.mxu0 %v2848
      %3929 = vmatprep.subr.mxu0 0.0
      %3930 = vmatpush1.msra.mxu0 %v2849
      %3931 = vmatprep.subr.mxu0 0.0
      %3932 = vmatpush1.msra.mxu0 0.0
      %3933 = vmatprep.subr.mxu0 0.0
      %3934 = vmatpush1.msra.mxu0 0.0
      %3935 = vmatprep.subr.mxu0 0.0
      %3936 = vmatpush1.msra.mxu0 0.0
      %3937 = vmatprep.subr.mxu0 0.0
      %3938 = vmatpush1.msra.mxu0 0.0
      %3939 = vmatprep.subr.mxu0 0.0
      %3940 = vmatpush1.msra.mxu0 0.0
      %3941 = vmatprep.subr.mxu0 0.0
      %3942 = vmatpush1.msra.mxu0 0.0
      %3943 = vmatprep.subr.mxu0 0.0
      %3944 = vmatpush1.msra.mxu0 0.0
      %3945 = vmatprep.subr.mxu0 0.0
      %3946 = vmatpush1.msra.mxu0 0.0
      %3947 = vmatprep.subr.mxu0 0.0
      %3948 = vmatpush1.msra.mxu0 0.0
      %3949 = vmatprep.subr.mxu0 0.0
      %3950 = vmatpush1.msra.mxu0 0.0
      %3951 = vmatprep.subr.mxu0 0.0
      %3952 = vmatpush1.msra.mxu0 0.0
      %3953 = vmatprep.subr.mxu0 0.0
      %3954 = vmatpush1.msra.mxu0 0.0
      %3955 = vmatprep.subr.mxu0 0.0
      %3956 = vmatpush1.msra.mxu0 0.0
      %3957 = vmatprep.subr.mxu0 0.0
      %3958 = vmatpush1.msra.mxu0 0.0
      %3959 = vmatprep.subr.mxu0 0.0
      %3960 = vmatpush1.msra.mxu0 0.0
      %3961 = vmatprep.subr.mxu0 0.0
      %3962 = vmatpush1.msra.mxu0 0.0
      %3963 = vmatprep.subr.mxu0 0.0
      %3964 = vmatpush1.msra.mxu0 0.0
      %3965 = vmatprep.subr.mxu0 0.0
      %3966 = vmatpush1.msra.mxu0 0.0
      %3967 = vmatprep.subr.mxu0 0.0
      %3968 = vmatpush1.msra.mxu0 0.0
      %3969 = vmatprep.subr.mxu0 0.0
      %3970 = vmatpush1.msra.mxu0 0.0
      %3971 = vmatprep.subr.mxu0 0.0
      %3972 = vmatpush1.msra.mxu0 0.0
      %3973 = vmatprep.subr.mxu0 0.0
      %3974 = vmatpush1.msra.mxu0 0.0
      %3975 = vmatprep.subr.mxu0 0.0
      %3976 = vmatpush1.msra.mxu0 0.0
      %3977 = vmatprep.subr.mxu0 0.0
      %3978 = vmatpush1.msra.mxu0 0.0
      %3979 = vmatprep.subr.mxu0 0.0
      %3980 = vmatpush1.msra.mxu0 0.0
      %3981 = vmatprep.subr.mxu0 0.0
      %3982 = vmatpush1.msra.mxu0 0.0
      %3983 = vmatprep.subr.mxu0 0.0
      %3984 = vmatpush1.msra.mxu0 0.0
      %3985 = vmatprep.subr.mxu0 0.0
      %3986 = vmatpush1.msra.mxu0 0.0
      %3987 = vmatprep.mubr.f32.mxu0 0.0
      %3988 = vmatmul.mubr.f32.gmra.mrb[0].mxu0 %v3921
      %v3989 = vpop.f32.mrb[0].mxu0
      %v3990 = vadd.f32 0.0, %v3989
      %v3991 = vpop.f32.mrb[0].mxu0
      %3992 = vdwg.mxu0
      %v3993 = vmax.f32 %v3760, %v3990
      %v3995 = vlaneseq
      %v3996 = vshrl.u32 %v3995, 7
      %v3997 = vsub.s32 0, %v3996
      %v3998 = vrot.slane %v2850, %v3997
      %v4000 = vadd.f32 %v3993, %v3998
      %v4001 = vld [vmem:[%s17] sm:$0xff]
      %v4002 = vld [vmem:[%s17 + $0x8] sm:$0xff]
      %v4003 = vld [vmem:[%s18] sm:$0xff]
      %v4004 = vld [vmem:[%s18 + $0x8] sm:$0xff]
      %4005 = vmatprep.subr.mxu0 0.0
      %4006 = vmatpush1.msra.mxu0 %v4003
      %4007 = vmatprep.subr.mxu0 0.0
      %4008 = vmatpush1.msra.mxu0 %v4004
      %4009 = vmatprep.subr.mxu0 0.0
      %4010 = vmatpush1.msra.mxu0 0.0
      %4011 = vmatprep.subr.mxu0 0.0
      %4012 = vmatpush1.msra.mxu0 0.0
      %4013 = vmatprep.subr.mxu0 0.0
      %4014 = vmatpush1.msra.mxu0 0.0
      %4015 = vmatprep.subr.mxu0 0.0
      %4016 = vmatpush1.msra.mxu0 0.0
      %4017 = vmatprep.subr.mxu0 0.0
      %4018 = vmatpush1.msra.mxu0 0.0
      %4019 = vmatprep.subr.mxu0 0.0
      %4020 = vmatpush1.msra.mxu0 0.0
      %4021 = vmatprep.subr.mxu0 0.0
      %4022 = vmatpush1.msra.mxu0 0.0
      %4023 = vmatprep.subr.mxu0 0.0
      %4024 = vmatpush1.msra.mxu0 0.0
      %4025 = vmatprep.subr.mxu0 0.0
      %4026 = vmatpush1.msra.mxu0 0.0
      %4027 = vmatprep.subr.mxu0 0.0
      %4028 = vmatpush1.msra.mxu0 0.0
      %4029 = vmatprep.subr.mxu0 0.0
      %4030 = vmatpush1.msra.mxu0 0.0
      %4031 = vmatprep.subr.mxu0 0.0
      %4032 = vmatpush1.msra.mxu0 0.0
      %4033 = vmatprep.subr.mxu0 0.0
      %4034 = vmatpush1.msra.mxu0 0.0
      %4035 = vmatprep.subr.mxu0 0.0
      %4036 = vmatpush1.msra.mxu0 0.0
      %4037 = vmatprep.subr.mxu0 0.0
      %4038 = vmatpush1.msra.mxu0 0.0
      %4039 = vmatprep.subr.mxu0 0.0
      %4040 = vmatpush1.msra.mxu0 0.0
      %4041 = vmatprep.subr.mxu0 0.0
      %4042 = vmatpush1.msra.mxu0 0.0
      %4043 = vmatprep.subr.mxu0 0.0
      %4044 = vmatpush1.msra.mxu0 0.0
      %4045 = vmatprep.subr.mxu0 0.0
      %4046 = vmatpush1.msra.mxu0 0.0
      %4047 = vmatprep.subr.mxu0 0.0
      %4048 = vmatpush1.msra.mxu0 0.0
      %4049 = vmatprep.subr.mxu0 0.0
      %4050 = vmatpush1.msra.mxu0 0.0
      %4051 = vmatprep.subr.mxu0 0.0
      %4052 = vmatpush1.msra.mxu0 0.0
      %4053 = vmatprep.subr.mxu0 0.0
      %4054 = vmatpush1.msra.mxu0 0.0
      %4055 = vmatprep.subr.mxu0 0.0
      %4056 = vmatpush1.msra.mxu0 0.0
      %4057 = vmatprep.subr.mxu0 0.0
      %4058 = vmatpush1.msra.mxu0 0.0
      %4059 = vmatprep.subr.mxu0 0.0
      %4060 = vmatpush1.msra.mxu0 0.0
      %4061 = vmatprep.subr.mxu0 0.0
      %4062 = vmatpush1.msra.mxu0 0.0
      %4063 = vmatprep.subr.mxu0 0.0
      %4064 = vmatpush1.msra.mxu0 0.0
      %4065 = vmatprep.subr.mxu0 0.0
      %4066 = vmatpush1.msra.mxu0 0.0
      %4067 = vmatprep.subr.mxu0 0.0
      %4068 = vmatpush1.msra.mxu0 0.0
      %4069 = vmatprep.mubr.f32.mxu0 0.0
      %4070 = vmatmul.mubr.f32.gmra.mrb[0].mxu0 %v2987
      %v4071 = vpop.f32.mrb[0].mxu0
      %v4072 = vadd.f32 0.0, %v4071
      %v4073 = vpop.f32.mrb[0].mxu0
      %4074 = vdwg.mxu0
      %4075 = vmatprep.subr.mxu0 0.0
      %4076 = vmatpush1.msra.mxu0 %v4001
      %4077 = vmatprep.subr.mxu0 0.0
      %4078 = vmatpush1.msra.mxu0 %v4002
      %4079 = vmatprep.subr.mxu0 0.0
      %4080 = vmatpush1.msra.mxu0 0.0
      %4081 = vmatprep.subr.mxu0 0.0
      %4082 = vmatpush1.msra.mxu0 0.0
      %4083 = vmatprep.subr.mxu0 0.0
      %4084 = vmatpush1.msra.mxu0 0.0
      %4085 = vmatprep.subr.mxu0 0.0
      %4086 = vmatpush1.msra.mxu0 0.0
      %4087 = vmatprep.subr.mxu0 0.0
      %4088 = vmatpush1.msra.mxu0 0.0
      %4089 = vmatprep.subr.mxu0 0.0
      %4090 = vmatpush1.msra.mxu0 0.0
      %4091 = vmatprep.subr.mxu0 0.0
      %4092 = vmatpush1.msra.mxu0 0.0
      %4093 = vmatprep.subr.mxu0 0.0
      %4094 = vmatpush1.msra.mxu0 0.0
      %4095 = vmatprep.subr.mxu0 0.0
      %4096 = vmatpush1.msra.mxu0 0.0
      %4097 = vmatprep.subr.mxu0 0.0
      %4098 = vmatpush1.msra.mxu0 0.0
      %4099 = vmatprep.subr.mxu0 0.0
      %4100 = vmatpush1.msra.mxu0 0.0
      %4101 = vmatprep.subr.mxu0 0.0
      %4102 = vmatpush1.msra.mxu0 0.0
      %4103 = vmatprep.subr.mxu0 0.0
      %4104 = vmatpush1.msra.mxu0 0.0
      %4105 = vmatprep.subr.mxu0 0.0
      %4106 = vmatpush1.msra.mxu0 0.0
      %4107 = vmatprep.subr.mxu0 0.0
      %4108 = vmatpush1.msra.mxu0 0.0
      %4109 = vmatprep.subr.mxu0 0.0
      %4110 = vmatpush1.msra.mxu0 0.0
      %4111 = vmatprep.subr.mxu0 0.0
      %4112 = vmatpush1.msra.mxu0 0.0
      %4113 = vmatprep.subr.mxu0 0.0
      %4114 = vmatpush1.msra.mxu0 0.0
      %4115 = vmatprep.subr.mxu0 0.0
      %4116 = vmatpush1.msra.mxu0 0.0
      %4117 = vmatprep.subr.mxu0 0.0
      %4118 = vmatpush1.msra.mxu0 0.0
      %4119 = vmatprep.subr.mxu0 0.0
      %4120 = vmatpush1.msra.mxu0 0.0
      %4121 = vmatprep.subr.mxu0 0.0
      %4122 = vmatpush1.msra.mxu0 0.0
      %4123 = vmatprep.subr.mxu0 0.0
      %4124 = vmatpush1.msra.mxu0 0.0
      %4125 = vmatprep.subr.mxu0 0.0
      %4126 = vmatpush1.msra.mxu0 0.0
      %4127 = vmatprep.subr.mxu0 0.0
      %4128 = vmatpush1.msra.mxu0 0.0
      %4129 = vmatprep.subr.mxu0 0.0
      %4130 = vmatpush1.msra.mxu0 0.0
      %4131 = vmatprep.subr.mxu0 0.0
      %4132 = vmatpush1.msra.mxu0 0.0
      %4133 = vmatprep.subr.mxu0 0.0
      %4134 = vmatpush1.msra.mxu0 0.0
      %4135 = vmatprep.subr.mxu0 0.0
      %4136 = vmatpush1.msra.mxu0 0.0
      %4137 = vmatprep.subr.mxu0 0.0
      %4138 = vmatpush1.msra.mxu0 0.0
      %4139 = vmatprep.mubr.f32.mxu0 0.0
      %4140 = vmatmul.mubr.f32.gmra.mrb[0].mxu0 %v1828
      %v4141 = vpop.f32.mrb[0].mxu0
      %v4142 = vadd.f32 %v4072, %v4141
      %v4143 = vpop.f32.mrb[0].mxu0
      %4144 = vdwg.mxu0
      %v4145 = vld [vmem:[%s19] sm:$0xff]
      %v4146 = vld [vmem:[%s19 + $0x8] sm:$0xff]
      %v4147 = vld [vmem:[%s19 + $0x10] sm:$0xff]
      %v4148 = vld [vmem:[%s19 + $0x18] sm:$0xff]
      %v4150 = vsel %vm3219, %v4000, 0
      %4152 = vmatprep.subr.mxu0 0.0
      %4153 = vmatpush1.msra.mxu0 %v4145
      %4154 = vmatprep.subr.mxu0 0.0
      %4155 = vmatpush1.msra.mxu0 %v4146
      %4156 = vmatprep.subr.mxu0 0.0
      %4157 = vmatpush1.msra.mxu0 %v4147
      %4158 = vmatprep.subr.mxu0 0.0
      %4159 = vmatpush1.msra.mxu0 %v4148
      %4160 = vmatprep.subr.mxu0 0.0
      %4161 = vmatpush1.msra.mxu0 0.0
      %4162 = vmatprep.subr.mxu0 0.0
      %4163 = vmatpush1.msra.mxu0 0.0
      %4164 = vmatprep.subr.mxu0 0.0
      %4165 = vmatpush1.msra.mxu0 0.0
      %4166 = vmatprep.subr.mxu0 0.0
      %4167 = vmatpush1.msra.mxu0 0.0
      %4168 = vmatprep.subr.mxu0 0.0
      %4169 = vmatpush1.msra.mxu0 0.0
      %4170 = vmatprep.subr.mxu0 0.0
      %4171 = vmatpush1.msra.mxu0 0.0
      %4172 = vmatprep.subr.mxu0 0.0
      %4173 = vmatpush1.msra.mxu0 0.0
      %4174 = vmatprep.subr.mxu0 0.0
      %4175 = vmatpush1.msra.mxu0 0.0
      %4176 = vmatprep.subr.mxu0 0.0
      %4177 = vmatpush1.msra.mxu0 0.0
      %4178 = vmatprep.subr.mxu0 0.0
      %4179 = vmatpush1.msra.mxu0 0.0
      %4180 = vmatprep.subr.mxu0 0.0
      %4181 = vmatpush1.msra.mxu0 0.0
      %4182 = vmatprep.subr.mxu0 0.0
      %4183 = vmatpush1.msra.mxu0 0.0
      %4184 = vmatprep.subr.mxu0 0.0
      %4185 = vmatpush1.msra.mxu0 0.0
      %4186 = vmatprep.subr.mxu0 0.0
      %4187 = vmatpush1.msra.mxu0 0.0
      %4188 = vmatprep.subr.mxu0 0.0
      %4189 = vmatpush1.msra.mxu0 0.0
      %4190 = vmatprep.subr.mxu0 0.0
      %4191 = vmatpush1.msra.mxu0 0.0
      %4192 = vmatprep.subr.mxu0 0.0
      %4193 = vmatpush1.msra.mxu0 0.0
      %4194 = vmatprep.subr.mxu0 0.0
      %4195 = vmatpush1.msra.mxu0 0.0
      %4196 = vmatprep.subr.mxu0 0.0
      %4197 = vmatpush1.msra.mxu0 0.0
      %4198 = vmatprep.subr.mxu0 0.0
      %4199 = vmatpush1.msra.mxu0 0.0
      %4200 = vmatprep.subr.mxu0 0.0
      %4201 = vmatpush1.msra.mxu0 0.0
      %4202 = vmatprep.subr.mxu0 0.0
      %4203 = vmatpush1.msra.mxu0 0.0
      %4204 = vmatprep.subr.mxu0 0.0
      %4205 = vmatpush1.msra.mxu0 0.0
      %4206 = vmatprep.subr.mxu0 0.0
      %4207 = vmatpush1.msra.mxu0 0.0
      %4208 = vmatprep.subr.mxu0 0.0
      %4209 = vmatpush1.msra.mxu0 0.0
      %4210 = vmatprep.subr.mxu0 0.0
      %4211 = vmatpush1.msra.mxu0 0.0
      %4212 = vmatprep.subr.mxu0 0.0
      %4213 = vmatpush1.msra.mxu0 0.0
      %4214 = vmatprep.subr.mxu0 0.0
      %4215 = vmatpush1.msra.mxu0 0.0
      %4216 = vmatprep.mubr.f32.mxu0 0.0
      %4217 = vmatmul.mubr.f32.gmra.mrb[0].mxu0 %v4150
      %v4218 = vpop.f32.mrb[0].mxu0
      %v4219 = vadd.f32 0.0, %v4218
      %v4220 = vpop.f32.mrb[0].mxu0
      %4221 = vdwg.mxu0
      %v4222 = vadd.f32 %v4142, %v4219
      %v4223 = vld [vmem:[%s20] sm:$0x1]
      %v4225 = vlaneseq
      %v4226 = vshrl.u32 %v4225, 7
      %v4227 = vsub.s32 0, %v4226
      %v4228 = vrot.slane %v4223, %v4227
      %v4230 = vadd.f32 %v4222, %v4228
      %v4231 = vmax.f32 %v4230, 0.0
      %v4232 = vld [vmem:[%s21] sm:$0xff]
      %v4233 = vld [vmem:[%s21 + $0x8] sm:$0xff]
      %v4234 = vld [vmem:[%s21 + $0x10] sm:$0xff]
      %v4235 = vld [vmem:[%s21 + $0x18] sm:$0xff]
      %v4236 = vld [vmem:[%s22] sm:$0x1]
      %v4238 = vlaneseq
      %v4239 = vshrl.u32 %v4238, 7
      %v4240 = vsub.s32 0, %v4239
      %v4241 = vrot.slane %v4236, %v4240
      %v4244 = vsel %vm3219, %v4231, 0
      %4246 = vmatprep.subr.mxu0 0.0
      %4247 = vmatpush1.msra.mxu0 %v4232
      %4248 = vmatprep.subr.mxu0 0.0
      %4249 = vmatpush1.msra.mxu0 %v4233
      %4250 = vmatprep.subr.mxu0 0.0
      %4251 = vmatpush1.msra.mxu0 %v4234
      %4252 = vmatprep.subr.mxu0 0.0
      %4253 = vmatpush1.msra.mxu0 %v4235
      %4254 = vmatprep.subr.mxu0 0.0
      %4255 = vmatpush1.msra.mxu0 0.0
      %4256 = vmatprep.subr.mxu0 0.0
      %4257 = vmatpush1.msra.mxu0 0.0
      %4258 = vmatprep.subr.mxu0 0.0
      %4259 = vmatpush1.msra.mxu0 0.0
      %4260 = vmatprep.subr.mxu0 0.0
      %4261 = vmatpush1.msra.mxu0 0.0
      %4262 = vmatprep.subr.mxu0 0.0
      %4263 = vmatpush1.msra.mxu0 0.0
      %4264 = vmatprep.subr.mxu0 0.0
      %4265 = vmatpush1.msra.mxu0 0.0
      %4266 = vmatprep.subr.mxu0 0.0
      %4267 = vmatpush1.msra.mxu0 0.0
      %4268 = vmatprep.subr.mxu0 0.0
      %4269 = vmatpush1.msra.mxu0 0.0
      %4270 = vmatprep.subr.mxu0 0.0
      %4271 = vmatpush1.msra.mxu0 0.0
      %4272 = vmatprep.subr.mxu0 0.0
      %4273 = vmatpush1.msra.mxu0 0.0
      %4274 = vmatprep.subr.mxu0 0.0
      %4275 = vmatpush1.msra.mxu0 0.0
      %4276 = vmatprep.subr.mxu0 0.0
      %4277 = vmatpush1.msra.mxu0 0.0
      %4278 = vmatprep.subr.mxu0 0.0
      %4279 = vmatpush1.msra.mxu0 0.0
      %4280 = vmatprep.subr.mxu0 0.0
      %4281 = vmatpush1.msra.mxu0 0.0
      %4282 = vmatprep.subr.mxu0 0.0
      %4283 = vmatpush1.msra.mxu0 0.0
      %4284 = vmatprep.subr.mxu0 0.0
      %4285 = vmatpush1.msra.mxu0 0.0
      %4286 = vmatprep.subr.mxu0 0.0
      %4287 = vmatpush1.msra.mxu0 0.0
      %4288 = vmatprep.subr.mxu0 0.0
      %4289 = vmatpush1.msra.mxu0 0.0
      %4290 = vmatprep.subr.mxu0 0.0
      %4291 = vmatpush1.msra.mxu0 0.0
      %4292 = vmatprep.subr.mxu0 0.0
      %4293 = vmatpush1.msra.mxu0 0.0
      %4294 = vmatprep.subr.mxu0 0.0
      %4295 = vmatpush1.msra.mxu0 0.0
      %4296 = vmatprep.subr.mxu0 0.0
      %4297 = vmatpush1.msra.mxu0 0.0
      %4298 = vmatprep.subr.mxu0 0.0
      %4299 = vmatpush1.msra.mxu0 0.0
      %4300 = vmatprep.subr.mxu0 0.0
      %4301 = vmatpush1.msra.mxu0 0.0
      %4302 = vmatprep.subr.mxu0 0.0
      %4303 = vmatpush1.msra.mxu0 0.0
      %4304 = vmatprep.subr.mxu0 0.0
      %4305 = vmatpush1.msra.mxu0 0.0
      %4306 = vmatprep.subr.mxu0 0.0
      %4307 = vmatpush1.msra.mxu0 0.0
      %4308 = vmatprep.subr.mxu0 0.0
      %4309 = vmatpush1.msra.mxu0 0.0
      %4310 = vmatprep.mubr.f32.mxu0 0.0
      %4311 = vmatmul.mubr.f32.gmra.mrb[0].mxu0 %v4244
      %v4312 = vpop.f32.mrb[0].mxu0
      %v4313 = vadd.f32 %v4241, %v4312
      %v4314 = vpop.f32.mrb[0].mxu0
      %4315 = vdwg.mxu0
      %v4316 = vmax.f32 %v4313, 0.0
      %v4317 = vld [vmem:[%s23] sm:$0xff]
      %v4318 = vld [vmem:[%s23 + $0x8] sm:$0xff]
      %v4319 = vld [vmem:[%s23 + $0x10] sm:$0xff]
      %v4320 = vld [vmem:[%s23 + $0x18] sm:$0xff]
      %v4321 = vld [vmem:[%s24] sm:$0x1]
      %v4323 = vlaneseq
      %v4324 = vshrl.u32 %v4323, 7
      %v4325 = vsub.s32 0, %v4324
      %v4326 = vrot.slane %v4321, %v4325
      %v4329 = vsel %vm3219, %v4316, 0
      %4331 = vmatprep.subr.mxu0 0.0
      %4332 = vmatpush1.msra.mxu0 %v4317
      %4333 = vmatprep.subr.mxu0 0.0
      %4334 = vmatpush1.msra.mxu0 %v4318
      %4335 = vmatprep.subr.mxu0 0.0
      %4336 = vmatpush1.msra.mxu0 %v4319
      %4337 = vmatprep.subr.mxu0 0.0
      %4338 = vmatpush1.msra.mxu0 %v4320
      %4339 = vmatprep.subr.mxu0 0.0
      %4340 = vmatpush1.msra.mxu0 0.0
      %4341 = vmatprep.subr.mxu0 0.0
      %4342 = vmatpush1.msra.mxu0 0.0
      %4343 = vmatprep.subr.mxu0 0.0
      %4344 = vmatpush1.msra.mxu0 0.0
      %4345 = vmatprep.subr.mxu0 0.0
      %4346 = vmatpush1.msra.mxu0 0.0
      %4347 = vmatprep.subr.mxu0 0.0
      %4348 = vmatpush1.msra.mxu0 0.0
      %4349 = vmatprep.subr.mxu0 0.0
      %4350 = vmatpush1.msra.mxu0 0.0
      %4351 = vmatprep.subr.mxu0 0.0
      %4352 = vmatpush1.msra.mxu0 0.0
      %4353 = vmatprep.subr.mxu0 0.0
      %4354 = vmatpush1.msra.mxu0 0.0
      %4355 = vmatprep.subr.mxu0 0.0
      %4356 = vmatpush1.msra.mxu0 0.0
      %4357 = vmatprep.subr.mxu0 0.0
      %4358 = vmatpush1.msra.mxu0 0.0
      %4359 = vmatprep.subr.mxu0 0.0
      %4360 = vmatpush1.msra.mxu0 0.0
      %4361 = vmatprep.subr.mxu0 0.0
      %4362 = vmatpush1.msra.mxu0 0.0
      %4363 = vmatprep.subr.mxu0 0.0
      %4364 = vmatpush1.msra.mxu0 0.0
      %4365 = vmatprep.subr.mxu0 0.0
      %4366 = vmatpush1.msra.mxu0 0.0
      %4367 = vmatprep.subr.mxu0 0.0
      %4368 = vmatpush1.msra.mxu0 0.0
      %4369 = vmatprep.subr.mxu0 0.0
      %4370 = vmatpush1.msra.mxu0 0.0
      %4371 = vmatprep.subr.mxu0 0.0
      %4372 = vmatpush1.msra.mxu0 0.0
      %4373 = vmatprep.subr.mxu0 0.0
      %4374 = vmatpush1.msra.mxu0 0.0
      %4375 = vmatprep.subr.mxu0 0.0
      %4376 = vmatpush1.msra.mxu0 0.0
      %4377 = vmatprep.subr.mxu0 0.0
      %4378 = vmatpush1.msra.mxu0 0.0
      %4379 = vmatprep.subr.mxu0 0.0
      %4380 = vmatpush1.msra.mxu0 0.0
      %4381 = vmatprep.subr.mxu0 0.0
      %4382 = vmatpush1.msra.mxu0 0.0
      %4383 = vmatprep.subr.mxu0 0.0
      %4384 = vmatpush1.msra.mxu0 0.0
      %4385 = vmatprep.subr.mxu0 0.0
      %4386 = vmatpush1.msra.mxu0 0.0
      %4387 = vmatprep.subr.mxu0 0.0
      %4388 = vmatpush1.msra.mxu0 0.0
      %4389 = vmatprep.subr.mxu0 0.0
      %4390 = vmatpush1.msra.mxu0 0.0
      %4391 = vmatprep.subr.mxu0 0.0
      %4392 = vmatpush1.msra.mxu0 0.0
      %4393 = vmatprep.subr.mxu0 0.0
      %4394 = vmatpush1.msra.mxu0 0.0
      %4395 = vmatprep.mubr.f32.mxu0 0.0
      %4396 = vmatmul.mubr.f32.gmra.mrb[0].mxu0 %v4329
      %v4397 = vpop.f32.mrb[0].mxu0
      %v4398 = vadd.f32 %v4326, %v4397
      %v4399 = vpop.f32.mrb[0].mxu0
      %4400 = vdwg.mxu0
      %v4401 = vmax.f32 %v4398, 0.0
      %v4402 = vld [vmem:[%s25] sm:$0xff]
      %v4403 = vld [vmem:[%s25 + $0x8] sm:$0xff]
      %v4404 = vld [vmem:[%s26] sm:$0x1]
      %v4406 = vlaneseq
      %v4407 = vshrl.u32 %v4406, 7
      %v4408 = vsub.s32 0, %v4407
      %v4409 = vrot.slane %v4404, %v4408
      %v4412 = vsel %vm1101, %v4401, 0
      %4414 = vmatprep.subr.mxu0 0.0
      %4415 = vmatpush1.msra.mxu0 %v4402
      %4416 = vmatprep.subr.mxu0 0.0
      %4417 = vmatpush1.msra.mxu0 %v4403
      %4418 = vmatprep.subr.mxu0 0.0
      %4419 = vmatpush1.msra.mxu0 0.0
      %4420 = vmatprep.subr.mxu0 0.0
      %4421 = vmatpush1.msra.mxu0 0.0
      %4422 = vmatprep.subr.mxu0 0.0
      %4423 = vmatpush1.msra.mxu0 0.0
      %4424 = vmatprep.subr.mxu0 0.0
      %4425 = vmatpush1.msra.mxu0 0.0
      %4426 = vmatprep.subr.mxu0 0.0
      %4427 = vmatpush1.msra.mxu0 0.0
      %4428 = vmatprep.subr.mxu0 0.0
      %4429 = vmatpush1.msra.mxu0 0.0
      %4430 = vmatprep.subr.mxu0 0.0
      %4431 = vmatpush1.msra.mxu0 0.0
      %4432 = vmatprep.subr.mxu0 0.0
      %4433 = vmatpush1.msra.mxu0 0.0
      %4434 = vmatprep.subr.mxu0 0.0
      %4435 = vmatpush1.msra.mxu0 0.0
      %4436 = vmatprep.subr.mxu0 0.0
      %4437 = vmatpush1.msra.mxu0 0.0
      %4438 = vmatprep.subr.mxu0 0.0
      %4439 = vmatpush1.msra.mxu0 0.0
      %4440 = vmatprep.subr.mxu0 0.0
      %4441 = vmatpush1.msra.mxu0 0.0
      %4442 = vmatprep.subr.mxu0 0.0
      %4443 = vmatpush1.msra.mxu0 0.0
      %4444 = vmatprep.subr.mxu0 0.0
      %4445 = vmatpush1.msra.mxu0 0.0
      %4446 = vmatprep.subr.mxu0 0.0
      %4447 = vmatpush1.msra.mxu0 0.0
      %4448 = vmatprep.subr.mxu0 0.0
      %4449 = vmatpush1.msra.mxu0 0.0
      %4450 = vmatprep.subr.mxu0 0.0
      %4451 = vmatpush1.msra.mxu0 0.0
      %4452 = vmatprep.subr.mxu0 0.0
      %4453 = vmatpush1.msra.mxu0 0.0
      %4454 = vmatprep.subr.mxu0 0.0
      %4455 = vmatpush1.msra.mxu0 0.0
      %4456 = vmatprep.subr.mxu0 0.0
      %4457 = vmatpush1.msra.mxu0 0.0
      %4458 = vmatprep.subr.mxu0 0.0
      %4459 = vmatpush1.msra.mxu0 0.0
      %4460 = vmatprep.subr.mxu0 0.0
      %4461 = vmatpush1.msra.mxu0 0.0
      %4462 = vmatprep.subr.mxu0 0.0
      %4463 = vmatpush1.msra.mxu0 0.0
      %4464 = vmatprep.subr.mxu0 0.0
      %4465 = vmatpush1.msra.mxu0 0.0
      %4466 = vmatprep.subr.mxu0 0.0
      %4467 = vmatpush1.msra.mxu0 0.0
      %4468 = vmatprep.subr.mxu0 0.0
      %4469 = vmatpush1.msra.mxu0 0.0
      %4470 = vmatprep.subr.mxu0 0.0
      %4471 = vmatpush1.msra.mxu0 0.0
      %4472 = vmatprep.subr.mxu0 0.0
      %4473 = vmatpush1.msra.mxu0 0.0
      %4474 = vmatprep.subr.mxu0 0.0
      %4475 = vmatpush1.msra.mxu0 0.0
      %4476 = vmatprep.subr.mxu0 0.0
      %4477 = vmatpush1.msra.mxu0 0.0
      %4478 = vmatprep.mubr.f32.mxu0 0.0
      %4479 = vmatmul.mubr.f32.gmra.mrb[0].mxu0 %v4412
      %v4480 = vpop.f32.mrb[0].mxu0
      %v4481 = vadd.f32 %v4409, %v4480
      %v4482 = vpop.f32.mrb[0].mxu0
      %4483 = vdwg.mxu0
      %vm4484 = vcmask 31744
      %v4485 = vsel %vm4484, %v4481, -inf
      %4486 = vmax.xlane.f32.xlu0 %v4485
      %v4487 = vpop.xlane.xlu0 %4486
      %v4488 = vsub.f32 %v4481, %v4487
      %v4489 = vmul.f32 %v4488, 1.442695
      %v4490 = vpow.pop %v4489
      %v4491 = vsel %vm4484, %v4490, 0.0
      %4492 = vadd.xlane.f32.xlu0 %v4491
      %v4493 = vpop.xlane.xlu0 %4492
      %v4494 = vlog2.pop %v4493
      %v4495 = vmul.f32 %v4494, 0.6931472
      %v4496 = vadd.f32 %v4495, %v4487
      %v4497 = vsub.f32 %v4481, %v4496
      %4498 = vst.msk [vmem:[%s827] sm:$0xff] %vm4484, %v4497
      %p4499 = scmp.lt.s32.totalorder %s38, 1
      %s4500 = scalar_select %p4499, %s38, 1
      %s4501 = smul.addr %s4500, 8
      %s4502 = scalar_lea.vmem %s27, %s4501
      // Predicated region
      $region129: #{dgcnn_forward.1} parent=127 // pred_check
        %p4503 = pneg %p633
      $region130: #{dgcnn_forward.1} parent=127 // pred_check_branch
        %4505 = sbr.rel (%p4503) target = $region132
      $region131: #{dgcnn_forward.1} parent=127 // pred_region
        _
      $region132: #{dgcnn_forward.1} parent=127 // pred_fallthru
        _
    $region128: #{dgcnn_forward.1} parent=5 // pred_fallthru
      _
    %p4506 = scmp.le.s32.totalorder 2, %s33
    // Predicated region
    $region133: #{dgcnn_forward.1} parent=5 // pred_check
      %p4507 = pneg %p4506
    $region134: #{dgcnn_forward.1} parent=5 // pred_check_branch
      %4509 = sbr.rel (%p4507) target = $region136
    $region135: #{dgcnn_forward.1} parent=5 // pred_region
      %s4510 = ssub.s32 %s33, 2
      // Predicated region
      $region137: #{dgcnn_forward.1} parent=135 // pred_check
        %p4511 = pneg %p639
      $region138: #{dgcnn_forward.1} parent=135 // pred_check_branch
        %4513 = sbr.rel (%p4511) target = $region140
      $region139: #{dgcnn_forward.1} parent=135 // pred_region
        %p4514 = scmp.lt.s32.totalorder %s39, 1
        %s4515 = scalar_select %p4514, %s39, 1
        %s4516 = smul.addr %s4515, 8
        %s4517 = scalar_lea.vmem %s27, %s4516
      $region140: #{dgcnn_forward.1} parent=135 // pred_fallthru
        _
    $region136: #{dgcnn_forward.1} parent=5 // pred_fallthru
      _
  $region6: #{dgcnn_forward.1} parent=0 // loop_footer
    %s37 = sadd.s32 1, %s33
  $region7: #{dgcnn_forward.1} parent=0 // loop_footer_branch
    %32 = sbr.rel target = $region3
  $region8: #{dgcnn_forward.1} parent=0 // loop_exit
    _

</llo_original>
